<compile_context>
chip_gen: v7x
topology: tpu7x:2x2x1
jax: 0.10.0
libtpu: 0.0.40
codegen_flags: <defaults>
</compile_context>

<pallas_src>
import numpy as np

import jax
import jax.numpy as jnp
from jax.experimental import pallas as pl
from jax.experimental.pallas import tpu as pltpu


_LANES = 128
_MAX_ROW_TILE = 512     # large row tiles amortize the ~0.35us per-grid-step cost


def _round_up(v, m):
    return (v + m - 1) // m * m


def _cdiv(a, b):
    return -(-a // b)


def _choose_row_tiling(n_rows, max_tile=_MAX_ROW_TILE):
    """Pick (row_tile, padded_rows).

    Rows pad to a multiple of 8 (sublanes).  No artificial 2-way tile split:
    on single-TensorCore chips (v5e/v6e) a split only adds grid-step overhead,
    and on v7x the "parallel" grid axis shards across the two TCs naturally
    once M exceeds the tile cap (each shard then has >= max_tile rows).
    """
    rows8 = _round_up(max(int(n_rows), 1), 8)
    num_tiles = _cdiv(rows8, max_tile)
    tile = _round_up(_cdiv(rows8, num_tiles), 8)
    return tile, tile * num_tiles


# ----------------------------------------------------------------------------
# Optional single-buffering of resident (never-refetched) weight blocks.
# ----------------------------------------------------------------------------
_RESIDENT_PIPELINE_MODE = None
_RESIDENT_PROBED = False


def _probe_resident_pipeline_mode():
    """Probe (eagerly, OUTSIDE jit) whether this JAX/Mosaic accepts
    pipeline_mode=pl.Buffered(1) on pallas_call BlockSpecs.  Resident weights
    use a constant index map and are never refetched, so single-buffering them
    halves their VMEM footprint (matters most on v7x's 64 MiB VMEM) at zero
    perf cost.  Falls back to default double buffering when unsupported."""
    global _RESIDENT_PIPELINE_MODE, _RESIDENT_PROBED
    if _RESIDENT_PROBED:
        return _RESIDENT_PIPELINE_MODE
    _RESIDENT_PROBED = True
    try:
        def _probe(x_ref, o_ref):
            o_ref[...] = x_ref[...] + 1.0

        res = pl.pallas_call(
            _probe,
            out_shape=jax.ShapeDtypeStruct((8, _LANES), jnp.float32),
            grid=(2,),
            in_specs=[pl.BlockSpec((8, _LANES), lambda i: (0, 0),
                                   pipeline_mode=pl.Buffered(1))],
            out_specs=pl.BlockSpec((8, _LANES), lambda i: (0, 0)),
        )(jnp.zeros((8, _LANES), jnp.float32))
        jax.block_until_ready(res)
        _RESIDENT_PIPELINE_MODE = pl.Buffered(1)
    except Exception:  # unsupported on this JAX version -> keep double buffering
        _RESIDENT_PIPELINE_MODE = None
    return _RESIDENT_PIPELINE_MODE


# ----------------------------------------------------------------------------
# Fused kernel
# ----------------------------------------------------------------------------
def _make_fused_kernel(num_blocks, d_hidden, compute_dtype):
    """Fused forward kernel for one row tile.

    Ref order: x,
               ctx_proj[0..num_blocks-1]  (context @ Wr + bias per block, f32),
               ctx_proj_final             (context @ fWr + fb, f32, lane-padded),
               [Wl, A] * num_blocks       (bf16),
               T, G                       (one-hot, bf16 -- exact for 0/1),
               Ggate                      (one-hot, f32  -- exact gather),
               final_Wl                   (bf16, lane-padded),
               out.
    """

    def kernel(*refs):
        x_ref = refs[0]
        ctxp_refs = refs[1:1 + num_blocks]
        ctxf_ref = refs[1 + num_blocks]
        p = 2 + num_blocks
        block_refs = [refs[p + 2 * b: p + 2 * b + 2] for b in range(num_blocks)]
        p += 2 * num_blocks
        t_ref, g_ref, gg_ref, fwl_ref = refs[p:p + 4]
        o_ref = refs[p + 4]

        tile_mat = t_ref[...]          # (n, n*n)  one-hot, bf16, resident
        sum_mat = g_ref[...]           # (n*n, n)  one-hot, bf16, resident
        gate_mat = gg_ref[...]         # (n, d_h)  one-hot, f32, resident

        h = x_ref[...].astype(compute_dtype)                 # (tm, d_in)
        for (wl_ref, a_ref), ctxp_ref in zip(block_refs, ctxp_refs):
            # SeparatedEquivLinear: left matmul + precomputed (context@Wr + bias).
            lin = (jnp.dot(h, wl_ref[...], preferred_element_type=jnp.float32)
                   + ctxp_ref[...])                           # (tm, n) f32
            lin_c = lin.astype(compute_dtype)

            # EquivBiLinear: Wb[s] = reshape(lin[s] @ A, (n, n));
            #   bil = 0.1 * (Wb @ lin).  Encoded as bf16 MXU matmuls with f32
            #   accumulation (T/G hold only 0/1 -> exact in bf16):
            #     wflat[s, i*n+m]     = Wb[s, i, m]
            #     lin_tiled[s, i*n+m] = lin[s, m]
            #     bil[s, i]           = 0.1 * sum_m wflat*lin_tiled
            # TODO(synk): an outer-product (lin x lin) @ A_perm restructure would
            # drop 2 of these 3 n^2-sized matmuls, but needs a lane-unaligned
            # (n=40) relayout whose Mosaic cost must be bundle-validated first.
            wflat = jnp.dot(lin_c, a_ref[...],
                            preferred_element_type=jnp.float32)       # (tm, n*n)
            lin_tiled = jnp.dot(lin_c, tile_mat,
                                preferred_element_type=jnp.float32)   # (tm, n*n)
            prod = (wflat * lin_tiled).astype(compute_dtype)
            bil = 0.1 * jnp.dot(prod, sum_mat,
                                preferred_element_type=jnp.float32)   # (tm, n)
            preact = bil + lin

            # GatedNonlinearity: exact one-hot gather of gate scalars, then gate.
            gate_scalars = jnp.dot(preact, gate_mat,
                                   preferred_element_type=jnp.float32)  # (tm, d_h)
            h = (jax.nn.sigmoid(gate_scalars)
                 * preact[:, :d_hidden]).astype(compute_dtype)

        # Final SeparatedEquivLinear; output columns are zero-padded to a
        # 128-lane multiple so this store is lane-dense (unmasked).
        out = (jnp.dot(h, fwl_ref[...], preferred_element_type=jnp.float32)
               + ctxf_ref[...])
        o_ref[...] = out.astype(o_ref.dtype)

    return kernel


# ----------------------------------------------------------------------------
# One-time weight packing (kept OUT of the per-call path)
# ----------------------------------------------------------------------------
def pack_params(blocks, final, T, G, Ggate, *, compute_dtype=jnp.bfloat16):
    """Pre-cast / pre-pad all weights once so a training/serving loop does not
    re-emit casts / pads on every forward call."""
    f_wl, f_wr, f_b = final
    d_out = f_wl.shape[1]
    d_out_pad = _round_up(d_out, _LANES)
    pad_c = d_out_pad - d_out
    packed = {
        "blocks": [dict(wl=jnp.asarray(wl, compute_dtype),
                        A=jnp.asarray(A, compute_dtype),
                        wr=jnp.asarray(wr, jnp.float32),       # used wrapper-side
                        b=jnp.asarray(b, jnp.float32))
                   for (wl, wr, b, A) in blocks],
        # Exact one-hot constants; 0/1 is exact in bf16 -> halves resident VMEM
        # + DMA bytes and keeps every n^2-sized matmul in bf16 on the MXU.
        "T": jnp.asarray(T, compute_dtype),
        "G": jnp.asarray(G, compute_dtype),
        "Ggate": jnp.asarray(Ggate, jnp.float32),
        "f_wl": jnp.pad(jnp.asarray(f_wl, compute_dtype), ((0, 0), (0, pad_c))),
        "f_wr_pad": jnp.pad(jnp.asarray(f_wr, jnp.float32), ((0, 0), (0, pad_c))),
        "f_b_pad": jnp.pad(jnp.asarray(f_b, jnp.float32), ((0, 0), (0, pad_c))),
        "d_out": d_out,
        "d_out_pad": d_out_pad,
        "compute_dtype": compute_dtype,
    }
    _probe_resident_pipeline_mode()    # eager probe, outside any jit trace
    return packed


# ----------------------------------------------------------------------------
# Wrapper (one pallas_call for the whole network)
# ----------------------------------------------------------------------------
def full_separated_emlp(x, context, params, *, d_hidden):
    """Fused forward over all layers.  x: [B, S, d_in], context: [B, d_ctx]."""
    compute_dtype = params["compute_dtype"]
    B, S, d_in = x.shape
    blocks = params["blocks"]
    num_blocks = len(blocks)
    n = blocks[0]["wl"].shape[1]
    d_out, d_out_pad = params["d_out"], params["d_out_pad"]

    M = B * S
    tile_m, Mp = _choose_row_tiling(M)
    grid = (Mp // tile_m,)

    # Per-batch right-hand (context) projections + bias, computed ONCE per batch
    # here (B x d_ctx x n MACs total) instead of per row / per tile inside the
    # kernel: removes 4 tiny K=d_ctx matmuls per grid step that underfill the MXU.
    ctxps = [jnp.dot(context, blk["wr"]) + blk["b"] for blk in blocks]
    ctxf = jnp.dot(context, params["f_wr_pad"]) + params["f_b_pad"]

    def to_rows(a):
        a = jnp.repeat(a, S, axis=0)          # (B, c) -> (B*S, c), (b, s)-major
        return jnp.pad(a, ((0, Mp - M), (0, 0))) if Mp != M else a

    x_rows = x.reshape(M, d_in)
    if Mp != M:
        x_rows = jnp.pad(x_rows, ((0, Mp - M), (0, 0)))
    ctxp_rows = [to_rows(c) for c in ctxps]
    ctxf_rows = to_rows(ctxf)

    operands = [x_rows] + ctxp_rows + [ctxf_rows]
    in_specs = ([pl.BlockSpec((tile_m, d_in), lambda i: (i, 0))]
                + [pl.BlockSpec((tile_m, n), lambda i: (i, 0))
                   for _ in range(num_blocks)]
                + [pl.BlockSpec((tile_m, d_out_pad), lambda i: (i, 0))])

    resident_kw = ({} if _RESIDENT_PIPELINE_MODE is None
                   else {"pipeline_mode": _RESIDENT_PIPELINE_MODE})

    def add_resident(arr):
        # Full-array block, constant index map: DMA'd once, resident in VMEM for
        # all row tiles (single-buffered when the Buffered(1) probe succeeded).
        assert arr.ndim == 2, "resident operands must be 2-D"
        operands.append(arr)
        in_specs.append(pl.BlockSpec(arr.shape, lambda i: (0, 0), **resident_kw))

    for blk in blocks:
        add_resident(blk["wl"])
        add_resident(blk["A"])
    add_resident(params["T"])
    add_resident(params["G"])
    add_resident(params["Ggate"])
    add_resident(params["f_wl"])

    # VMEM budget: the bilinear's f32 temporaries dominate.  Raise the scoped
    # limit above the 32 MiB default only when a larger tile / n needs it
    # (stays within v7x's 64 MiB physical VMEM).
    est_bytes = (4 * tile_m * n * n * 4
                 + 2 * 4 * tile_m * (d_in + num_blocks * n + 2 * d_out_pad)
                 + 2 * sum(int(np.prod(o.shape)) * o.dtype.itemsize
                           for o in operands[2 + num_blocks:]))
    cp_kwargs = dict(dimension_semantics=("parallel",))
    if est_bytes > 24 * 1024 * 1024:
        cp_kwargs["vmem_limit_bytes"] = min(est_bytes + 16 * 1024 * 1024,
                                            64 * 1024 * 1024)

    kernel = _make_fused_kernel(num_blocks, d_hidden, compute_dtype)
    out = pl.pallas_call(
        kernel,
        out_shape=jax.ShapeDtypeStruct((Mp, d_out_pad), jnp.float32),
        grid=grid,
        in_specs=in_specs,
        out_specs=pl.BlockSpec((tile_m, d_out_pad), lambda i: (i, 0)),
        compiler_params=pltpu.CompilerParams(**cp_kwargs),
    )(*operands)

    return out[:M, :d_out].reshape(B, S, d_out)


# ----------------------------------------------------------------------------
# Pure-JAX reference (same math / precision path, natural tile / sum / gather)
# ----------------------------------------------------------------------------
def full_separated_emlp_reference(x, context, blocks, final, gate_idx, *,
                                  d_hidden, compute_dtype=jnp.bfloat16):
    B, S, d_in = x.shape
    n = blocks[0][0].shape[1]
    h = x.reshape(B * S, d_in)
    for wl, wr, b, A in blocks:
        ctxp = jnp.repeat(jnp.dot(context, wr) + b, S, axis=0)
        lin = jnp.dot(h.astype(compute_dtype), wl.astype(compute_dtype),
                      preferred_element_type=jnp.float32) + ctxp
        lin_c = lin.astype(compute_dtype)
        wflat = jnp.dot(lin_c, A.astype(compute_dtype),
                        preferred_element_type=jnp.float32)
        lin_tiled = jnp.tile(lin_c.astype(jnp.float32), (1, n))
        prod = (wflat * lin_tiled).astype(compute_dtype).astype(jnp.float32)
        bil = 0.1 * jnp.sum(prod.reshape(-1, n, n), axis=-1)
        preact = bil + lin
        gate = jax.nn.sigmoid(preact[:, gate_idx])
        h = gate * preact[:, :d_hidden]
    f_wl, f_wr, f_b = final
    ctxf = jnp.repeat(jnp.dot(context, f_wr) + f_b, S, axis=0)
    out = jnp.dot(h.astype(compute_dtype), f_wl.astype(compute_dtype),
                  preferred_element_type=jnp.float32) + ctxf
    return out.reshape(B, S, -1)


# ----------------------------------------------------------------------------
# Deterministic parameter construction (synthetic, mirrors __init__ shapes)
# ----------------------------------------------------------------------------
def make_linear_params(key, d_x, d_ctx, d_out):
    """SeparatedEquivLinear: raw (weight, bias) + projectors Pw, Pb.
    Returns pre-projected, pre-transposed (left_w^T, right_w^T, bias)."""
    nin = d_x + d_ctx
    k1, k2, k3, k4 = jax.random.split(key, 4)
    w = jax.random.normal(k1, (d_out, nin), jnp.float32) / np.sqrt(nin)
    b = jax.random.normal(k2, (d_out,), jnp.float32) / np.sqrt(nin)
    Pw = jax.random.normal(k3, (d_out * nin, d_out * nin), jnp.float32) / np.sqrt(d_out * nin)
    Pb = jax.random.normal(k4, (d_out, d_out), jnp.float32) / np.sqrt(d_out)
    w_proj = (Pw @ w.reshape(-1)).reshape(d_out, nin)   # proj_w(self.weight)
    b_proj = Pb @ b                                     # proj_b(self.bias)
    wl_T = jnp.transpose(w_proj[:, :d_x])               # (d_x, d_out)
    wr_T = jnp.transpose(w_proj[:, d_x:])               # (d_ctx, d_out)
    return wl_T, wr_T, b_proj.reshape(1, d_out)


def make_constants(n, d_out, n_gates):
    """Exact one-hot constants: tiling T, block-sum G, gate-gather Ggate."""
    T = np.zeros((n, n * n), np.float32)
    for m in range(n):
        T[m, np.arange(n) * n + m] = 1.0
    G = np.zeros((n * n, n), np.float32)
    for i in range(n):
        G[i * n:(i + 1) * n, i] = 1.0
    # synthetic deterministic gate_indices: first half gate themselves,
    # second half use appended gate scalars.
    idx = np.where(np.arange(d_out) < d_out // 2,
                   np.arange(d_out),
                   d_out + np.arange(d_out) % n_gates).astype(np.int32)
    Ggate = np.zeros((n, d_out), np.float32)
    Ggate[idx, np.arange(d_out)] = 1.0
    return jnp.asarray(T), jnp.asarray(G), jnp.asarray(Ggate), idx


# ----------------------------------------------------------------------------
if __name__ == "__main__":
    B, S = 2, 8
    d_in, d_ctx, d_hidden, n_gates, d_out = 16, 8, 32, 8, 8
    n_gated = d_hidden + n_gates        # gated(rep_out).size()
    num_layers = 3

    key = jax.random.PRNGKey(0)
    keys = jax.random.split(key, num_layers + 3)
    x = jax.random.normal(keys[0], (B, S, d_in), jnp.float32)
    context = jax.random.normal(keys[1], (B, d_ctx), jnp.float32)

    T, G, Ggate, gate_idx = make_constants(n_gated, d_hidden, n_gates)

    blocks = []
    d_cur = d_in
    for li in range(num_layers):
        k_lin, k_bi = jax.random.split(keys[2 + li], 2)
        wl, wr, bias = make_linear_params(k_lin, d_cur, d_ctx, n_gated)
        # EquivBiLinear bi_params arranged as the linear map A: lin -> flat W.
        A = jax.random.normal(k_bi, (n_gated, n_gated * n_gated),
                              jnp.float32) / n_gated
        blocks.append((wl, wr, bias, A))
        d_cur = d_hidden
    final = make_linear_params(keys[-1], d_cur, d_ctx, d_out)

    packed = pack_params(blocks, final, T, G, Ggate)   # one-time pack (+ probe)

    fwd = jax.jit(lambda xx, cc: full_separated_emlp(xx, cc, packed,
                                                     d_hidden=d_hidden))
    out = fwd(x, context)
    jax.block_until_ready(out)

    assert out.shape == (B, S, d_out) and out.dtype == jnp.float32
    assert bool(jnp.all(jnp.isfinite(out)))

    ref = full_separated_emlp_reference(x, context, blocks, final, gate_idx,
                                        d_hidden=d_hidden)
    max_err = float(jnp.max(jnp.abs(out - ref)))
    assert bool(jnp.allclose(out, ref, rtol=1e-2, atol=1e-2)), max_err

    print("KERNEL_OK")
</pallas_src>

<mosaic_0001>
module attributes {stable_mosaic.version = 11 : i64} {
  func.func @_probe(%arg0: i32, %arg1: memref<8x128xf32, #tpu.memory_space<vmem>>, %arg2: memref<8x128xf32, #tpu.memory_space<vmem>>) attributes {dimension_semantics = [#tpu.dimension_semantics<arbitrary>], iteration_bounds = array<i64: 2>, scalar_prefetch = 0 : i64, scratch_operands = 0 : i64, tpu.core_type = #tpu.core_type<tc>, window_params = [{pipeline_mode = #tpu.pipeline_mode<synchronous>, transform_indices = @transform_0, window_bounds = array<i64: 8, 128>}, {pipeline_mode = #tpu.pipeline_mode<synchronous>, transform_indices = @transform_1, window_bounds = array<i64: 8, 128>}]} {
    %c0 = arith.constant 0 : index
    %c0_0 = arith.constant 0 : index
    %0 = vector.load %arg1[%c0, %c0_0] : memref<8x128xf32, #tpu.memory_space<vmem>>, vector<8x128xf32>
    %cst = arith.constant 1.000000e+00 : f32
    %1 = vector.broadcast %cst : f32 to vector<8x128xf32>
    %2 = arith.addf %0, %1 : vector<8x128xf32>
    %c0_1 = arith.constant 0 : index
    %c0_2 = arith.constant 0 : index
    %3 = vector.load %arg2[%c0_1, %c0_2] : memref<8x128xf32, #tpu.memory_space<vmem>>, vector<8x128xf32>
    tpu.vector_store %arg2[%c0_1, %c0_2], %2 {strides = array<i32>} : memref<8x128xf32, #tpu.memory_space<vmem>>, vector<8x128xf32>,
    return
  }
  func.func @transform_0(%arg0: i32) -> (i32, i32) {
    %c0_i32 = arith.constant 0 : i32
    %c0_i32_0 = arith.constant 0 : i32
    %c0_i32_1 = arith.constant 0 : i32
    return %c0_i32, %c0_i32_0 : i32, i32
  }
  func.func @transform_1(%arg0: i32) -> (i32, i32) {
    %c0_i32 = arith.constant 0 : i32
    %c0_i32_0 = arith.constant 0 : i32
    %c0_i32_1 = arith.constant 0 : i32
    return %c0_i32, %c0_i32_0 : i32, i32
  }
}

module attributes {stable_mosaic.version = 11 : i64} {
  func.func @kernel(%arg0: i32, %arg1: memref<16x16xf32, #tpu.memory_space<vmem>>, %arg2: memref<16x40xf32, #tpu.memory_space<vmem>>, %arg3: memref<16x40xf32, #tpu.memory_space<vmem>>, %arg4: memref<16x40xf32, #tpu.memory_space<vmem>>, %arg5: memref<16x128xf32, #tpu.memory_space<vmem>>, %arg6: memref<16x40xbf16, #tpu.memory_space<vmem>>, %arg7: memref<40x1600xbf16, #tpu.memory_space<vmem>>, %arg8: memref<32x40xbf16, #tpu.memory_space<vmem>>, %arg9: memref<40x1600xbf16, #tpu.memory_space<vmem>>, %arg10: memref<32x40xbf16, #tpu.memory_space<vmem>>, %arg11: memref<40x1600xbf16, #tpu.memory_space<vmem>>, %arg12: memref<40x1600xbf16, #tpu.memory_space<vmem>>, %arg13: memref<1600x40xbf16, #tpu.memory_space<vmem>>, %arg14: memref<40x32xf32, #tpu.memory_space<vmem>>, %arg15: memref<32x128xbf16, #tpu.memory_space<vmem>>, %arg16: memref<16x128xf32, #tpu.memory_space<vmem>>) attributes {dimension_semantics = [#tpu.dimension_semantics<parallel>], iteration_bounds = array<i64: 1>, scalar_prefetch = 0 : i64, scratch_operands = 0 : i64, tpu.core_type = #tpu.core_type<tc>, window_params = [{transform_indices = @transform_0, window_bounds = array<i64: 16, 16>}, {transform_indices = @transform_1, window_bounds = array<i64: 16, 40>}, {transform_indices = @transform_2, window_bounds = array<i64: 16, 40>}, {transform_indices = @transform_3, window_bounds = array<i64: 16, 40>}, {transform_indices = @transform_4, window_bounds = array<i64: 16, 128>}, {pipeline_mode = #tpu.pipeline_mode<synchronous>, transform_indices = @transform_5, window_bounds = array<i64: 16, 40>}, {pipeline_mode = #tpu.pipeline_mode<synchronous>, transform_indices = @transform_6, window_bounds = array<i64: 40, 1600>}, {pipeline_mode = #tpu.pipeline_mode<synchronous>, transform_indices = @transform_7, window_bounds = array<i64: 32, 40>}, {pipeline_mode = #tpu.pipeline_mode<synchronous>, transform_indices = @transform_8, window_bounds = array<i64: 40, 1600>}, {pipeline_mode = #tpu.pipeline_mode<synchronous>, transform_indices = @transform_9, window_bounds = array<i64: 32, 40>}, {pipeline_mode = #tpu.pipeline_mode<synchronous>, transform_indices = @transform_10, window_bounds = array<i64: 40, 1600>}, {pipeline_mode = #tpu.pipeline_mode<synchronous>, transform_indices = @transform_11, window_bounds = array<i64: 40, 1600>}, {pipeline_mode = #tpu.pipeline_mode<synchronous>, transform_indices = @transform_12, window_bounds = array<i64: 1600, 40>}, {pipeline_mode = #tpu.pipeline_mode<synchronous>, transform_indices = @transform_13, window_bounds = array<i64: 40, 32>}, {pipeline_mode = #tpu.pipeline_mode<synchronous>, transform_indices = @transform_14, window_bounds = array<i64: 32, 128>}, {transform_indices = @transform_15, window_bounds = array<i64: 16, 128>}]} {
    %c0 = arith.constant 0 : index
    %c0_0 = arith.constant 0 : index
    %0 = vector.load %arg12[%c0, %c0_0] : memref<40x1600xbf16, #tpu.memory_space<vmem>>, vector<40x1600xbf16>
    %c0_1 = arith.constant 0 : index
    %c0_2 = arith.constant 0 : index
    %1 = vector.load %arg13[%c0_1, %c0_2] : memref<1600x40xbf16, #tpu.memory_space<vmem>>, vector<1600x40xbf16>
    %c0_3 = arith.constant 0 : index
    %c0_4 = arith.constant 0 : index
    %2 = vector.load %arg14[%c0_3, %c0_4] : memref<40x32xf32, #tpu.memory_space<vmem>>, vector<40x32xf32>
    %c0_5 = arith.constant 0 : index
    %c0_6 = arith.constant 0 : index
    %3 = vector.load %arg1[%c0_5, %c0_6] : memref<16x16xf32, #tpu.memory_space<vmem>>, vector<16x16xf32>
    %4 = arith.truncf %3 : vector<16x16xf32> to vector<16x16xbf16>
    %c0_7 = arith.constant 0 : index
    %c0_8 = arith.constant 0 : index
    %5 = vector.load %arg6[%c0_7, %c0_8] : memref<16x40xbf16, #tpu.memory_space<vmem>>, vector<16x40xbf16>
    %cst = arith.constant dense<0.000000e+00> : vector<16x40xf32>
    %6 = tpu.matmul %4, %5, %cst {dimension_numbers = #tpu.dot_dimension_numbers<[1], [0], [0], [1], [0, 0, 1, 1], [], []>} : vector<16x16xbf16>, vector<16x40xbf16>, vector<16x40xf32> -> vector<16x40xf32>
    %c0_9 = arith.constant 0 : index
    %c0_10 = arith.constant 0 : index
    %7 = vector.load %arg2[%c0_9, %c0_10] : memref<16x40xf32, #tpu.memory_space<vmem>>, vector<16x40xf32>
    %8 = arith.addf %6, %7 : vector<16x40xf32>
    %9 = arith.truncf %8 : vector<16x40xf32> to vector<16x40xbf16>
    %c0_11 = arith.constant 0 : index
    %c0_12 = arith.constant 0 : index
    %10 = vector.load %arg7[%c0_11, %c0_12] : memref<40x1600xbf16, #tpu.memory_space<vmem>>, vector<40x1600xbf16>
    %cst_13 = arith.constant dense<0.000000e+00> : vector<16x1600xf32>
    %11 = tpu.matmul %9, %10, %cst_13 {dimension_numbers = #tpu.dot_dimension_numbers<[1], [0], [0], [1], [0, 0, 1, 1], [], []>} : vector<16x40xbf16>, vector<40x1600xbf16>, vector<16x1600xf32> -> vector<16x1600xf32>
    %cst_14 = arith.constant dense<0.000000e+00> : vector<16x1600xf32>
    %12 = tpu.matmul %9, %0, %cst_14 {dimension_numbers = #tpu.dot_dimension_numbers<[1], [0], [0], [1], [0, 0, 1, 1], [], []>} : vector<16x40xbf16>, vector<40x1600xbf16>, vector<16x1600xf32> -> vector<16x1600xf32>
    %13 = arith.mulf %11, %12 : vector<16x1600xf32>
    %14 = arith.truncf %13 : vector<16x1600xf32> to vector<16x1600xbf16>
    %cst_15 = arith.constant dense<0.000000e+00> : vector<16x40xf32>
    %15 = tpu.matmul %14, %1, %cst_15 {dimension_numbers = #tpu.dot_dimension_numbers<[1], [0], [0], [1], [0, 0, 1, 1], [], []>} : vector<16x1600xbf16>, vector<1600x40xbf16>, vector<16x40xf32> -> vector<16x40xf32>
    %cst_16 = arith.constant 1.000000e-01 : f32
    %16 = vector.broadcast %cst_16 : f32 to vector<16x40xf32>
    %17 = arith.mulf %16, %15 : vector<16x40xf32>
    %18 = arith.addf %17, %8 : vector<16x40xf32>
    %cst_17 = arith.constant dense<0.000000e+00> : vector<16x32xf32>
    %19 = tpu.matmul %18, %2, %cst_17 {dimension_numbers = #tpu.dot_dimension_numbers<[1], [0], [0], [1], [0, 0, 1, 1], [], []>} : vector<16x40xf32>, vector<40x32xf32>, vector<16x32xf32> -> vector<16x32xf32>
    %20 = arith.negf %19 : vector<16x32xf32>
    %21 = math.exp %20 : vector<16x32xf32>
    %cst_18 = arith.constant 1.000000e+00 : f32
    %22 = vector.broadcast %cst_18 : f32 to vector<16x32xf32>
    %23 = arith.addf %22, %21 : vector<16x32xf32>
    %24 = arith.divf %22, %23 : vector<16x32xf32>
    %25 = vector.extract_strided_slice %18 {offsets = [0, 0], sizes = [16, 32], strides = [1, 1]} : vector<16x40xf32> to vector<16x32xf32>
    %26 = arith.mulf %24, %25 : vector<16x32xf32>
    %27 = arith.truncf %26 : vector<16x32xf32> to vector<16x32xbf16>
    %c0_19 = arith.constant 0 : index
    %c0_20 = arith.constant 0 : index
    %28 = vector.load %arg8[%c0_19, %c0_20] : memref<32x40xbf16, #tpu.memory_space<vmem>>, vector<32x40xbf16>
    %cst_21 = arith.constant dense<0.000000e+00> : vector<16x40xf32>
    %29 = tpu.matmul %27, %28, %cst_21 {dimension_numbers = #tpu.dot_dimension_numbers<[1], [0], [0], [1], [0, 0, 1, 1], [], []>} : vector<16x32xbf16>, vector<32x40xbf16>, vector<16x40xf32> -> vector<16x40xf32>
    %c0_22 = arith.constant 0 : index
    %c0_23 = arith.constant 0 : index
    %30 = vector.load %arg3[%c0_22, %c0_23] : memref<16x40xf32, #tpu.memory_space<vmem>>, vector<16x40xf32>
    %31 = arith.addf %29, %30 : vector<16x40xf32>
    %32 = arith.truncf %31 : vector<16x40xf32> to vector<16x40xbf16>
    %c0_24 = arith.constant 0 : index
    %c0_25 = arith.constant 0 : index
    %33 = vector.load %arg9[%c0_24, %c0_25] : memref<40x1600xbf16, #tpu.memory_space<vmem>>, vector<40x1600xbf16>
    %cst_26 = arith.constant dense<0.000000e+00> : vector<16x1600xf32>
    %34 = tpu.matmul %32, %33, %cst_26 {dimension_numbers = #tpu.dot_dimension_numbers<[1], [0], [0], [1], [0, 0, 1, 1], [], []>} : vector<16x40xbf16>, vector<40x1600xbf16>, vector<16x1600xf32> -> vector<16x1600xf32>
    %cst_27 = arith.constant dense<0.000000e+00> : vector<16x1600xf32>
    %35 = tpu.matmul %32, %0, %cst_27 {dimension_numbers = #tpu.dot_dimension_numbers<[1], [0], [0], [1], [0, 0, 1, 1], [], []>} : vector<16x40xbf16>, vector<40x1600xbf16>, vector<16x1600xf32> -> vector<16x1600xf32>
    %36 = arith.mulf %34, %35 : vector<16x1600xf32>
    %37 = arith.truncf %36 : vector<16x1600xf32> to vector<16x1600xbf16>
    %cst_28 = arith.constant dense<0.000000e+00> : vector<16x40xf32>
    %38 = tpu.matmul %37, %1, %cst_28 {dimension_numbers = #tpu.dot_dimension_numbers<[1], [0], [0], [1], [0, 0, 1, 1], [], []>} : vector<16x1600xbf16>, vector<1600x40xbf16>, vector<16x40xf32> -> vector<16x40xf32>
    %cst_29 = arith.constant 1.000000e-01 : f32
    %39 = vector.broadcast %cst_29 : f32 to vector<16x40xf32>
    %40 = arith.mulf %39, %38 : vector<16x40xf32>
    %41 = arith.addf %40, %31 : vector<16x40xf32>
    %cst_30 = arith.constant dense<0.000000e+00> : vector<16x32xf32>
    %42 = tpu.matmul %41, %2, %cst_30 {dimension_numbers = #tpu.dot_dimension_numbers<[1], [0], [0], [1], [0, 0, 1, 1], [], []>} : vector<16x40xf32>, vector<40x32xf32>, vector<16x32xf32> -> vector<16x32xf32>
    %43 = arith.negf %42 : vector<16x32xf32>
    %44 = math.exp %43 : vector<16x32xf32>
    %cst_31 = arith.constant 1.000000e+00 : f32
    %45 = vector.broadcast %cst_31 : f32 to vector<16x32xf32>
    %46 = arith.addf %45, %44 : vector<16x32xf32>
    %47 = arith.divf %45, %46 : vector<16x32xf32>
    %48 = vector.extract_strided_slice %41 {offsets = [0, 0], sizes = [16, 32], strides = [1, 1]} : vector<16x40xf32> to vector<16x32xf32>
    %49 = arith.mulf %47, %48 : vector<16x32xf32>
    %50 = arith.truncf %49 : vector<16x32xf32> to vector<16x32xbf16>
    %c0_32 = arith.constant 0 : index
    %c0_33 = arith.constant 0 : index
    %51 = vector.load %arg10[%c0_32, %c0_33] : memref<32x40xbf16, #tpu.memory_space<vmem>>, vector<32x40xbf16>
    %cst_34 = arith.constant dense<0.000000e+00> : vector<16x40xf32>
    %52 = tpu.matmul %50, %51, %cst_34 {dimension_numbers = #tpu.dot_dimension_numbers<[1], [0], [0], [1], [0, 0, 1, 1], [], []>} : vector<16x32xbf16>, vector<32x40xbf16>, vector<16x40xf32> -> vector<16x40xf32>
    %c0_35 = arith.constant 0 : index
    %c0_36 = arith.constant 0 : index
    %53 = vector.load %arg4[%c0_35, %c0_36] : memref<16x40xf32, #tpu.memory_space<vmem>>, vector<16x40xf32>
    %54 = arith.addf %52, %53 : vector<16x40xf32>
    %55 = arith.truncf %54 : vector<16x40xf32> to vector<16x40xbf16>
    %c0_37 = arith.constant 0 : index
    %c0_38 = arith.constant 0 : index
    %56 = vector.load %arg11[%c0_37, %c0_38] : memref<40x1600xbf16, #tpu.memory_space<vmem>>, vector<40x1600xbf16>
    %cst_39 = arith.constant dense<0.000000e+00> : vector<16x1600xf32>
    %57 = tpu.matmul %55, %56, %cst_39 {dimension_numbers = #tpu.dot_dimension_numbers<[1], [0], [0], [1], [0, 0, 1, 1], [], []>} : vector<16x40xbf16>, vector<40x1600xbf16>, vector<16x1600xf32> -> vector<16x1600xf32>
    %cst_40 = arith.constant dense<0.000000e+00> : vector<16x1600xf32>
    %58 = tpu.matmul %55, %0, %cst_40 {dimension_numbers = #tpu.dot_dimension_numbers<[1], [0], [0], [1], [0, 0, 1, 1], [], []>} : vector<16x40xbf16>, vector<40x1600xbf16>, vector<16x1600xf32> -> vector<16x1600xf32>
    %59 = arith.mulf %57, %58 : vector<16x1600xf32>
    %60 = arith.truncf %59 : vector<16x1600xf32> to vector<16x1600xbf16>
    %cst_41 = arith.constant dense<0.000000e+00> : vector<16x40xf32>
    %61 = tpu.matmul %60, %1, %cst_41 {dimension_numbers = #tpu.dot_dimension_numbers<[1], [0], [0], [1], [0, 0, 1, 1], [], []>} : vector<16x1600xbf16>, vector<1600x40xbf16>, vector<16x40xf32> -> vector<16x40xf32>
    %cst_42 = arith.constant 1.000000e-01 : f32
    %62 = vector.broadcast %cst_42 : f32 to vector<16x40xf32>
    %63 = arith.mulf %62, %61 : vector<16x40xf32>
    %64 = arith.addf %63, %54 : vector<16x40xf32>
    %cst_43 = arith.constant dense<0.000000e+00> : vector<16x32xf32>
    %65 = tpu.matmul %64, %2, %cst_43 {dimension_numbers = #tpu.dot_dimension_numbers<[1], [0], [0], [1], [0, 0, 1, 1], [], []>} : vector<16x40xf32>, vector<40x32xf32>, vector<16x32xf32> -> vector<16x32xf32>
    %66 = arith.negf %65 : vector<16x32xf32>
    %67 = math.exp %66 : vector<16x32xf32>
    %cst_44 = arith.constant 1.000000e+00 : f32
    %68 = vector.broadcast %cst_44 : f32 to vector<16x32xf32>
    %69 = arith.addf %68, %67 : vector<16x32xf32>
    %70 = arith.divf %68, %69 : vector<16x32xf32>
    %71 = vector.extract_strided_slice %64 {offsets = [0, 0], sizes = [16, 32], strides = [1, 1]} : vector<16x40xf32> to vector<16x32xf32>
    %72 = arith.mulf %70, %71 : vector<16x32xf32>
    %73 = arith.truncf %72 : vector<16x32xf32> to vector<16x32xbf16>
    %c0_45 = arith.constant 0 : index
    %c0_46 = arith.constant 0 : index
    %74 = vector.load %arg15[%c0_45, %c0_46] : memref<32x128xbf16, #tpu.memory_space<vmem>>, vector<32x128xbf16>
    %cst_47 = arith.constant dense<0.000000e+00> : vector<16x128xf32>
    %75 = tpu.matmul %73, %74, %cst_47 {dimension_numbers = #tpu.dot_dimension_numbers<[1], [0], [0], [1], [0, 0, 1, 1], [], []>} : vector<16x32xbf16>, vector<32x128xbf16>, vector<16x128xf32> -> vector<16x128xf32>
    %c0_48 = arith.constant 0 : index
    %c0_49 = arith.constant 0 : index
    %76 = vector.load %arg5[%c0_48, %c0_49] : memref<16x128xf32, #tpu.memory_space<vmem>>, vector<16x128xf32>
    %77 = arith.addf %75, %76 : vector<16x128xf32>
    %c0_50 = arith.constant 0 : index
    %c0_51 = arith.constant 0 : index
    %78 = vector.load %arg16[%c0_50, %c0_51] : memref<16x128xf32, #tpu.memory_space<vmem>>, vector<16x128xf32>
    tpu.vector_store %arg16[%c0_50, %c0_51], %77 {strides = array<i32>} : memref<16x128xf32, #tpu.memory_space<vmem>>, vector<16x128xf32>,
    return
  }
  func.func @transform_0(%arg0: i32) -> (i32, i32) {
    %c0_i32 = arith.constant 0 : i32
    %c0_i32_0 = arith.constant 0 : i32
    return %arg0, %c0_i32 : i32, i32
  }
  func.func @transform_1(%arg0: i32) -> (i32, i32) {
    %c0_i32 = arith.constant 0 : i32
    %c0_i32_0 = arith.constant 0 : i32
    return %arg0, %c0_i32 : i32, i32
  }
  func.func @transform_2(%arg0: i32) -> (i32, i32) {
    %c0_i32 = arith.constant 0 : i32
    %c0_i32_0 = arith.constant 0 : i32
    return %arg0, %c0_i32 : i32, i32
  }
  func.func @transform_3(%arg0: i32) -> (i32, i32) {
    %c0_i32 = arith.constant 0 : i32
    %c0_i32_0 = arith.constant 0 : i32
    return %arg0, %c0_i32 : i32, i32
  }
  func.func @transform_4(%arg0: i32) -> (i32, i32) {
    %c0_i32 = arith.constant 0 : i32
    %c0_i32_0 = arith.constant 0 : i32
    return %arg0, %c0_i32 : i32, i32
  }
  func.func @transform_5(%arg0: i32) -> (i32, i32) {
    %c0_i32 = arith.constant 0 : i32
    %c0_i32_0 = arith.constant 0 : i32
    %c0_i32_1 = arith.constant 0 : i32
    return %c0_i32, %c0_i32_0 : i32, i32
  }
  func.func @transform_6(%arg0: i32) -> (i32, i32) {
    %c0_i32 = arith.constant 0 : i32
    %c0_i32_0 = arith.constant 0 : i32
    %c0_i32_1 = arith.constant 0 : i32
    return %c0_i32, %c0_i32_0 : i32, i32
  }
  func.func @transform_7(%arg0: i32) -> (i32, i32) {
    %c0_i32 = arith.constant 0 : i32
    %c0_i32_0 = arith.constant 0 : i32
    %c0_i32_1 = arith.constant 0 : i32
    return %c0_i32, %c0_i32_0 : i32, i32
  }
  func.func @transform_8(%arg0: i32) -> (i32, i32) {
    %c0_i32 = arith.constant 0 : i32
    %c0_i32_0 = arith.constant 0 : i32
    %c0_i32_1 = arith.constant 0 : i32
    return %c0_i32, %c0_i32_0 : i32, i32
  }
  func.func @transform_9(%arg0: i32) -> (i32, i32) {
    %c0_i32 = arith.constant 0 : i32
    %c0_i32_0 = arith.constant 0 : i32
    %c0_i32_1 = arith.constant 0 : i32
    return %c0_i32, %c0_i32_0 : i32, i32
  }
  func.func @transform_10(%arg0: i32) -> (i32, i32) {
    %c0_i32 = arith.constant 0 : i32
    %c0_i32_0 = arith.constant 0 : i32
    %c0_i32_1 = arith.constant 0 : i32
    return %c0_i32, %c0_i32_0 : i32, i32
  }
  func.func @transform_11(%arg0: i32) -> (i32, i32) {
    %c0_i32 = arith.constant 0 : i32
    %c0_i32_0 = arith.constant 0 : i32
    %c0_i32_1 = arith.constant 0 : i32
    return %c0_i32, %c0_i32_0 : i32, i32
  }
  func.func @transform_12(%arg0: i32) -> (i32, i32) {
    %c0_i32 = arith.constant 0 : i32
    %c0_i32_0 = arith.constant 0 : i32
    %c0_i32_1 = arith.constant 0 : i32
    return %c0_i32, %c0_i32_0 : i32, i32
  }
  func.func @transform_13(%arg0: i32) -> (i32, i32) {
    %c0_i32 = arith.constant 0 : i32
    %c0_i32_0 = arith.constant 0 : i32
    %c0_i32_1 = arith.constant 0 : i32
    return %c0_i32, %c0_i32_0 : i32, i32
  }
  func.func @transform_14(%arg0: i32) -> (i32, i32) {
    %c0_i32 = arith.constant 0 : i32
    %c0_i32_0 = arith.constant 0 : i32
    %c0_i32_1 = arith.constant 0 : i32
    return %c0_i32, %c0_i32_0 : i32, i32
  }
  func.func @transform_15(%arg0: i32) -> (i32, i32) {
    %c0_i32 = arith.constant 0 : i32
    %c0_i32_0 = arith.constant 0 : i32
    return %arg0, %c0_i32 : i32, i32
  }
}

</mosaic_0001>

<llo_original>
// kernel: tpu_custom_call.1
$region0: #{tpu_custom_call.1}
  #allocation0 [shape = 'u32[]', space=smem, size = 0x4, offset = 0x4, fixed_abs, tag = 'smem constant byte address 0x4 - core index']
  #allocation1 [shape = 'u32[144,128]{1,0:T(1,128)}', space=vmem, size = 0x12000, scoped, tag = 'internal scratch']
  %s0 = inlined_call_operand.hbm [shape: f32[8,128], index: 0, kind: input, shape index: {}]
  %s1 = inlined_call_operand.hbm [shape: f32[8,128], index: 1, kind: output, shape index: {}]
  %s2 = sld [smem:[#allocation0]]
  $region41: #{tpu_custom_call.1} parent=0
    _
  %s4 = ssub.s32 1, %s2
  %s5 = scalar_select 0, %s4, %s2
  $region1: #{tpu_custom_call.1} parent=0
    #allocation2 [shape = 'u8[4096]{0}', space=vmem, size = 0x1000, scoped, tag = 'input window, operand 0, single buffered']
    #allocation3 [shape = 's32[2]{0}', space=sflag, size = 0x8, scoped, tag = 'scoped memory for tpu_custom_call.1']
    #allocation4 [shape = 's32[2]{0}', space=sflag, size = 0x8, scoped, tag = 'scoped memory for tpu_custom_call.1']
    #allocation5 [shape = 'u8[4096]{0}', space=vmem, size = 0x1000, scoped, tag = 'output window, operand 0, single buffered']
    %6 = vsyncpa [#allocation3], 0
    %7 = vsyncpa [#allocation4], 0
    loop: start=0, step=1, limit=4
    $region2: #{tpu_custom_call.1} parent=1 // loop_pre_header
      _
    $region3: #{tpu_custom_call.1} parent=1 // loop_header
      %s9 = sphi 0, %s13
      %p10 = scmp.ge.s32.totalorder %s9, 4
      %s17 = sphi 0, %s17
      %s19 = sphi 0, %s17
      %s20 = sphi 0, %s19
      %s34 = sphi 0, %s20
      %s38 = sphi 0, %s38
      %s40 = sphi 0, %s38
      %s41 = sphi 0, %s40
      %s55 = sphi 0, %s41
    $region4: #{tpu_custom_call.1} parent=1 // loop_header_branch
      %12 = sbr.rel (%p10) target = $region8
    $region5: #{tpu_custom_call.1} parent=1 // loop_body
      %s14 = ssub.s32 %s9, 1
      %s15 = ssub.s32 %s9, 2
      %s16 = sadd.s32 %s9, 1
      %s18 = sadd.s32 %s17, 1
      %p21 = scmp.eq.s32.totalorder %s9, 1
      %p22 = scmp.ne.s32.totalorder %s17, %s19
      %p23 = scmp.eq.s32.totalorder %s9, 0
      %p24 = por %p22, %p23
      %p25 = scmp.ne.s32.totalorder %s17, %s19
      %p26 = scmp.eq.s32.totalorder %s14, 1
      %p27 = por %p25, %p26
      %p28 = scmp.ne.s32.totalorder %s19, %s20
      %p29 = scmp.eq.s32.totalorder %s14, 0
      %p30 = por %p28, %p29
      %p31 = scmp.ne.s32.totalorder %s19, %s20
      %p32 = scmp.eq.s32.totalorder %s15, 1
      %p33 = por %p31, %p32
      %p35 = scmp.ne.s32.totalorder %s20, %s34
      %p36 = scmp.eq.s32.totalorder %s15, 0
      %p37 = por %p35, %p36
      %s39 = sadd.s32 %s38, 1
      %p42 = scmp.eq.s32.totalorder %s9, 1
      %p43 = scmp.ne.s32.totalorder %s38, %s40
      %p44 = scmp.eq.s32.totalorder %s9, 0
      %p45 = por %p43, %p44
      %p46 = scmp.ne.s32.totalorder %s38, %s40
      %p47 = scmp.eq.s32.totalorder %s14, 1
      %p48 = por %p46, %p47
      %p49 = scmp.ne.s32.totalorder %s40, %s41
      %p50 = scmp.eq.s32.totalorder %s14, 0
      %p51 = por %p49, %p50
      %p52 = scmp.ne.s32.totalorder %s40, %s41
      %p53 = scmp.eq.s32.totalorder %s15, 1
      %p54 = por %p52, %p53
      %p56 = scmp.ne.s32.totalorder %s41, %s55
      %p57 = scmp.eq.s32.totalorder %s15, 0
      %p58 = por %p56, %p57
      %p59 = scmp.le.s32.totalorder 1, %s9
      %p60 = scmp.lt.s32.totalorder %s9, 3
      %p61 = pnand %p59, %p60
      %p62 = pneg %p61
      // Predicated region
      $region9: #{tpu_custom_call.1} parent=5 // pred_check
        _
      $region10: #{tpu_custom_call.1} parent=5 // pred_check_branch
        %64 = sbr.rel (%p61) target = $region12
      $region11: #{tpu_custom_call.1} parent=5 // pred_region
        %s65 = ssub.s32 %s9, 1
        // Predicated region
        $region13: #{tpu_custom_call.1} parent=11 // pred_check
          %p66 = pneg %p30
        $region14: #{tpu_custom_call.1} parent=11 // pred_check_branch
          %68 = sbr.rel (%p66) target = $region16
        $region15: #{tpu_custom_call.1} parent=11 // pred_region
          %s70 = ssub.s32 128, 128
          %71 = vsyncadd [#allocation3], %s70
          %s73 = sshll.u32 [#allocation2], 4
          %s74 = int_to_ptr.vmem [resolvable:$true] %s73
          %76 = dma.hbm_to_vmem [thread:$0]  %s0, 128, %s74, [#allocation3]
        $region16: #{tpu_custom_call.1} parent=11 // pred_fallthru
          _
      $region12: #{tpu_custom_call.1} parent=5 // pred_fallthru
        _
      %p77 = scmp.lt.s32.totalorder %s9, 2
      // Predicated region
      $region17: #{tpu_custom_call.1} parent=5 // pred_check
        %p78 = pneg %p77
      $region18: #{tpu_custom_call.1} parent=5 // pred_check_branch
        %80 = sbr.rel (%p78) target = $region20
      $region19: #{tpu_custom_call.1} parent=5 // pred_region
        _
      $region20: #{tpu_custom_call.1} parent=5 // pred_fallthru
        _
      %p81 = scmp.le.s32.totalorder 1, %s9
      %p82 = scmp.lt.s32.totalorder %s9, 3
      %p83 = pnand %p81, %p82
      %p84 = pneg %p83
      // Predicated region
      $region21: #{tpu_custom_call.1} parent=5 // pred_check
        _
      $region22: #{tpu_custom_call.1} parent=5 // pred_check_branch
        %86 = sbr.rel (%p83) target = $region24
      $region23: #{tpu_custom_call.1} parent=5 // pred_region
        %s87 = ssub.s32 %s9, 1
        // Predicated region
        $region25: #{tpu_custom_call.1} parent=23 // pred_check
          %p88 = pneg %p30
        $region26: #{tpu_custom_call.1} parent=23 // pred_check_branch
          %90 = sbr.rel (%p88) target = $region28
        $region27: #{tpu_custom_call.1} parent=23 // pred_region
          %91 = dma.done [#allocation3], 128
        $region28: #{tpu_custom_call.1} parent=23 // pred_fallthru
          _
        %p92 = pneg %p30
        %p93 = pneg %p27
        %p94 = pneg %p51
        %p95 = pneg %p48
        %v96 = vld [vmem:[#allocation2] sm:$0xff]
        %v97 = vadd.f32 %v96, 1.0
        %98 = vst [vmem:[#allocation5] sm:$0xff] %v97
        // Predicated region
        $region29: #{tpu_custom_call.1} parent=23 // pred_check
          %p99 = pneg %p48
        $region30: #{tpu_custom_call.1} parent=23 // pred_check_branch
          %101 = sbr.rel (%p99) target = $region32
        $region31: #{tpu_custom_call.1} parent=23 // pred_region
          %s103 = ssub.s32 128, 128
          %104 = vsyncadd [#allocation4], %s103
          %s106 = sshll.u32 [#allocation5], 4
          %s107 = int_to_ptr.vmem [resolvable:$true] %s106
          %109 = dma.vmem_to_hbm [thread:$0]  %s107, 128, %s1, [#allocation4]
        $region32: #{tpu_custom_call.1} parent=23 // pred_fallthru
          _
        // Predicated region
        $region33: #{tpu_custom_call.1} parent=23 // pred_check
          %p110 = pneg %p48
        $region34: #{tpu_custom_call.1} parent=23 // pred_check_branch
          %112 = sbr.rel (%p110) target = $region36
        $region35: #{tpu_custom_call.1} parent=23 // pred_region
          %113 = dma.done [#allocation4], 128
        $region36: #{tpu_custom_call.1} parent=23 // pred_fallthru
          _
      $region24: #{tpu_custom_call.1} parent=5 // pred_fallthru
        _
      %p114 = scmp.le.s32.totalorder 2, %s9
      // Predicated region
      $region37: #{tpu_custom_call.1} parent=5 // pred_check
        %p115 = pneg %p114
      $region38: #{tpu_custom_call.1} parent=5 // pred_check_branch
        %117 = sbr.rel (%p115) target = $region40
      $region39: #{tpu_custom_call.1} parent=5 // pred_region
        %s118 = ssub.s32 %s9, 2
      $region40: #{tpu_custom_call.1} parent=5 // pred_fallthru
        _
    $region6: #{tpu_custom_call.1} parent=1 // loop_footer
      %s13 = sadd.s32 1, %s9
    $region7: #{tpu_custom_call.1} parent=1 // loop_footer_branch
      %8 = sbr.rel target = $region3
    $region8: #{tpu_custom_call.1} parent=1 // loop_exit
      _
    %119 = vsyncpa [#allocation3], 1
    %s120 = scalar_lea.sflag [#allocation3], 1
    %121 = vsyncpa %s120, 1
    %122 = vsyncpa [#allocation4], 1
    %s123 = scalar_lea.sflag [#allocation4], 1
    %124 = vsyncpa %s123, 1

// kernel: _lambda_.1
$region0: #{_lambda_.1}
  #allocation0 [shape = 'u32[]', space=smem, size = 0x4, offset = 0x4, fixed_abs, tag = 'smem constant byte address 0x4 - core index']
  #allocation1 [shape = 'u32[144,128]{1,0:T(1,128)}', space=vmem, size = 0x12000, scoped, tag = 'internal scratch']
  %s0 = inlined_call_operand.vmem [shape: f32[16,16], index: 0, kind: input, shape index: {}]
  %s1 = inlined_call_operand.vmem [shape: f32[16,40], index: 1, kind: input, shape index: {}]
  %s2 = inlined_call_operand.vmem [shape: f32[16,40], index: 2, kind: input, shape index: {}]
  %s3 = inlined_call_operand.vmem [shape: f32[16,40], index: 3, kind: input, shape index: {}]
  %s4 = inlined_call_operand.vmem [shape: f32[16,128], index: 4, kind: input, shape index: {}]
  %s5 = inlined_call_operand.vmem [shape: bf16[16,40], index: 5, kind: input, shape index: {}]
  %s6 = inlined_call_operand.hbm [shape: bf16[40,1600], index: 6, kind: input, shape index: {}]
  %s7 = inlined_call_operand.vmem [shape: bf16[32,40], index: 7, kind: input, shape index: {}]
  %s8 = inlined_call_operand.hbm [shape: bf16[40,1600], index: 8, kind: input, shape index: {}]
  %s9 = inlined_call_operand.vmem [shape: bf16[32,40], index: 9, kind: input, shape index: {}]
  %s10 = inlined_call_operand.hbm [shape: bf16[40,1600], index: 10, kind: input, shape index: {}]
  %s11 = inlined_call_operand.hbm [shape: bf16[40,1600], index: 11, kind: input, shape index: {}]
  %s12 = inlined_call_operand.hbm [shape: bf16[1600,40], index: 12, kind: input, shape index: {}]
  %s13 = inlined_call_operand.vmem [shape: f32[40,32], index: 13, kind: input, shape index: {}]
  %s14 = inlined_call_operand.vmem [shape: bf16[32,128], index: 14, kind: input, shape index: {}]
  %s15 = inlined_call_operand.vmem [shape: f32[16,128], index: 15, kind: output, shape index: {}]
  %s16 = sld [smem:[#allocation0]]
  $region90: #{_lambda_.1} parent=0
    _
  %s18 = ssub.s32 1, %s16
  %s19 = scalar_select 0, %s18, %s16
  $region1: #{_lambda_.1} parent=0
    #allocation2 [shape = 'u8[133120]{0}', space=vmem, size = 0x20800, scoped, tag = 'input window, operand 6, single buffered']
    #allocation3 [shape = 's32[1]{0}', space=sflag, size = 0x4, scoped, tag = 'scoped memory for _lambda_.1']
    #allocation4 [shape = 'u8[133120]{0}', space=vmem, size = 0x20800, scoped, tag = 'input window, operand 8, single buffered']
    #allocation5 [shape = 's32[1]{0}', space=sflag, size = 0x4, scoped, tag = 'scoped memory for _lambda_.1']
    #allocation6 [shape = 'u8[133120]{0}', space=vmem, size = 0x20800, scoped, tag = 'input window, operand 10, single buffered']
    #allocation7 [shape = 'u8[133120]{0}', space=vmem, size = 0x20800, scoped, tag = 'input window, operand 11, single buffered']
    #allocation8 [shape = 's32[1]{0}', space=sflag, size = 0x4, scoped, tag = 'scoped memory for _lambda_.1']
    #allocation9 [shape = 'u8[409600]{0}', space=vmem, size = 0x64000, scoped, tag = 'input window, operand 12, single buffered']
    %20 = vsyncpa [#allocation3], 0
    %21 = vsyncpa [#allocation5], 0
    %22 = vsyncpa [#allocation8], 0
    // Predicated region
    $region2: #{_lambda_.1} parent=1 // pred_check
      _
    $region3: #{_lambda_.1} parent=1 // pred_check_branch
      %24 = sbr.rel (0) target = $region5
    $region4: #{_lambda_.1} parent=1 // pred_region
      _
    $region5: #{_lambda_.1} parent=1 // pred_fallthru
      _
    // Predicated region
    $region6: #{_lambda_.1} parent=1 // pred_check
      _
    $region7: #{_lambda_.1} parent=1 // pred_check_branch
      %26 = sbr.rel (0) target = $region9
    $region8: #{_lambda_.1} parent=1 // pred_region
      _
    $region9: #{_lambda_.1} parent=1 // pred_fallthru
      _
    // Predicated region
    $region10: #{_lambda_.1} parent=1 // pred_check
      _
    $region11: #{_lambda_.1} parent=1 // pred_check_branch
      %28 = sbr.rel (0) target = $region13
    $region12: #{_lambda_.1} parent=1 // pred_region
      _
    $region13: #{_lambda_.1} parent=1 // pred_fallthru
      _
    // Predicated region
    $region14: #{_lambda_.1} parent=1 // pred_check
      _
    $region15: #{_lambda_.1} parent=1 // pred_check_branch
      %30 = sbr.rel (0) target = $region17
    $region16: #{_lambda_.1} parent=1 // pred_region
      _
    $region17: #{_lambda_.1} parent=1 // pred_fallthru
      _
    // Predicated region
    $region18: #{_lambda_.1} parent=1 // pred_check
      _
    $region19: #{_lambda_.1} parent=1 // pred_check_branch
      %32 = sbr.rel (0) target = $region21
    $region20: #{_lambda_.1} parent=1 // pred_region
      _
    $region21: #{_lambda_.1} parent=1 // pred_fallthru
      _
    // Predicated region
    $region22: #{_lambda_.1} parent=1 // pred_check
      _
    $region23: #{_lambda_.1} parent=1 // pred_check_branch
      %34 = sbr.rel (0) target = $region25
    $region24: #{_lambda_.1} parent=1 // pred_region
      _
    $region25: #{_lambda_.1} parent=1 // pred_fallthru
      _
    // Predicated region
    $region26: #{_lambda_.1} parent=1 // pred_check
      _
    $region27: #{_lambda_.1} parent=1 // pred_check_branch
      %36 = sbr.rel (0) target = $region29
    $region28: #{_lambda_.1} parent=1 // pred_region
      %s38 = ssub.s32 4160, 4160
      %39 = vsyncadd [#allocation3], %s38
      %s40 = sshll.u32 [#allocation2], 4
      %s41 = int_to_ptr.vmem [resolvable:$true] %s40
      %46 = dma.hbm_to_vmem [thread:$0]  %s6, 4160, %s41, [#allocation3], 832, 832, 52
    $region29: #{_lambda_.1} parent=1 // pred_fallthru
      _
    // Predicated region
    $region30: #{_lambda_.1} parent=1 // pred_check
      _
    $region31: #{_lambda_.1} parent=1 // pred_check_branch
      %48 = sbr.rel (0) target = $region33
    $region32: #{_lambda_.1} parent=1 // pred_region
      _
    $region33: #{_lambda_.1} parent=1 // pred_fallthru
      _
    // Predicated region
    $region34: #{_lambda_.1} parent=1 // pred_check
      _
    $region35: #{_lambda_.1} parent=1 // pred_check_branch
      %50 = sbr.rel (0) target = $region37
    $region36: #{_lambda_.1} parent=1 // pred_region
      %s52 = ssub.s32 4160, 4160
      %53 = vsyncadd [#allocation5], %s52
      %s54 = sshll.u32 [#allocation4], 4
      %s55 = int_to_ptr.vmem [resolvable:$true] %s54
      %60 = dma.hbm_to_vmem [thread:$0]  %s8, 4160, %s55, [#allocation5], 832, 832, 52
    $region37: #{_lambda_.1} parent=1 // pred_fallthru
      _
    // Predicated region
    $region38: #{_lambda_.1} parent=1 // pred_check
      _
    $region39: #{_lambda_.1} parent=1 // pred_check_branch
      %62 = sbr.rel (0) target = $region41
    $region40: #{_lambda_.1} parent=1 // pred_region
      _
    $region41: #{_lambda_.1} parent=1 // pred_fallthru
      _
    // Predicated region
    $region42: #{_lambda_.1} parent=1 // pred_check
      _
    $region43: #{_lambda_.1} parent=1 // pred_check_branch
      %64 = sbr.rel (0) target = $region45
    $region44: #{_lambda_.1} parent=1 // pred_region
      %s66 = ssub.s32 4160, 4160
      %67 = vsyncadd [#allocation5], %s66
      %s68 = sshll.u32 [#allocation6], 4
      %s69 = int_to_ptr.vmem [resolvable:$true] %s68
      %74 = dma.hbm_to_vmem [thread:$0]  %s10, 4160, %s69, [#allocation5], 832, 832, 52
    $region45: #{_lambda_.1} parent=1 // pred_fallthru
      _
    // Predicated region
    $region46: #{_lambda_.1} parent=1 // pred_check
      _
    $region47: #{_lambda_.1} parent=1 // pred_check_branch
      %76 = sbr.rel (0) target = $region49
    $region48: #{_lambda_.1} parent=1 // pred_region
      %s78 = ssub.s32 4160, 4160
      %79 = vsyncadd [#allocation8], %s78
      %s80 = sshll.u32 [#allocation7], 4
      %s81 = int_to_ptr.vmem [resolvable:$true] %s80
      %86 = dma.hbm_to_vmem [thread:$0]  %s11, 4160, %s81, [#allocation8], 832, 832, 52
    $region49: #{_lambda_.1} parent=1 // pred_fallthru
      _
    // Predicated region
    $region50: #{_lambda_.1} parent=1 // pred_check
      _
    $region51: #{_lambda_.1} parent=1 // pred_check_branch
      %88 = sbr.rel (0) target = $region53
    $region52: #{_lambda_.1} parent=1 // pred_region
      %s90 = ssub.s32 12800, 12800
      %91 = vsyncadd [#allocation8], %s90
      %s92 = sshll.u32 [#allocation9], 4
      %s93 = int_to_ptr.vmem [resolvable:$true] %s92
      %98 = dma.hbm_to_vmem [thread:$0]  %s12, 12800, %s93, [#allocation8], 64, 64, 4
    $region53: #{_lambda_.1} parent=1 // pred_fallthru
      _
    // Predicated region
    $region54: #{_lambda_.1} parent=1 // pred_check
      _
    $region55: #{_lambda_.1} parent=1 // pred_check_branch
      %100 = sbr.rel (0) target = $region57
    $region56: #{_lambda_.1} parent=1 // pred_region
      _
    $region57: #{_lambda_.1} parent=1 // pred_fallthru
      _
    // Predicated region
    $region58: #{_lambda_.1} parent=1 // pred_check
      _
    $region59: #{_lambda_.1} parent=1 // pred_check_branch
      %102 = sbr.rel (0) target = $region61
    $region60: #{_lambda_.1} parent=1 // pred_region
      _
    $region61: #{_lambda_.1} parent=1 // pred_fallthru
      _
    // Predicated region
    $region62: #{_lambda_.1} parent=1 // pred_check
      _
    $region63: #{_lambda_.1} parent=1 // pred_check_branch
      %104 = sbr.rel (0) target = $region65
    $region64: #{_lambda_.1} parent=1 // pred_region
      %105 = dma.done [#allocation3], 4160
    $region65: #{_lambda_.1} parent=1 // pred_fallthru
      _
    // Predicated region
    $region66: #{_lambda_.1} parent=1 // pred_check
      _
    $region67: #{_lambda_.1} parent=1 // pred_check_branch
      %107 = sbr.rel (0) target = $region69
    $region68: #{_lambda_.1} parent=1 // pred_region
      %108 = dma.done [#allocation5], 4160
    $region69: #{_lambda_.1} parent=1 // pred_fallthru
      _
    // Predicated region
    $region70: #{_lambda_.1} parent=1 // pred_check
      _
    $region71: #{_lambda_.1} parent=1 // pred_check_branch
      %110 = sbr.rel (0) target = $region73
    $region72: #{_lambda_.1} parent=1 // pred_region
      %111 = dma.done [#allocation5], 4160
    $region73: #{_lambda_.1} parent=1 // pred_fallthru
      _
    // Predicated region
    $region74: #{_lambda_.1} parent=1 // pred_check
      _
    $region75: #{_lambda_.1} parent=1 // pred_check_branch
      %113 = sbr.rel (0) target = $region77
    $region76: #{_lambda_.1} parent=1 // pred_region
      %114 = dma.done [#allocation8], 4160
    $region77: #{_lambda_.1} parent=1 // pred_fallthru
      _
    // Predicated region
    $region78: #{_lambda_.1} parent=1 // pred_check
      _
    $region79: #{_lambda_.1} parent=1 // pred_check_branch
      %116 = sbr.rel (0) target = $region81
    $region80: #{_lambda_.1} parent=1 // pred_region
      %117 = dma.done [#allocation8], 12800
    $region81: #{_lambda_.1} parent=1 // pred_fallthru
      _
    %v119 = vld [vmem:[#allocation7] sm:$0xff]
    %v120 = vld [vmem:[#allocation7 + $0x8] sm:$0xff]
    %v121 = vld [vmem:[#allocation7 + $0x10] sm:$0xff]
    %v122 = vld [vmem:[#allocation7 + $0x18] sm:$0xff]
    %v123 = vld [vmem:[#allocation7 + $0x20] sm:$0xff]
    %v124 = vld [vmem:[#allocation7 + $0x28] sm:$0xff]
    %v125 = vld [vmem:[#allocation7 + $0x30] sm:$0xf]
    %v126 = vld [vmem:[#allocation7 + $0x34] sm:$0xff]
    %v127 = vld [vmem:[#allocation7 + $0x3c] sm:$0xff]
    %v128 = vld [vmem:[#allocation7 + $0x44] sm:$0xff]
    %v129 = vld [vmem:[#allocation7 + $0x4c] sm:$0xff]
    %v130 = vld [vmem:[#allocation7 + $0x54] sm:$0xff]
    %v131 = vld [vmem:[#allocation7 + $0x5c] sm:$0xff]
    %v132 = vld [vmem:[#allocation7 + $0x64] sm:$0xf]
    %v133 = vld [vmem:[#allocation7 + $0x68] sm:$0xff]
    %v134 = vld [vmem:[#allocation7 + $0x70] sm:$0xff]
    %v135 = vld [vmem:[#allocation7 + $0x78] sm:$0xff]
    %v136 = vld [vmem:[#allocation7 + $0x80] sm:$0xff]
    %v137 = vld [vmem:[#allocation7 + $0x88] sm:$0xff]
    %v138 = vld [vmem:[#allocation7 + $0x90] sm:$0xff]
    %v139 = vld [vmem:[#allocation7 + $0x98] sm:$0xf]
    %v140 = vld [vmem:[#allocation7 + $0x9c] sm:$0xff]
    %v141 = vld [vmem:[#allocation7 + $0xa4] sm:$0xff]
    %v142 = vld [vmem:[#allocation7 + $0xac] sm:$0xff]
    %v143 = vld [vmem:[#allocation7 + $0xb4] sm:$0xff]
    %v144 = vld [vmem:[#allocation7 + $0xbc] sm:$0xff]
    %v145 = vld [vmem:[#allocation7 + $0xc4] sm:$0xff]
    %v146 = vld [vmem:[#allocation7 + $0xcc] sm:$0xf]
    %v147 = vld [vmem:[#allocation7 + $0xd0] sm:$0xff]
    %v148 = vld [vmem:[#allocation7 + $0xd8] sm:$0xff]
    %v149 = vld [vmem:[#allocation7 + $0xe0] sm:$0xff]
    %v150 = vld [vmem:[#allocation7 + $0xe8] sm:$0xff]
    %v151 = vld [vmem:[#allocation7 + $0xf0] sm:$0xff]
    %v152 = vld [vmem:[#allocation7 + $0xf8] sm:$0xff]
    %v153 = vld [vmem:[#allocation7 + $0x100] sm:$0xf]
    %v154 = vld [vmem:[#allocation9] sm:$0xf]
    %v155 = vld [vmem:[#allocation9 + $0x4] sm:$0xf]
    %v156 = vld [vmem:[#allocation9 + $0x8] sm:$0xf]
    %v157 = vld [vmem:[#allocation9 + $0xc] sm:$0xf]
    %v158 = vld [vmem:[#allocation9 + $0x10] sm:$0xf]
    %v159 = vld [vmem:[#allocation9 + $0x14] sm:$0xf]
    %v160 = vld [vmem:[#allocation9 + $0x18] sm:$0xf]
    %v161 = vld [vmem:[#allocation9 + $0x1c] sm:$0xf]
    %v162 = vld [vmem:[#allocation9 + $0x20] sm:$0xf]
    %v163 = vld [vmem:[#allocation9 + $0x24] sm:$0xf]
    %v164 = vld [vmem:[#allocation9 + $0x28] sm:$0xf]
    %v165 = vld [vmem:[#allocation9 + $0x2c] sm:$0xf]
    %v166 = vld [vmem:[#allocation9 + $0x30] sm:$0xf]
    %v167 = vld [vmem:[#allocation9 + $0x34] sm:$0xf]
    %v168 = vld [vmem:[#allocation9 + $0x38] sm:$0xf]
    %v169 = vld [vmem:[#allocation9 + $0x3c] sm:$0xf]
    %v170 = vld [vmem:[#allocation9 + $0x40] sm:$0xf]
    %v171 = vld [vmem:[#allocation9 + $0x44] sm:$0xf]
    %v172 = vld [vmem:[#allocation9 + $0x48] sm:$0xf]
    %v173 = vld [vmem:[#allocation9 + $0x4c] sm:$0xf]
    %v174 = vld [vmem:[#allocation9 + $0x50] sm:$0xf]
    %v175 = vld [vmem:[#allocation9 + $0x54] sm:$0xf]
    %v176 = vld [vmem:[#allocation9 + $0x58] sm:$0xf]
    %v177 = vld [vmem:[#allocation9 + $0x5c] sm:$0xf]
    %v178 = vld [vmem:[#allocation9 + $0x60] sm:$0xf]
    %v179 = vld [vmem:[#allocation9 + $0x64] sm:$0xf]
    %v180 = vld [vmem:[#allocation9 + $0x68] sm:$0xf]
    %v181 = vld [vmem:[#allocation9 + $0x6c] sm:$0xf]
    %v182 = vld [vmem:[#allocation9 + $0x70] sm:$0xf]
    %v183 = vld [vmem:[#allocation9 + $0x74] sm:$0xf]
    %v184 = vld [vmem:[#allocation9 + $0x78] sm:$0xf]
    %v185 = vld [vmem:[#allocation9 + $0x7c] sm:$0xf]
    %v186 = vld [vmem:[#allocation9 + $0x80] sm:$0xf]
    %v187 = vld [vmem:[#allocation9 + $0x84] sm:$0xf]
    %v188 = vld [vmem:[#allocation9 + $0x88] sm:$0xf]
    %v189 = vld [vmem:[#allocation9 + $0x8c] sm:$0xf]
    %v190 = vld [vmem:[#allocation9 + $0x90] sm:$0xf]
    %v191 = vld [vmem:[#allocation9 + $0x94] sm:$0xf]
    %v192 = vld [vmem:[#allocation9 + $0x98] sm:$0xf]
    %v193 = vld [vmem:[#allocation9 + $0x9c] sm:$0xf]
    %v194 = vld [vmem:[#allocation9 + $0xa0] sm:$0xf]
    %v195 = vld [vmem:[#allocation9 + $0xa4] sm:$0xf]
    %v196 = vld [vmem:[#allocation9 + $0xa8] sm:$0xf]
    %v197 = vld [vmem:[#allocation9 + $0xac] sm:$0xf]
    %v198 = vld [vmem:[#allocation9 + $0xb0] sm:$0xf]
    %v199 = vld [vmem:[#allocation9 + $0xb4] sm:$0xf]
    %v200 = vld [vmem:[#allocation9 + $0xb8] sm:$0xf]
    %v201 = vld [vmem:[#allocation9 + $0xbc] sm:$0xf]
    %v202 = vld [vmem:[#allocation9 + $0xc0] sm:$0xf]
    %v203 = vld [vmem:[#allocation9 + $0xc4] sm:$0xf]
    %v204 = vld [vmem:[#allocation9 + $0xc8] sm:$0xf]
    %v205 = vld [vmem:[#allocation9 + $0xcc] sm:$0xf]
    %v206 = vld [vmem:[#allocation9 + $0xd0] sm:$0xf]
    %v207 = vld [vmem:[#allocation9 + $0xd4] sm:$0xf]
    %v208 = vld [vmem:[#allocation9 + $0xd8] sm:$0xf]
    %v209 = vld [vmem:[#allocation9 + $0xdc] sm:$0xf]
    %v210 = vld [vmem:[#allocation9 + $0xe0] sm:$0xf]
    %v211 = vld [vmem:[#allocation9 + $0xe4] sm:$0xf]
    %v212 = vld [vmem:[#allocation9 + $0xe8] sm:$0xf]
    %v213 = vld [vmem:[#allocation9 + $0xec] sm:$0xf]
    %v214 = vld [vmem:[#allocation9 + $0xf0] sm:$0xf]
    %v215 = vld [vmem:[#allocation9 + $0xf4] sm:$0xf]
    %v216 = vld [vmem:[#allocation9 + $0xf8] sm:$0xf]
    %v217 = vld [vmem:[#allocation9 + $0xfc] sm:$0xf]
    %v218 = vld [vmem:[#allocation9 + $0x100] sm:$0xf]
    %v219 = vld [vmem:[#allocation9 + $0x104] sm:$0xf]
    %v220 = vld [vmem:[#allocation9 + $0x108] sm:$0xf]
    %v221 = vld [vmem:[#allocation9 + $0x10c] sm:$0xf]
    %v222 = vld [vmem:[#allocation9 + $0x110] sm:$0xf]
    %v223 = vld [vmem:[#allocation9 + $0x114] sm:$0xf]
    %v224 = vld [vmem:[#allocation9 + $0x118] sm:$0xf]
    %v225 = vld [vmem:[#allocation9 + $0x11c] sm:$0xf]
    %v226 = vld [vmem:[#allocation9 + $0x120] sm:$0xf]
    %v227 = vld [vmem:[#allocation9 + $0x124] sm:$0xf]
    %v228 = vld [vmem:[#allocation9 + $0x128] sm:$0xf]
    %v229 = vld [vmem:[#allocation9 + $0x12c] sm:$0xf]
    %v230 = vld [vmem:[#allocation9 + $0x130] sm:$0xf]
    %v231 = vld [vmem:[#allocation9 + $0x134] sm:$0xf]
    %v232 = vld [vmem:[#allocation9 + $0x138] sm:$0xf]
    %v233 = vld [vmem:[#allocation9 + $0x13c] sm:$0xf]
    %v234 = vld [vmem:[#allocation9 + $0x140] sm:$0xf]
    %v235 = vld [vmem:[#allocation9 + $0x144] sm:$0xf]
    %v236 = vld [vmem:[#allocation9 + $0x148] sm:$0xf]
    %v237 = vld [vmem:[#allocation9 + $0x14c] sm:$0xf]
    %v238 = vld [vmem:[#allocation9 + $0x150] sm:$0xf]
    %v239 = vld [vmem:[#allocation9 + $0x154] sm:$0xf]
    %v240 = vld [vmem:[#allocation9 + $0x158] sm:$0xf]
    %v241 = vld [vmem:[#allocation9 + $0x15c] sm:$0xf]
    %v242 = vld [vmem:[#allocation9 + $0x160] sm:$0xf]
    %v243 = vld [vmem:[#allocation9 + $0x164] sm:$0xf]
    %v244 = vld [vmem:[#allocation9 + $0x168] sm:$0xf]
    %v245 = vld [vmem:[#allocation9 + $0x16c] sm:$0xf]
    %v246 = vld [vmem:[#allocation9 + $0x170] sm:$0xf]
    %v247 = vld [vmem:[#allocation9 + $0x174] sm:$0xf]
    %v248 = vld [vmem:[#allocation9 + $0x178] sm:$0xf]
    %v249 = vld [vmem:[#allocation9 + $0x17c] sm:$0xf]
    %v250 = vld [vmem:[#allocation9 + $0x180] sm:$0xf]
    %v251 = vld [vmem:[#allocation9 + $0x184] sm:$0xf]
    %v252 = vld [vmem:[#allocation9 + $0x188] sm:$0xf]
    %v253 = vld [vmem:[#allocation9 + $0x18c] sm:$0xf]
    %v254 = vld [vmem:[#allocation9 + $0x190] sm:$0xf]
    %v255 = vld [vmem:[#allocation9 + $0x194] sm:$0xf]
    %v256 = vld [vmem:[#allocation9 + $0x198] sm:$0xf]
    %v257 = vld [vmem:[#allocation9 + $0x19c] sm:$0xf]
    %v258 = vld [vmem:[#allocation9 + $0x1a0] sm:$0xf]
    %v259 = vld [vmem:[#allocation9 + $0x1a4] sm:$0xf]
    %v260 = vld [vmem:[#allocation9 + $0x1a8] sm:$0xf]
    %v261 = vld [vmem:[#allocation9 + $0x1ac] sm:$0xf]
    %v262 = vld [vmem:[#allocation9 + $0x1b0] sm:$0xf]
    %v263 = vld [vmem:[#allocation9 + $0x1b4] sm:$0xf]
    %v264 = vld [vmem:[#allocation9 + $0x1b8] sm:$0xf]
    %v265 = vld [vmem:[#allocation9 + $0x1bc] sm:$0xf]
    %v266 = vld [vmem:[#allocation9 + $0x1c0] sm:$0xf]
    %v267 = vld [vmem:[#allocation9 + $0x1c4] sm:$0xf]
    %v268 = vld [vmem:[#allocation9 + $0x1c8] sm:$0xf]
    %v269 = vld [vmem:[#allocation9 + $0x1cc] sm:$0xf]
    %v270 = vld [vmem:[#allocation9 + $0x1d0] sm:$0xf]
    %v271 = vld [vmem:[#allocation9 + $0x1d4] sm:$0xf]
    %v272 = vld [vmem:[#allocation9 + $0x1d8] sm:$0xf]
    %v273 = vld [vmem:[#allocation9 + $0x1dc] sm:$0xf]
    %v274 = vld [vmem:[#allocation9 + $0x1e0] sm:$0xf]
    %v275 = vld [vmem:[#allocation9 + $0x1e4] sm:$0xf]
    %v276 = vld [vmem:[#allocation9 + $0x1e8] sm:$0xf]
    %v277 = vld [vmem:[#allocation9 + $0x1ec] sm:$0xf]
    %v278 = vld [vmem:[#allocation9 + $0x1f0] sm:$0xf]
    %v279 = vld [vmem:[#allocation9 + $0x1f4] sm:$0xf]
    %v280 = vld [vmem:[#allocation9 + $0x1f8] sm:$0xf]
    %v281 = vld [vmem:[#allocation9 + $0x1fc] sm:$0xf]
    %v282 = vld [vmem:[#allocation9 + $0x200] sm:$0xf]
    %v283 = vld [vmem:[#allocation9 + $0x204] sm:$0xf]
    %v284 = vld [vmem:[#allocation9 + $0x208] sm:$0xf]
    %v285 = vld [vmem:[#allocation9 + $0x20c] sm:$0xf]
    %v286 = vld [vmem:[#allocation9 + $0x210] sm:$0xf]
    %v287 = vld [vmem:[#allocation9 + $0x214] sm:$0xf]
    %v288 = vld [vmem:[#allocation9 + $0x218] sm:$0xf]
    %v289 = vld [vmem:[#allocation9 + $0x21c] sm:$0xf]
    %v290 = vld [vmem:[#allocation9 + $0x220] sm:$0xf]
    %v291 = vld [vmem:[#allocation9 + $0x224] sm:$0xf]
    %v292 = vld [vmem:[#allocation9 + $0x228] sm:$0xf]
    %v293 = vld [vmem:[#allocation9 + $0x22c] sm:$0xf]
    %v294 = vld [vmem:[#allocation9 + $0x230] sm:$0xf]
    %v295 = vld [vmem:[#allocation9 + $0x234] sm:$0xf]
    %v296 = vld [vmem:[#allocation9 + $0x238] sm:$0xf]
    %v297 = vld [vmem:[#allocation9 + $0x23c] sm:$0xf]
    %v298 = vld [vmem:[#allocation9 + $0x240] sm:$0xf]
    %v299 = vld [vmem:[#allocation9 + $0x244] sm:$0xf]
    %v300 = vld [vmem:[#allocation9 + $0x248] sm:$0xf]
    %v301 = vld [vmem:[#allocation9 + $0x24c] sm:$0xf]
    %v302 = vld [vmem:[#allocation9 + $0x250] sm:$0xf]
    %v303 = vld [vmem:[#allocation9 + $0x254] sm:$0xf]
    %v304 = vld [vmem:[#allocation9 + $0x258] sm:$0xf]
    %v305 = vld [vmem:[#allocation9 + $0x25c] sm:$0xf]
    %v306 = vld [vmem:[#allocation9 + $0x260] sm:$0xf]
    %v307 = vld [vmem:[#allocation9 + $0x264] sm:$0xf]
    %v308 = vld [vmem:[#allocation9 + $0x268] sm:$0xf]
    %v309 = vld [vmem:[#allocation9 + $0x26c] sm:$0xf]
    %v310 = vld [vmem:[#allocation9 + $0x270] sm:$0xf]
    %v311 = vld [vmem:[#allocation9 + $0x274] sm:$0xf]
    %v312 = vld [vmem:[#allocation9 + $0x278] sm:$0xf]
    %v313 = vld [vmem:[#allocation9 + $0x27c] sm:$0xf]
    %v314 = vld [vmem:[#allocation9 + $0x280] sm:$0xf]
    %v315 = vld [vmem:[#allocation9 + $0x284] sm:$0xf]
    %v316 = vld [vmem:[#allocation9 + $0x288] sm:$0xf]
    %v317 = vld [vmem:[#allocation9 + $0x28c] sm:$0xf]
    %v318 = vld [vmem:[#allocation9 + $0x290] sm:$0xf]
    %v319 = vld [vmem:[#allocation9 + $0x294] sm:$0xf]
    %v320 = vld [vmem:[#allocation9 + $0x298] sm:$0xf]
    %v321 = vld [vmem:[#allocation9 + $0x29c] sm:$0xf]
    %v322 = vld [vmem:[#allocation9 + $0x2a0] sm:$0xf]
    %v323 = vld [vmem:[#allocation9 + $0x2a4] sm:$0xf]
    %v324 = vld [vmem:[#allocation9 + $0x2a8] sm:$0xf]
    %v325 = vld [vmem:[#allocation9 + $0x2ac] sm:$0xf]
    %v326 = vld [vmem:[#allocation9 + $0x2b0] sm:$0xf]
    %v327 = vld [vmem:[#allocation9 + $0x2b4] sm:$0xf]
    %v328 = vld [vmem:[#allocation9 + $0x2b8] sm:$0xf]
    %v329 = vld [vmem:[#allocation9 + $0x2bc] sm:$0xf]
    %v330 = vld [vmem:[#allocation9 + $0x2c0] sm:$0xf]
    %v331 = vld [vmem:[#allocation9 + $0x2c4] sm:$0xf]
    %v332 = vld [vmem:[#allocation9 + $0x2c8] sm:$0xf]
    %v333 = vld [vmem:[#allocation9 + $0x2cc] sm:$0xf]
    %v334 = vld [vmem:[#allocation9 + $0x2d0] sm:$0xf]
    %v335 = vld [vmem:[#allocation9 + $0x2d4] sm:$0xf]
    %v336 = vld [vmem:[#allocation9 + $0x2d8] sm:$0xf]
    %v337 = vld [vmem:[#allocation9 + $0x2dc] sm:$0xf]
    %v338 = vld [vmem:[#allocation9 + $0x2e0] sm:$0xf]
    %v339 = vld [vmem:[#allocation9 + $0x2e4] sm:$0xf]
    %v340 = vld [vmem:[#allocation9 + $0x2e8] sm:$0xf]
    %v341 = vld [vmem:[#allocation9 + $0x2ec] sm:$0xf]
    %v342 = vld [vmem:[#allocation9 + $0x2f0] sm:$0xf]
    %v343 = vld [vmem:[#allocation9 + $0x2f4] sm:$0xf]
    %v344 = vld [vmem:[#allocation9 + $0x2f8] sm:$0xf]
    %v345 = vld [vmem:[#allocation9 + $0x2fc] sm:$0xf]
    %v346 = vld [vmem:[#allocation9 + $0x300] sm:$0xf]
    %v347 = vld [vmem:[#allocation9 + $0x304] sm:$0xf]
    %v348 = vld [vmem:[#allocation9 + $0x308] sm:$0xf]
    %v349 = vld [vmem:[#allocation9 + $0x30c] sm:$0xf]
    %v350 = vld [vmem:[#allocation9 + $0x310] sm:$0xf]
    %v351 = vld [vmem:[#allocation9 + $0x314] sm:$0xf]
    %v352 = vld [vmem:[#allocation9 + $0x318] sm:$0xf]
    %v353 = vld [vmem:[#allocation9 + $0x31c] sm:$0xf]
    %v354 = vld [vmem:[%s13] sm:$0xff]
    %v355 = vld [vmem:[%s13 + $0x8] sm:$0xff]
    %v356 = vld [vmem:[%s13 + $0x10] sm:$0xff]
    %v357 = vld [vmem:[%s13 + $0x18] sm:$0xff]
    %v358 = vld [vmem:[%s13 + $0x20] sm:$0xff]
    %v359 = vld [vmem:[%s0] sm:$0xff]
    %v360 = vld [vmem:[%s0 + $0x8] sm:$0xff]
    %v361 = vpack.c.bf16 %v360, %v359
    %v362 = vld [vmem:[%s5] sm:$0xf]
    %v363 = vld [vmem:[%s5 + $0x4] sm:$0xf]
    %v364 = vld [vmem:[%s1] sm:$0xff]
    %v365 = vld [vmem:[%s1 + $0x8] sm:$0xff]
    %v368 = vunpack.c.l.b16 %v362
    %v369 = vunpack.c.l.b16 %v363
    %v370 = vpack.c.b16 %v369, %v368
    %vm372 = vcmask 130048
    %v374 = vsel %vm372, %v361, 0
    %376 = vmatprep.subr.bf16.mxu0 0
    %377 = vmatpush1.bf16.msra.mxu0 %v370
    %378 = vmatprep.subr.bf16.mxu0 0
    %379 = vmatpush1.bf16.msra.mxu0 0
    %380 = vmatprep.subr.bf16.mxu0 0
    %381 = vmatpush1.bf16.msra.mxu0 0
    %382 = vmatprep.subr.bf16.mxu0 0
    %383 = vmatpush1.bf16.msra.mxu0 0
    %384 = vmatprep.subr.bf16.mxu0 0
    %385 = vmatpush1.bf16.msra.mxu0 0
    %386 = vmatprep.subr.bf16.mxu0 0
    %387 = vmatpush1.bf16.msra.mxu0 0
    %388 = vmatprep.subr.bf16.mxu0 0
    %389 = vmatpush1.bf16.msra.mxu0 0
    %390 = vmatprep.subr.bf16.mxu0 0
    %391 = vmatpush1.bf16.msra.mxu0 0
    %392 = vmatprep.subr.bf16.mxu0 0
    %393 = vmatpush1.bf16.msra.mxu0 0
    %394 = vmatprep.subr.bf16.mxu0 0
    %395 = vmatpush1.bf16.msra.mxu0 0
    %396 = vmatprep.subr.bf16.mxu0 0
    %397 = vmatpush1.bf16.msra.mxu0 0
    %398 = vmatprep.subr.bf16.mxu0 0
    %399 = vmatpush1.bf16.msra.mxu0 0
    %400 = vmatprep.subr.bf16.mxu0 0
    %401 = vmatpush1.bf16.msra.mxu0 0
    %402 = vmatprep.subr.bf16.mxu0 0
    %403 = vmatpush1.bf16.msra.mxu0 0
    %404 = vmatprep.subr.bf16.mxu0 0
    %405 = vmatpush1.bf16.msra.mxu0 0
    %406 = vmatprep.subr.bf16.mxu0 0
    %407 = vmatpush1.bf16.msra.mxu0 0
    %408 = vmatprep.mubr.bf16.mxu0 0
    %409 = vmatmul.mubr.bf16.gmra.mrb[0].mxu0 %v374
    %v410 = vpop.f32.mrb[0].mxu0
    %v411 = vadd.f32 %v364, %v410
    %v412 = vpop.f32.mrb[0].mxu0
    %v413 = vpop.f32.mrb[0].mxu0
    %v414 = vadd.f32 %v365, %v413
    %v415 = vpop.f32.mrb[0].mxu0
    %416 = vdwg.mxu0
    %v417 = vpack.c.bf16 %v414, %v411
    %v418 = vld [vmem:[#allocation2] sm:$0xff]
    %v419 = vld [vmem:[#allocation2 + $0x8] sm:$0xff]
    %v420 = vld [vmem:[#allocation2 + $0x10] sm:$0xff]
    %v421 = vld [vmem:[#allocation2 + $0x18] sm:$0xff]
    %v422 = vld [vmem:[#allocation2 + $0x20] sm:$0xff]
    %v423 = vld [vmem:[#allocation2 + $0x28] sm:$0xff]
    %v424 = vld [vmem:[#allocation2 + $0x30] sm:$0xf]
    %v425 = vld [vmem:[#allocation2 + $0x34] sm:$0xff]
    %v426 = vld [vmem:[#allocation2 + $0x3c] sm:$0xff]
    %v427 = vld [vmem:[#allocation2 + $0x44] sm:$0xff]
    %v428 = vld [vmem:[#allocation2 + $0x4c] sm:$0xff]
    %v429 = vld [vmem:[#allocation2 + $0x54] sm:$0xff]
    %v430 = vld [vmem:[#allocation2 + $0x5c] sm:$0xff]
    %v431 = vld [vmem:[#allocation2 + $0x64] sm:$0xf]
    %v432 = vld [vmem:[#allocation2 + $0x68] sm:$0xff]
    %v433 = vld [vmem:[#allocation2 + $0x70] sm:$0xff]
    %v434 = vld [vmem:[#allocation2 + $0x78] sm:$0xff]
    %v435 = vld [vmem:[#allocation2 + $0x80] sm:$0xff]
    %v436 = vld [vmem:[#allocation2 + $0x88] sm:$0xff]
    %v437 = vld [vmem:[#allocation2 + $0x90] sm:$0xff]
    %v438 = vld [vmem:[#allocation2 + $0x98] sm:$0xf]
    %v439 = vld [vmem:[#allocation2 + $0x9c] sm:$0xff]
    %v440 = vld [vmem:[#allocation2 + $0xa4] sm:$0xff]
    %v441 = vld [vmem:[#allocation2 + $0xac] sm:$0xff]
    %v442 = vld [vmem:[#allocation2 + $0xb4] sm:$0xff]
    %v443 = vld [vmem:[#allocation2 + $0xbc] sm:$0xff]
    %v444 = vld [vmem:[#allocation2 + $0xc4] sm:$0xff]
    %v445 = vld [vmem:[#allocation2 + $0xcc] sm:$0xf]
    %v446 = vld [vmem:[#allocation2 + $0xd0] sm:$0xff]
    %v447 = vld [vmem:[#allocation2 + $0xd8] sm:$0xff]
    %v448 = vld [vmem:[#allocation2 + $0xe0] sm:$0xff]
    %v449 = vld [vmem:[#allocation2 + $0xe8] sm:$0xff]
    %v450 = vld [vmem:[#allocation2 + $0xf0] sm:$0xff]
    %v451 = vld [vmem:[#allocation2 + $0xf8] sm:$0xff]
    %v452 = vld [vmem:[#allocation2 + $0x100] sm:$0xf]
    %v488 = vunpack.c.l.b16 %v418
    %v489 = vunpack.c.h.b16 %v418
    %v490 = vunpack.c.l.b16 %v419
    %v491 = vunpack.c.h.b16 %v419
    %v492 = vunpack.c.l.b16 %v420
    %v493 = vunpack.c.h.b16 %v420
    %v494 = vunpack.c.l.b16 %v421
    %v495 = vunpack.c.h.b16 %v421
    %v496 = vunpack.c.l.b16 %v422
    %v497 = vunpack.c.h.b16 %v422
    %v498 = vunpack.c.l.b16 %v423
    %v499 = vunpack.c.h.b16 %v423
    %v500 = vunpack.c.l.b16 %v424
    %v501 = vunpack.c.l.b16 %v425
    %v502 = vunpack.c.h.b16 %v425
    %v503 = vunpack.c.l.b16 %v426
    %v504 = vunpack.c.h.b16 %v426
    %v505 = vunpack.c.l.b16 %v427
    %v506 = vunpack.c.h.b16 %v427
    %v507 = vunpack.c.l.b16 %v428
    %v508 = vunpack.c.h.b16 %v428
    %v509 = vunpack.c.l.b16 %v429
    %v510 = vunpack.c.h.b16 %v429
    %v511 = vunpack.c.l.b16 %v430
    %v512 = vunpack.c.h.b16 %v430
    %v513 = vunpack.c.l.b16 %v431
    %v514 = vunpack.c.l.b16 %v432
    %v515 = vunpack.c.h.b16 %v432
    %v516 = vunpack.c.l.b16 %v433
    %v517 = vunpack.c.h.b16 %v433
    %v518 = vunpack.c.l.b16 %v434
    %v519 = vunpack.c.h.b16 %v434
    %v520 = vunpack.c.l.b16 %v435
    %v521 = vunpack.c.h.b16 %v435
    %v522 = vunpack.c.l.b16 %v436
    %v523 = vunpack.c.h.b16 %v436
    %v524 = vunpack.c.l.b16 %v437
    %v525 = vunpack.c.h.b16 %v437
    %v526 = vunpack.c.l.b16 %v438
    %v527 = vunpack.c.l.b16 %v439
    %v528 = vunpack.c.h.b16 %v439
    %v529 = vunpack.c.l.b16 %v440
    %v530 = vunpack.c.h.b16 %v440
    %v531 = vunpack.c.l.b16 %v441
    %v532 = vunpack.c.h.b16 %v441
    %v533 = vunpack.c.l.b16 %v442
    %v534 = vunpack.c.h.b16 %v442
    %v535 = vunpack.c.l.b16 %v443
    %v536 = vunpack.c.h.b16 %v443
    %v537 = vunpack.c.l.b16 %v444
    %v538 = vunpack.c.h.b16 %v444
    %v539 = vunpack.c.l.b16 %v445
    %v540 = vunpack.c.l.b16 %v446
    %v541 = vunpack.c.h.b16 %v446
    %v542 = vunpack.c.l.b16 %v447
    %v543 = vunpack.c.h.b16 %v447
    %v544 = vunpack.c.l.b16 %v448
    %v545 = vunpack.c.h.b16 %v448
    %v546 = vunpack.c.l.b16 %v449
    %v547 = vunpack.c.h.b16 %v449
    %v548 = vunpack.c.l.b16 %v450
    %v549 = vunpack.c.h.b16 %v450
    %v550 = vunpack.c.l.b16 %v451
    %v551 = vunpack.c.h.b16 %v451
    %v552 = vunpack.c.l.b16 %v452
    %v553 = vpack.c.b16 %v501, %v488
    %v554 = vpack.c.b16 %v502, %v489
    %v555 = vpack.c.b16 %v503, %v490
    %v556 = vpack.c.b16 %v504, %v491
    %v557 = vpack.c.b16 %v505, %v492
    %v558 = vpack.c.b16 %v506, %v493
    %v559 = vpack.c.b16 %v507, %v494
    %v560 = vpack.c.b16 %v508, %v495
    %v561 = vpack.c.b16 %v509, %v496
    %v562 = vpack.c.b16 %v510, %v497
    %v563 = vpack.c.b16 %v511, %v498
    %v564 = vpack.c.b16 %v512, %v499
    %v565 = vpack.c.b16 %v513, %v500
    %v566 = vpack.c.b16 %v527, %v514
    %v567 = vpack.c.b16 %v528, %v515
    %v568 = vpack.c.b16 %v529, %v516
    %v569 = vpack.c.b16 %v530, %v517
    %v570 = vpack.c.b16 %v531, %v518
    %v571 = vpack.c.b16 %v532, %v519
    %v572 = vpack.c.b16 %v533, %v520
    %v573 = vpack.c.b16 %v534, %v521
    %v574 = vpack.c.b16 %v535, %v522
    %v575 = vpack.c.b16 %v536, %v523
    %v576 = vpack.c.b16 %v537, %v524
    %v577 = vpack.c.b16 %v538, %v525
    %v578 = vpack.c.b16 %v539, %v526
    %v579 = vpack.c.b16 %v540, %v540
    %v580 = vpack.c.b16 %v541, %v541
    %v581 = vpack.c.b16 %v542, %v542
    %v582 = vpack.c.b16 %v543, %v543
    %v583 = vpack.c.b16 %v544, %v544
    %v584 = vpack.c.b16 %v545, %v545
    %v585 = vpack.c.b16 %v546, %v546
    %v586 = vpack.c.b16 %v547, %v547
    %v587 = vpack.c.b16 %v548, %v548
    %v588 = vpack.c.b16 %v549, %v549
    %v589 = vpack.c.b16 %v550, %v550
    %v590 = vpack.c.b16 %v551, %v551
    %v591 = vpack.c.b16 %v552, %v552
    %vm618 = vcmask 326656
    %v620 = vsel %vm618, %v417, 0
    %vm622 = vcmask 1043456
    %v624 = vsel %vm622, %v579, 0
    %v627 = vsel %vm622, %v580, 0
    %v630 = vsel %vm622, %v581, 0
    %v633 = vsel %vm622, %v582, 0
    %v636 = vsel %vm622, %v583, 0
    %v639 = vsel %vm622, %v584, 0
    %v642 = vsel %vm622, %v585, 0
    %v645 = vsel %vm622, %v586, 0
    %v648 = vsel %vm622, %v587, 0
    %v651 = vsel %vm622, %v588, 0
    %v654 = vsel %vm622, %v589, 0
    %v657 = vsel %vm622, %v590, 0
    %v660 = vsel %vm622, %v591, 0
    %662 = vmatprep.subr.bf16.mxu0 %v554
    %663 = vmatpush1.bf16.msra.mxu0 %v553
    %664 = vmatprep.subr.bf16.mxu0 %v567
    %665 = vmatpush1.bf16.msra.mxu0 %v566
    %666 = vmatprep.subr.bf16.mxu0 %v627
    %667 = vmatpush1.bf16.msra.mxu0 %v624
    %668 = vmatprep.subr.bf16.mxu0 0
    %669 = vmatpush1.bf16.msra.mxu0 0
    %670 = vmatprep.subr.bf16.mxu0 0
    %671 = vmatpush1.bf16.msra.mxu0 0
    %672 = vmatprep.subr.bf16.mxu0 0
    %673 = vmatpush1.bf16.msra.mxu0 0
    %674 = vmatprep.subr.bf16.mxu0 0
    %675 = vmatpush1.bf16.msra.mxu0 0
    %676 = vmatprep.subr.bf16.mxu0 0
    %677 = vmatpush1.bf16.msra.mxu0 0
    %678 = vmatprep.subr.bf16.mxu0 0
    %679 = vmatpush1.bf16.msra.mxu0 0
    %680 = vmatprep.subr.bf16.mxu0 0
    %681 = vmatpush1.bf16.msra.mxu0 0
    %682 = vmatprep.subr.bf16.mxu0 0
    %683 = vmatpush1.bf16.msra.mxu0 0
    %684 = vmatprep.subr.bf16.mxu0 0
    %685 = vmatpush1.bf16.msra.mxu0 0
    %686 = vmatprep.subr.bf16.mxu0 0
    %687 = vmatpush1.bf16.msra.mxu0 0
    %688 = vmatprep.subr.bf16.mxu0 0
    %689 = vmatpush1.bf16.msra.mxu0 0
    %690 = vmatprep.subr.bf16.mxu0 0
    %691 = vmatpush1.bf16.msra.mxu0 0
    %692 = vmatprep.subr.bf16.mxu0 0
    %693 = vmatpush1.bf16.msra.mxu0 0
    %694 = vmatprep.mubr.bf16.mxu0 0
    %695 = vmatmul.mubr.bf16.gmra.mrb[0].mxu0 %v620
    %v696 = vpop.f32.mrb[0].mxu0
    %v697 = vadd.f32 0.0, %v696
    %v698 = vpop.f32.mrb[0].mxu0
    %v699 = vadd.f32 0.0, %v698
    %v700 = vpop.f32.mrb[0].mxu0
    %v701 = vadd.f32 0.0, %v700
    %v702 = vpop.f32.mrb[0].mxu0
    %v703 = vadd.f32 0.0, %v702
    %704 = vdwg.mxu0
    %705 = vmatprep.subr.bf16.mxu0 %v556
    %706 = vmatpush1.bf16.msra.mxu0 %v555
    %707 = vmatprep.subr.bf16.mxu0 %v569
    %708 = vmatpush1.bf16.msra.mxu0 %v568
    %709 = vmatprep.subr.bf16.mxu0 %v633
    %710 = vmatpush1.bf16.msra.mxu0 %v630
    %711 = vmatprep.subr.bf16.mxu0 0
    %712 = vmatpush1.bf16.msra.mxu0 0
    %713 = vmatprep.subr.bf16.mxu0 0
    %714 = vmatpush1.bf16.msra.mxu0 0
    %715 = vmatprep.subr.bf16.mxu0 0
    %716 = vmatpush1.bf16.msra.mxu0 0
    %717 = vmatprep.subr.bf16.mxu0 0
    %718 = vmatpush1.bf16.msra.mxu0 0
    %719 = vmatprep.subr.bf16.mxu0 0
    %720 = vmatpush1.bf16.msra.mxu0 0
    %721 = vmatprep.subr.bf16.mxu0 0
    %722 = vmatpush1.bf16.msra.mxu0 0
    %723 = vmatprep.subr.bf16.mxu0 0
    %724 = vmatpush1.bf16.msra.mxu0 0
    %725 = vmatprep.subr.bf16.mxu0 0
    %726 = vmatpush1.bf16.msra.mxu0 0
    %727 = vmatprep.subr.bf16.mxu0 0
    %728 = vmatpush1.bf16.msra.mxu0 0
    %729 = vmatprep.subr.bf16.mxu0 0
    %730 = vmatpush1.bf16.msra.mxu0 0
    %731 = vmatprep.subr.bf16.mxu0 0
    %732 = vmatpush1.bf16.msra.mxu0 0
    %733 = vmatprep.subr.bf16.mxu0 0
    %734 = vmatpush1.bf16.msra.mxu0 0
    %735 = vmatprep.subr.bf16.mxu0 0
    %736 = vmatpush1.bf16.msra.mxu0 0
    %737 = vmatprep.mubr.bf16.mxu0 0
    %738 = vmatmul.mubr.bf16.gmra.mrb[0].mxu0 %v620
    %v739 = vpop.f32.mrb[0].mxu0
    %v740 = vadd.f32 0.0, %v739
    %v741 = vpop.f32.mrb[0].mxu0
    %v742 = vadd.f32 0.0, %v741
    %v743 = vpop.f32.mrb[0].mxu0
    %v744 = vadd.f32 0.0, %v743
    %v745 = vpop.f32.mrb[0].mxu0
    %v746 = vadd.f32 0.0, %v745
    %747 = vdwg.mxu0
    %748 = vmatprep.subr.bf16.mxu0 %v558
    %749 = vmatpush1.bf16.msra.mxu0 %v557
    %750 = vmatprep.subr.bf16.mxu0 %v571
    %751 = vmatpush1.bf16.msra.mxu0 %v570
    %752 = vmatprep.subr.bf16.mxu0 %v639
    %753 = vmatpush1.bf16.msra.mxu0 %v636
    %754 = vmatprep.subr.bf16.mxu0 0
    %755 = vmatpush1.bf16.msra.mxu0 0
    %756 = vmatprep.subr.bf16.mxu0 0
    %757 = vmatpush1.bf16.msra.mxu0 0
    %758 = vmatprep.subr.bf16.mxu0 0
    %759 = vmatpush1.bf16.msra.mxu0 0
    %760 = vmatprep.subr.bf16.mxu0 0
    %761 = vmatpush1.bf16.msra.mxu0 0
    %762 = vmatprep.subr.bf16.mxu0 0
    %763 = vmatpush1.bf16.msra.mxu0 0
    %764 = vmatprep.subr.bf16.mxu0 0
    %765 = vmatpush1.bf16.msra.mxu0 0
    %766 = vmatprep.subr.bf16.mxu0 0
    %767 = vmatpush1.bf16.msra.mxu0 0
    %768 = vmatprep.subr.bf16.mxu0 0
    %769 = vmatpush1.bf16.msra.mxu0 0
    %770 = vmatprep.subr.bf16.mxu0 0
    %771 = vmatpush1.bf16.msra.mxu0 0
    %772 = vmatprep.subr.bf16.mxu0 0
    %773 = vmatpush1.bf16.msra.mxu0 0
    %774 = vmatprep.subr.bf16.mxu0 0
    %775 = vmatpush1.bf16.msra.mxu0 0
    %776 = vmatprep.subr.bf16.mxu0 0
    %777 = vmatpush1.bf16.msra.mxu0 0
    %778 = vmatprep.subr.bf16.mxu0 0
    %779 = vmatpush1.bf16.msra.mxu0 0
    %780 = vmatprep.mubr.bf16.mxu0 0
    %781 = vmatmul.mubr.bf16.gmra.mrb[0].mxu0 %v620
    %v782 = vpop.f32.mrb[0].mxu0
    %v783 = vadd.f32 0.0, %v782
    %v784 = vpop.f32.mrb[0].mxu0
    %v785 = vadd.f32 0.0, %v784
    %v786 = vpop.f32.mrb[0].mxu0
    %v787 = vadd.f32 0.0, %v786
    %v788 = vpop.f32.mrb[0].mxu0
    %v789 = vadd.f32 0.0, %v788
    %790 = vdwg.mxu0
    %791 = vmatprep.subr.bf16.mxu0 %v560
    %792 = vmatpush1.bf16.msra.mxu0 %v559
    %793 = vmatprep.subr.bf16.mxu0 %v573
    %794 = vmatpush1.bf16.msra.mxu0 %v572
    %795 = vmatprep.subr.bf16.mxu0 %v645
    %796 = vmatpush1.bf16.msra.mxu0 %v642
    %797 = vmatprep.subr.bf16.mxu0 0
    %798 = vmatpush1.bf16.msra.mxu0 0
    %799 = vmatprep.subr.bf16.mxu0 0
    %800 = vmatpush1.bf16.msra.mxu0 0
    %801 = vmatprep.subr.bf16.mxu0 0
    %802 = vmatpush1.bf16.msra.mxu0 0
    %803 = vmatprep.subr.bf16.mxu0 0
    %804 = vmatpush1.bf16.msra.mxu0 0
    %805 = vmatprep.subr.bf16.mxu0 0
    %806 = vmatpush1.bf16.msra.mxu0 0
    %807 = vmatprep.subr.bf16.mxu0 0
    %808 = vmatpush1.bf16.msra.mxu0 0
    %809 = vmatprep.subr.bf16.mxu0 0
    %810 = vmatpush1.bf16.msra.mxu0 0
    %811 = vmatprep.subr.bf16.mxu0 0
    %812 = vmatpush1.bf16.msra.mxu0 0
    %813 = vmatprep.subr.bf16.mxu0 0
    %814 = vmatpush1.bf16.msra.mxu0 0
    %815 = vmatprep.subr.bf16.mxu0 0
    %816 = vmatpush1.bf16.msra.mxu0 0
    %817 = vmatprep.subr.bf16.mxu0 0
    %818 = vmatpush1.bf16.msra.mxu0 0
    %819 = vmatprep.subr.bf16.mxu0 0
    %820 = vmatpush1.bf16.msra.mxu0 0
    %821 = vmatprep.subr.bf16.mxu0 0
    %822 = vmatpush1.bf16.msra.mxu0 0
    %823 = vmatprep.mubr.bf16.mxu0 0
    %824 = vmatmul.mubr.bf16.gmra.mrb[0].mxu0 %v620
    %v825 = vpop.f32.mrb[0].mxu0
    %v826 = vadd.f32 0.0, %v825
    %v827 = vpop.f32.mrb[0].mxu0
    %v828 = vadd.f32 0.0, %v827
    %v829 = vpop.f32.mrb[0].mxu0
    %v830 = vadd.f32 0.0, %v829
    %v831 = vpop.f32.mrb[0].mxu0
    %v832 = vadd.f32 0.0, %v831
    %833 = vdwg.mxu0
    %834 = vmatprep.subr.bf16.mxu0 %v562
    %835 = vmatpush1.bf16.msra.mxu0 %v561
    %836 = vmatprep.subr.bf16.mxu0 %v575
    %837 = vmatpush1.bf16.msra.mxu0 %v574
    %838 = vmatprep.subr.bf16.mxu0 %v651
    %839 = vmatpush1.bf16.msra.mxu0 %v648
    %840 = vmatprep.subr.bf16.mxu0 0
    %841 = vmatpush1.bf16.msra.mxu0 0
    %842 = vmatprep.subr.bf16.mxu0 0
    %843 = vmatpush1.bf16.msra.mxu0 0
    %844 = vmatprep.subr.bf16.mxu0 0
    %845 = vmatpush1.bf16.msra.mxu0 0
    %846 = vmatprep.subr.bf16.mxu0 0
    %847 = vmatpush1.bf16.msra.mxu0 0
    %848 = vmatprep.subr.bf16.mxu0 0
    %849 = vmatpush1.bf16.msra.mxu0 0
    %850 = vmatprep.subr.bf16.mxu0 0
    %851 = vmatpush1.bf16.msra.mxu0 0
    %852 = vmatprep.subr.bf16.mxu0 0
    %853 = vmatpush1.bf16.msra.mxu0 0
    %854 = vmatprep.subr.bf16.mxu0 0
    %855 = vmatpush1.bf16.msra.mxu0 0
    %856 = vmatprep.subr.bf16.mxu0 0
    %857 = vmatpush1.bf16.msra.mxu0 0
    %858 = vmatprep.subr.bf16.mxu0 0
    %859 = vmatpush1.bf16.msra.mxu0 0
    %860 = vmatprep.subr.bf16.mxu0 0
    %861 = vmatpush1.bf16.msra.mxu0 0
    %862 = vmatprep.subr.bf16.mxu0 0
    %863 = vmatpush1.bf16.msra.mxu0 0
    %864 = vmatprep.subr.bf16.mxu0 0
    %865 = vmatpush1.bf16.msra.mxu0 0
    %866 = vmatprep.mubr.bf16.mxu0 0
    %867 = vmatmul.mubr.bf16.gmra.mrb[0].mxu0 %v620
    %v868 = vpop.f32.mrb[0].mxu0
    %v869 = vadd.f32 0.0, %v868
    %v870 = vpop.f32.mrb[0].mxu0
    %v871 = vadd.f32 0.0, %v870
    %v872 = vpop.f32.mrb[0].mxu0
    %v873 = vadd.f32 0.0, %v872
    %v874 = vpop.f32.mrb[0].mxu0
    %v875 = vadd.f32 0.0, %v874
    %876 = vdwg.mxu0
    %877 = vmatprep.subr.bf16.mxu0 %v564
    %878 = vmatpush1.bf16.msra.mxu0 %v563
    %879 = vmatprep.subr.bf16.mxu0 %v577
    %880 = vmatpush1.bf16.msra.mxu0 %v576
    %881 = vmatprep.subr.bf16.mxu0 %v657
    %882 = vmatpush1.bf16.msra.mxu0 %v654
    %883 = vmatprep.subr.bf16.mxu0 0
    %884 = vmatpush1.bf16.msra.mxu0 0
    %885 = vmatprep.subr.bf16.mxu0 0
    %886 = vmatpush1.bf16.msra.mxu0 0
    %887 = vmatprep.subr.bf16.mxu0 0
    %888 = vmatpush1.bf16.msra.mxu0 0
    %889 = vmatprep.subr.bf16.mxu0 0
    %890 = vmatpush1.bf16.msra.mxu0 0
    %891 = vmatprep.subr.bf16.mxu0 0
    %892 = vmatpush1.bf16.msra.mxu0 0
    %893 = vmatprep.subr.bf16.mxu0 0
    %894 = vmatpush1.bf16.msra.mxu0 0
    %895 = vmatprep.subr.bf16.mxu0 0
    %896 = vmatpush1.bf16.msra.mxu0 0
    %897 = vmatprep.subr.bf16.mxu0 0
    %898 = vmatpush1.bf16.msra.mxu0 0
    %899 = vmatprep.subr.bf16.mxu0 0
    %900 = vmatpush1.bf16.msra.mxu0 0
    %901 = vmatprep.subr.bf16.mxu0 0
    %902 = vmatpush1.bf16.msra.mxu0 0
    %903 = vmatprep.subr.bf16.mxu0 0
    %904 = vmatpush1.bf16.msra.mxu0 0
    %905 = vmatprep.subr.bf16.mxu0 0
    %906 = vmatpush1.bf16.msra.mxu0 0
    %907 = vmatprep.subr.bf16.mxu0 0
    %908 = vmatpush1.bf16.msra.mxu0 0
    %909 = vmatprep.mubr.bf16.mxu0 0
    %910 = vmatmul.mubr.bf16.gmra.mrb[0].mxu0 %v620
    %v911 = vpop.f32.mrb[0].mxu0
    %v912 = vadd.f32 0.0, %v911
    %v913 = vpop.f32.mrb[0].mxu0
    %v914 = vadd.f32 0.0, %v913
    %v915 = vpop.f32.mrb[0].mxu0
    %v916 = vadd.f32 0.0, %v915
    %v917 = vpop.f32.mrb[0].mxu0
    %v918 = vadd.f32 0.0, %v917
    %919 = vdwg.mxu0
    %920 = vmatprep.subr.bf16.mxu0 0
    %921 = vmatpush1.bf16.msra.mxu0 %v565
    %922 = vmatprep.subr.bf16.mxu0 0
    %923 = vmatpush1.bf16.msra.mxu0 %v578
    %924 = vmatprep.subr.bf16.mxu0 0
    %925 = vmatpush1.bf16.msra.mxu0 %v660
    %926 = vmatprep.subr.bf16.mxu0 0
    %927 = vmatpush1.bf16.msra.mxu0 0
    %928 = vmatprep.subr.bf16.mxu0 0
    %929 = vmatpush1.bf16.msra.mxu0 0
    %930 = vmatprep.subr.bf16.mxu0 0
    %931 = vmatpush1.bf16.msra.mxu0 0
    %932 = vmatprep.subr.bf16.mxu0 0
    %933 = vmatpush1.bf16.msra.mxu0 0
    %934 = vmatprep.subr.bf16.mxu0 0
    %935 = vmatpush1.bf16.msra.mxu0 0
    %936 = vmatprep.subr.bf16.mxu0 0
    %937 = vmatpush1.bf16.msra.mxu0 0
    %938 = vmatprep.subr.bf16.mxu0 0
    %939 = vmatpush1.bf16.msra.mxu0 0
    %940 = vmatprep.subr.bf16.mxu0 0
    %941 = vmatpush1.bf16.msra.mxu0 0
    %942 = vmatprep.subr.bf16.mxu0 0
    %943 = vmatpush1.bf16.msra.mxu0 0
    %944 = vmatprep.subr.bf16.mxu0 0
    %945 = vmatpush1.bf16.msra.mxu0 0
    %946 = vmatprep.subr.bf16.mxu0 0
    %947 = vmatpush1.bf16.msra.mxu0 0
    %948 = vmatprep.subr.bf16.mxu0 0
    %949 = vmatpush1.bf16.msra.mxu0 0
    %950 = vmatprep.subr.bf16.mxu0 0
    %951 = vmatpush1.bf16.msra.mxu0 0
    %952 = vmatprep.mubr.bf16.mxu0 0
    %953 = vmatmul.mubr.bf16.gmra.mrb[0].mxu0 %v620
    %v954 = vpop.f32.mrb[0].mxu0
    %v955 = vadd.f32 0.0, %v954
    %v956 = vpop.f32.mrb[0].mxu0
    %v957 = vpop.f32.mrb[0].mxu0
    %v958 = vadd.f32 0.0, %v957
    %v959 = vpop.f32.mrb[0].mxu0
    %960 = vdwg.mxu0
    %v996 = vunpack.c.l.b16 %v119
    %v997 = vunpack.c.h.b16 %v119
    %v998 = vunpack.c.l.b16 %v120
    %v999 = vunpack.c.h.b16 %v120
    %v1000 = vunpack.c.l.b16 %v121
    %v1001 = vunpack.c.h.b16 %v121
    %v1002 = vunpack.c.l.b16 %v122
    %v1003 = vunpack.c.h.b16 %v122
    %v1004 = vunpack.c.l.b16 %v123
    %v1005 = vunpack.c.h.b16 %v123
    %v1006 = vunpack.c.l.b16 %v124
    %v1007 = vunpack.c.h.b16 %v124
    %v1008 = vunpack.c.l.b16 %v125
    %v1009 = vunpack.c.l.b16 %v126
    %v1010 = vunpack.c.h.b16 %v126
    %v1011 = vunpack.c.l.b16 %v127
    %v1012 = vunpack.c.h.b16 %v127
    %v1013 = vunpack.c.l.b16 %v128
    %v1014 = vunpack.c.h.b16 %v128
    %v1015 = vunpack.c.l.b16 %v129
    %v1016 = vunpack.c.h.b16 %v129
    %v1017 = vunpack.c.l.b16 %v130
    %v1018 = vunpack.c.h.b16 %v130
    %v1019 = vunpack.c.l.b16 %v131
    %v1020 = vunpack.c.h.b16 %v131
    %v1021 = vunpack.c.l.b16 %v132
    %v1022 = vunpack.c.l.b16 %v133
    %v1023 = vunpack.c.h.b16 %v133
    %v1024 = vunpack.c.l.b16 %v134
    %v1025 = vunpack.c.h.b16 %v134
    %v1026 = vunpack.c.l.b16 %v135
    %v1027 = vunpack.c.h.b16 %v135
    %v1028 = vunpack.c.l.b16 %v136
    %v1029 = vunpack.c.h.b16 %v136
    %v1030 = vunpack.c.l.b16 %v137
    %v1031 = vunpack.c.h.b16 %v137
    %v1032 = vunpack.c.l.b16 %v138
    %v1033 = vunpack.c.h.b16 %v138
    %v1034 = vunpack.c.l.b16 %v139
    %v1035 = vunpack.c.l.b16 %v140
    %v1036 = vunpack.c.h.b16 %v140
    %v1037 = vunpack.c.l.b16 %v141
    %v1038 = vunpack.c.h.b16 %v141
    %v1039 = vunpack.c.l.b16 %v142
    %v1040 = vunpack.c.h.b16 %v142
    %v1041 = vunpack.c.l.b16 %v143
    %v1042 = vunpack.c.h.b16 %v143
    %v1043 = vunpack.c.l.b16 %v144
    %v1044 = vunpack.c.h.b16 %v144
    %v1045 = vunpack.c.l.b16 %v145
    %v1046 = vunpack.c.h.b16 %v145
    %v1047 = vunpack.c.l.b16 %v146
    %v1048 = vunpack.c.l.b16 %v147
    %v1049 = vunpack.c.h.b16 %v147
    %v1050 = vunpack.c.l.b16 %v148
    %v1051 = vunpack.c.h.b16 %v148
    %v1052 = vunpack.c.l.b16 %v149
    %v1053 = vunpack.c.h.b16 %v149
    %v1054 = vunpack.c.l.b16 %v150
    %v1055 = vunpack.c.h.b16 %v150
    %v1056 = vunpack.c.l.b16 %v151
    %v1057 = vunpack.c.h.b16 %v151
    %v1058 = vunpack.c.l.b16 %v152
    %v1059 = vunpack.c.h.b16 %v152
    %v1060 = vunpack.c.l.b16 %v153
    %v1061 = vpack.c.b16 %v1009, %v996
    %v1062 = vpack.c.b16 %v1010, %v997
    %v1063 = vpack.c.b16 %v1011, %v998
    %v1064 = vpack.c.b16 %v1012, %v999
    %v1065 = vpack.c.b16 %v1013, %v1000
    %v1066 = vpack.c.b16 %v1014, %v1001
    %v1067 = vpack.c.b16 %v1015, %v1002
    %v1068 = vpack.c.b16 %v1016, %v1003
    %v1069 = vpack.c.b16 %v1017, %v1004
    %v1070 = vpack.c.b16 %v1018, %v1005
    %v1071 = vpack.c.b16 %v1019, %v1006
    %v1072 = vpack.c.b16 %v1020, %v1007
    %v1073 = vpack.c.b16 %v1021, %v1008
    %v1074 = vpack.c.b16 %v1035, %v1022
    %v1075 = vpack.c.b16 %v1036, %v1023
    %v1076 = vpack.c.b16 %v1037, %v1024
    %v1077 = vpack.c.b16 %v1038, %v1025
    %v1078 = vpack.c.b16 %v1039, %v1026
    %v1079 = vpack.c.b16 %v1040, %v1027
    %v1080 = vpack.c.b16 %v1041, %v1028
    %v1081 = vpack.c.b16 %v1042, %v1029
    %v1082 = vpack.c.b16 %v1043, %v1030
    %v1083 = vpack.c.b16 %v1044, %v1031
    %v1084 = vpack.c.b16 %v1045, %v1032
    %v1085 = vpack.c.b16 %v1046, %v1033
    %v1086 = vpack.c.b16 %v1047, %v1034
    %v1087 = vpack.c.b16 %v1048, %v1048
    %v1088 = vpack.c.b16 %v1049, %v1049
    %v1089 = vpack.c.b16 %v1050, %v1050
    %v1090 = vpack.c.b16 %v1051, %v1051
    %v1091 = vpack.c.b16 %v1052, %v1052
    %v1092 = vpack.c.b16 %v1053, %v1053
    %v1093 = vpack.c.b16 %v1054, %v1054
    %v1094 = vpack.c.b16 %v1055, %v1055
    %v1095 = vpack.c.b16 %v1056, %v1056
    %v1096 = vpack.c.b16 %v1057, %v1057
    %v1097 = vpack.c.b16 %v1058, %v1058
    %v1098 = vpack.c.b16 %v1059, %v1059
    %v1099 = vpack.c.b16 %v1060, %v1060
    %v1127 = vsel %vm622, %v1087, 0
    %v1130 = vsel %vm622, %v1088, 0
    %v1133 = vsel %vm622, %v1089, 0
    %v1136 = vsel %vm622, %v1090, 0
    %v1139 = vsel %vm622, %v1091, 0
    %v1142 = vsel %vm622, %v1092, 0
    %v1145 = vsel %vm622, %v1093, 0
    %v1148 = vsel %vm622, %v1094, 0
    %v1151 = vsel %vm622, %v1095, 0
    %v1154 = vsel %vm622, %v1096, 0
    %v1157 = vsel %vm622, %v1097, 0
    %v1160 = vsel %vm622, %v1098, 0
    %v1163 = vsel %vm622, %v1099, 0
    %1165 = vmatprep.subr.bf16.mxu0 %v1062
    %1166 = vmatpush1.bf16.msra.mxu0 %v1061
    %1167 = vmatprep.subr.bf16.mxu0 %v1075
    %1168 = vmatpush1.bf16.msra.mxu0 %v1074
    %1169 = vmatprep.subr.bf16.mxu0 %v1130
    %1170 = vmatpush1.bf16.msra.mxu0 %v1127
    %1171 = vmatprep.subr.bf16.mxu0 0
    %1172 = vmatpush1.bf16.msra.mxu0 0
    %1173 = vmatprep.subr.bf16.mxu0 0
    %1174 = vmatpush1.bf16.msra.mxu0 0
    %1175 = vmatprep.subr.bf16.mxu0 0
    %1176 = vmatpush1.bf16.msra.mxu0 0
    %1177 = vmatprep.subr.bf16.mxu0 0
    %1178 = vmatpush1.bf16.msra.mxu0 0
    %1179 = vmatprep.subr.bf16.mxu0 0
    %1180 = vmatpush1.bf16.msra.mxu0 0
    %1181 = vmatprep.subr.bf16.mxu0 0
    %1182 = vmatpush1.bf16.msra.mxu0 0
    %1183 = vmatprep.subr.bf16.mxu0 0
    %1184 = vmatpush1.bf16.msra.mxu0 0
    %1185 = vmatprep.subr.bf16.mxu0 0
    %1186 = vmatpush1.bf16.msra.mxu0 0
    %1187 = vmatprep.subr.bf16.mxu0 0
    %1188 = vmatpush1.bf16.msra.mxu0 0
    %1189 = vmatprep.subr.bf16.mxu0 0
    %1190 = vmatpush1.bf16.msra.mxu0 0
    %1191 = vmatprep.subr.bf16.mxu0 0
    %1192 = vmatpush1.bf16.msra.mxu0 0
    %1193 = vmatprep.subr.bf16.mxu0 0
    %1194 = vmatpush1.bf16.msra.mxu0 0
    %1195 = vmatprep.subr.bf16.mxu0 0
    %1196 = vmatpush1.bf16.msra.mxu0 0
    %1197 = vmatprep.mubr.bf16.mxu0 0
    %1198 = vmatmul.mubr.bf16.gmra.mrb[0].mxu0 %v620
    %v1199 = vpop.f32.mrb[0].mxu0
    %v1200 = vadd.f32 0.0, %v1199
    %v1201 = vpop.f32.mrb[0].mxu0
    %v1202 = vadd.f32 0.0, %v1201
    %v1203 = vpop.f32.mrb[0].mxu0
    %v1204 = vadd.f32 0.0, %v1203
    %v1205 = vpop.f32.mrb[0].mxu0
    %v1206 = vadd.f32 0.0, %v1205
    %1207 = vdwg.mxu0
    %1208 = vmatprep.subr.bf16.mxu0 %v1064
    %1209 = vmatpush1.bf16.msra.mxu0 %v1063
    %1210 = vmatprep.subr.bf16.mxu0 %v1077
    %1211 = vmatpush1.bf16.msra.mxu0 %v1076
    %1212 = vmatprep.subr.bf16.mxu0 %v1136
    %1213 = vmatpush1.bf16.msra.mxu0 %v1133
    %1214 = vmatprep.subr.bf16.mxu0 0
    %1215 = vmatpush1.bf16.msra.mxu0 0
    %1216 = vmatprep.subr.bf16.mxu0 0
    %1217 = vmatpush1.bf16.msra.mxu0 0
    %1218 = vmatprep.subr.bf16.mxu0 0
    %1219 = vmatpush1.bf16.msra.mxu0 0
    %1220 = vmatprep.subr.bf16.mxu0 0
    %1221 = vmatpush1.bf16.msra.mxu0 0
    %1222 = vmatprep.subr.bf16.mxu0 0
    %1223 = vmatpush1.bf16.msra.mxu0 0
    %1224 = vmatprep.subr.bf16.mxu0 0
    %1225 = vmatpush1.bf16.msra.mxu0 0
    %1226 = vmatprep.subr.bf16.mxu0 0
    %1227 = vmatpush1.bf16.msra.mxu0 0
    %1228 = vmatprep.subr.bf16.mxu0 0
    %1229 = vmatpush1.bf16.msra.mxu0 0
    %1230 = vmatprep.subr.bf16.mxu0 0
    %1231 = vmatpush1.bf16.msra.mxu0 0
    %1232 = vmatprep.subr.bf16.mxu0 0
    %1233 = vmatpush1.bf16.msra.mxu0 0
    %1234 = vmatprep.subr.bf16.mxu0 0
    %1235 = vmatpush1.bf16.msra.mxu0 0
    %1236 = vmatprep.subr.bf16.mxu0 0
    %1237 = vmatpush1.bf16.msra.mxu0 0
    %1238 = vmatprep.subr.bf16.mxu0 0
    %1239 = vmatpush1.bf16.msra.mxu0 0
    %1240 = vmatprep.mubr.bf16.mxu0 0
    %1241 = vmatmul.mubr.bf16.gmra.mrb[0].mxu0 %v620
    %v1242 = vpop.f32.mrb[0].mxu0
    %v1243 = vadd.f32 0.0, %v1242
    %v1244 = vpop.f32.mrb[0].mxu0
    %v1245 = vadd.f32 0.0, %v1244
    %v1246 = vpop.f32.mrb[0].mxu0
    %v1247 = vadd.f32 0.0, %v1246
    %v1248 = vpop.f32.mrb[0].mxu0
    %v1249 = vadd.f32 0.0, %v1248
    %1250 = vdwg.mxu0
    %1251 = vmatprep.subr.bf16.mxu0 %v1066
    %1252 = vmatpush1.bf16.msra.mxu0 %v1065
    %1253 = vmatprep.subr.bf16.mxu0 %v1079
    %1254 = vmatpush1.bf16.msra.mxu0 %v1078
    %1255 = vmatprep.subr.bf16.mxu0 %v1142
    %1256 = vmatpush1.bf16.msra.mxu0 %v1139
    %1257 = vmatprep.subr.bf16.mxu0 0
    %1258 = vmatpush1.bf16.msra.mxu0 0
    %1259 = vmatprep.subr.bf16.mxu0 0
    %1260 = vmatpush1.bf16.msra.mxu0 0
    %1261 = vmatprep.subr.bf16.mxu0 0
    %1262 = vmatpush1.bf16.msra.mxu0 0
    %1263 = vmatprep.subr.bf16.mxu0 0
    %1264 = vmatpush1.bf16.msra.mxu0 0
    %1265 = vmatprep.subr.bf16.mxu0 0
    %1266 = vmatpush1.bf16.msra.mxu0 0
    %1267 = vmatprep.subr.bf16.mxu0 0
    %1268 = vmatpush1.bf16.msra.mxu0 0
    %1269 = vmatprep.subr.bf16.mxu0 0
    %1270 = vmatpush1.bf16.msra.mxu0 0
    %1271 = vmatprep.subr.bf16.mxu0 0
    %1272 = vmatpush1.bf16.msra.mxu0 0
    %1273 = vmatprep.subr.bf16.mxu0 0
    %1274 = vmatpush1.bf16.msra.mxu0 0
    %1275 = vmatprep.subr.bf16.mxu0 0
    %1276 = vmatpush1.bf16.msra.mxu0 0
    %1277 = vmatprep.subr.bf16.mxu0 0
    %1278 = vmatpush1.bf16.msra.mxu0 0
    %1279 = vmatprep.subr.bf16.mxu0 0
    %1280 = vmatpush1.bf16.msra.mxu0 0
    %1281 = vmatprep.subr.bf16.mxu0 0
    %1282 = vmatpush1.bf16.msra.mxu0 0
    %1283 = vmatprep.mubr.bf16.mxu0 0
    %1284 = vmatmul.mubr.bf16.gmra.mrb[0].mxu0 %v620
    %v1285 = vpop.f32.mrb[0].mxu0
    %v1286 = vadd.f32 0.0, %v1285
    %v1287 = vpop.f32.mrb[0].mxu0
    %v1288 = vadd.f32 0.0, %v1287
    %v1289 = vpop.f32.mrb[0].mxu0
    %v1290 = vadd.f32 0.0, %v1289
    %v1291 = vpop.f32.mrb[0].mxu0
    %v1292 = vadd.f32 0.0, %v1291
    %1293 = vdwg.mxu0
    %1294 = vmatprep.subr.bf16.mxu0 %v1068
    %1295 = vmatpush1.bf16.msra.mxu0 %v1067
    %1296 = vmatprep.subr.bf16.mxu0 %v1081
    %1297 = vmatpush1.bf16.msra.mxu0 %v1080
    %1298 = vmatprep.subr.bf16.mxu0 %v1148
    %1299 = vmatpush1.bf16.msra.mxu0 %v1145
    %1300 = vmatprep.subr.bf16.mxu0 0
    %1301 = vmatpush1.bf16.msra.mxu0 0
    %1302 = vmatprep.subr.bf16.mxu0 0
    %1303 = vmatpush1.bf16.msra.mxu0 0
    %1304 = vmatprep.subr.bf16.mxu0 0
    %1305 = vmatpush1.bf16.msra.mxu0 0
    %1306 = vmatprep.subr.bf16.mxu0 0
    %1307 = vmatpush1.bf16.msra.mxu0 0
    %1308 = vmatprep.subr.bf16.mxu0 0
    %1309 = vmatpush1.bf16.msra.mxu0 0
    %1310 = vmatprep.subr.bf16.mxu0 0
    %1311 = vmatpush1.bf16.msra.mxu0 0
    %1312 = vmatprep.subr.bf16.mxu0 0
    %1313 = vmatpush1.bf16.msra.mxu0 0
    %1314 = vmatprep.subr.bf16.mxu0 0
    %1315 = vmatpush1.bf16.msra.mxu0 0
    %1316 = vmatprep.subr.bf16.mxu0 0
    %1317 = vmatpush1.bf16.msra.mxu0 0
    %1318 = vmatprep.subr.bf16.mxu0 0
    %1319 = vmatpush1.bf16.msra.mxu0 0
    %1320 = vmatprep.subr.bf16.mxu0 0
    %1321 = vmatpush1.bf16.msra.mxu0 0
    %1322 = vmatprep.subr.bf16.mxu0 0
    %1323 = vmatpush1.bf16.msra.mxu0 0
    %1324 = vmatprep.subr.bf16.mxu0 0
    %1325 = vmatpush1.bf16.msra.mxu0 0
    %1326 = vmatprep.mubr.bf16.mxu0 0
    %1327 = vmatmul.mubr.bf16.gmra.mrb[0].mxu0 %v620
    %v1328 = vpop.f32.mrb[0].mxu0
    %v1329 = vadd.f32 0.0, %v1328
    %v1330 = vpop.f32.mrb[0].mxu0
    %v1331 = vadd.f32 0.0, %v1330
    %v1332 = vpop.f32.mrb[0].mxu0
    %v1333 = vadd.f32 0.0, %v1332
    %v1334 = vpop.f32.mrb[0].mxu0
    %v1335 = vadd.f32 0.0, %v1334
    %1336 = vdwg.mxu0
    %1337 = vmatprep.subr.bf16.mxu0 %v1070
    %1338 = vmatpush1.bf16.msra.mxu0 %v1069
    %1339 = vmatprep.subr.bf16.mxu0 %v1083
    %1340 = vmatpush1.bf16.msra.mxu0 %v1082
    %1341 = vmatprep.subr.bf16.mxu0 %v1154
    %1342 = vmatpush1.bf16.msra.mxu0 %v1151
    %1343 = vmatprep.subr.bf16.mxu0 0
    %1344 = vmatpush1.bf16.msra.mxu0 0
    %1345 = vmatprep.subr.bf16.mxu0 0
    %1346 = vmatpush1.bf16.msra.mxu0 0
    %1347 = vmatprep.subr.bf16.mxu0 0
    %1348 = vmatpush1.bf16.msra.mxu0 0
    %1349 = vmatprep.subr.bf16.mxu0 0
    %1350 = vmatpush1.bf16.msra.mxu0 0
    %1351 = vmatprep.subr.bf16.mxu0 0
    %1352 = vmatpush1.bf16.msra.mxu0 0
    %1353 = vmatprep.subr.bf16.mxu0 0
    %1354 = vmatpush1.bf16.msra.mxu0 0
    %1355 = vmatprep.subr.bf16.mxu0 0
    %1356 = vmatpush1.bf16.msra.mxu0 0
    %1357 = vmatprep.subr.bf16.mxu0 0
    %1358 = vmatpush1.bf16.msra.mxu0 0
    %1359 = vmatprep.subr.bf16.mxu0 0
    %1360 = vmatpush1.bf16.msra.mxu0 0
    %1361 = vmatprep.subr.bf16.mxu0 0
    %1362 = vmatpush1.bf16.msra.mxu0 0
    %1363 = vmatprep.subr.bf16.mxu0 0
    %1364 = vmatpush1.bf16.msra.mxu0 0
    %1365 = vmatprep.subr.bf16.mxu0 0
    %1366 = vmatpush1.bf16.msra.mxu0 0
    %1367 = vmatprep.subr.bf16.mxu0 0
    %1368 = vmatpush1.bf16.msra.mxu0 0
    %1369 = vmatprep.mubr.bf16.mxu0 0
    %1370 = vmatmul.mubr.bf16.gmra.mrb[0].mxu0 %v620
    %v1371 = vpop.f32.mrb[0].mxu0
    %v1372 = vadd.f32 0.0, %v1371
    %v1373 = vpop.f32.mrb[0].mxu0
    %v1374 = vadd.f32 0.0, %v1373
    %v1375 = vpop.f32.mrb[0].mxu0
    %v1376 = vadd.f32 0.0, %v1375
    %v1377 = vpop.f32.mrb[0].mxu0
    %v1378 = vadd.f32 0.0, %v1377
    %1379 = vdwg.mxu0
    %1380 = vmatprep.subr.bf16.mxu0 %v1072
    %1381 = vmatpush1.bf16.msra.mxu0 %v1071
    %1382 = vmatprep.subr.bf16.mxu0 %v1085
    %1383 = vmatpush1.bf16.msra.mxu0 %v1084
    %1384 = vmatprep.subr.bf16.mxu0 %v1160
    %1385 = vmatpush1.bf16.msra.mxu0 %v1157
    %1386 = vmatprep.subr.bf16.mxu0 0
    %1387 = vmatpush1.bf16.msra.mxu0 0
    %1388 = vmatprep.subr.bf16.mxu0 0
    %1389 = vmatpush1.bf16.msra.mxu0 0
    %1390 = vmatprep.subr.bf16.mxu0 0
    %1391 = vmatpush1.bf16.msra.mxu0 0
    %1392 = vmatprep.subr.bf16.mxu0 0
    %1393 = vmatpush1.bf16.msra.mxu0 0
    %1394 = vmatprep.subr.bf16.mxu0 0
    %1395 = vmatpush1.bf16.msra.mxu0 0
    %1396 = vmatprep.subr.bf16.mxu0 0
    %1397 = vmatpush1.bf16.msra.mxu0 0
    %1398 = vmatprep.subr.bf16.mxu0 0
    %1399 = vmatpush1.bf16.msra.mxu0 0
    %1400 = vmatprep.subr.bf16.mxu0 0
    %1401 = vmatpush1.bf16.msra.mxu0 0
    %1402 = vmatprep.subr.bf16.mxu0 0
    %1403 = vmatpush1.bf16.msra.mxu0 0
    %1404 = vmatprep.subr.bf16.mxu0 0
    %1405 = vmatpush1.bf16.msra.mxu0 0
    %1406 = vmatprep.subr.bf16.mxu0 0
    %1407 = vmatpush1.bf16.msra.mxu0 0
    %1408 = vmatprep.subr.bf16.mxu0 0
    %1409 = vmatpush1.bf16.msra.mxu0 0
    %1410 = vmatprep.subr.bf16.mxu0 0
    %1411 = vmatpush1.bf16.msra.mxu0 0
    %1412 = vmatprep.mubr.bf16.mxu0 0
    %1413 = vmatmul.mubr.bf16.gmra.mrb[0].mxu0 %v620
    %v1414 = vpop.f32.mrb[0].mxu0
    %v1415 = vadd.f32 0.0, %v1414
    %v1416 = vpop.f32.mrb[0].mxu0
    %v1417 = vadd.f32 0.0, %v1416
    %v1418 = vpop.f32.mrb[0].mxu0
    %v1419 = vadd.f32 0.0, %v1418
    %v1420 = vpop.f32.mrb[0].mxu0
    %v1421 = vadd.f32 0.0, %v1420
    %1422 = vdwg.mxu0
    %1423 = vmatprep.subr.bf16.mxu0 0
    %1424 = vmatpush1.bf16.msra.mxu0 %v1073
    %1425 = vmatprep.subr.bf16.mxu0 0
    %1426 = vmatpush1.bf16.msra.mxu0 %v1086
    %1427 = vmatprep.subr.bf16.mxu0 0
    %1428 = vmatpush1.bf16.msra.mxu0 %v1163
    %1429 = vmatprep.subr.bf16.mxu0 0
    %1430 = vmatpush1.bf16.msra.mxu0 0
    %1431 = vmatprep.subr.bf16.mxu0 0
    %1432 = vmatpush1.bf16.msra.mxu0 0
    %1433 = vmatprep.subr.bf16.mxu0 0
    %1434 = vmatpush1.bf16.msra.mxu0 0
    %1435 = vmatprep.subr.bf16.mxu0 0
    %1436 = vmatpush1.bf16.msra.mxu0 0
    %1437 = vmatprep.subr.bf16.mxu0 0
    %1438 = vmatpush1.bf16.msra.mxu0 0
    %1439 = vmatprep.subr.bf16.mxu0 0
    %1440 = vmatpush1.bf16.msra.mxu0 0
    %1441 = vmatprep.subr.bf16.mxu0 0
    %1442 = vmatpush1.bf16.msra.mxu0 0
    %1443 = vmatprep.subr.bf16.mxu0 0
    %1444 = vmatpush1.bf16.msra.mxu0 0
    %1445 = vmatprep.subr.bf16.mxu0 0
    %1446 = vmatpush1.bf16.msra.mxu0 0
    %1447 = vmatprep.subr.bf16.mxu0 0
    %1448 = vmatpush1.bf16.msra.mxu0 0
    %1449 = vmatprep.subr.bf16.mxu0 0
    %1450 = vmatpush1.bf16.msra.mxu0 0
    %1451 = vmatprep.subr.bf16.mxu0 0
    %1452 = vmatpush1.bf16.msra.mxu0 0
    %1453 = vmatprep.subr.bf16.mxu0 0
    %1454 = vmatpush1.bf16.msra.mxu0 0
    %1455 = vmatprep.mubr.bf16.mxu0 0
    %1456 = vmatmul.mubr.bf16.gmra.mrb[0].mxu0 %v620
    %v1457 = vpop.f32.mrb[0].mxu0
    %v1458 = vadd.f32 0.0, %v1457
    %v1459 = vpop.f32.mrb[0].mxu0
    %v1460 = vpop.f32.mrb[0].mxu0
    %v1461 = vadd.f32 0.0, %v1460
    %v1462 = vpop.f32.mrb[0].mxu0
    %1463 = vdwg.mxu0
    %v1464 = vmul.f32 %v697, %v1200
    %v1465 = vmul.f32 %v699, %v1202
    %v1466 = vmul.f32 %v740, %v1243
    %v1467 = vmul.f32 %v742, %v1245
    %v1468 = vmul.f32 %v783, %v1286
    %v1469 = vmul.f32 %v785, %v1288
    %v1470 = vmul.f32 %v826, %v1329
    %v1471 = vmul.f32 %v828, %v1331
    %v1472 = vmul.f32 %v869, %v1372
    %v1473 = vmul.f32 %v871, %v1374
    %v1474 = vmul.f32 %v912, %v1415
    %v1475 = vmul.f32 %v914, %v1417
    %v1476 = vmul.f32 %v955, %v1458
    %v1477 = vmul.f32 %v701, %v1204
    %v1478 = vmul.f32 %v703, %v1206
    %v1479 = vmul.f32 %v744, %v1247
    %v1480 = vmul.f32 %v746, %v1249
    %v1481 = vmul.f32 %v787, %v1290
    %v1482 = vmul.f32 %v789, %v1292
    %v1483 = vmul.f32 %v830, %v1333
    %v1484 = vmul.f32 %v832, %v1335
    %v1485 = vmul.f32 %v873, %v1376
    %v1486 = vmul.f32 %v875, %v1378
    %v1487 = vmul.f32 %v916, %v1419
    %v1488 = vmul.f32 %v918, %v1421
    %v1489 = vmul.f32 %v958, %v1461
    %v1490 = vpack.c.bf16 %v1477, %v1464
    %v1491 = vpack.c.bf16 %v1478, %v1465
    %v1492 = vpack.c.bf16 %v1479, %v1466
    %v1493 = vpack.c.bf16 %v1480, %v1467
    %v1494 = vpack.c.bf16 %v1481, %v1468
    %v1495 = vpack.c.bf16 %v1482, %v1469
    %v1496 = vpack.c.bf16 %v1483, %v1470
    %v1497 = vpack.c.bf16 %v1484, %v1471
    %v1498 = vpack.c.bf16 %v1485, %v1472
    %v1499 = vpack.c.bf16 %v1486, %v1473
    %v1500 = vpack.c.bf16 %v1487, %v1474
    %v1501 = vpack.c.bf16 %v1488, %v1475
    %v1502 = vpack.c.bf16 %v1489, %v1476
    %v1703 = vunpack.c.l.b16 %v154
    %v1704 = vunpack.c.l.b16 %v155
    %v1705 = vunpack.c.l.b16 %v156
    %v1706 = vunpack.c.l.b16 %v157
    %v1707 = vunpack.c.l.b16 %v158
    %v1708 = vunpack.c.l.b16 %v159
    %v1709 = vunpack.c.l.b16 %v160
    %v1710 = vunpack.c.l.b16 %v161
    %v1711 = vunpack.c.l.b16 %v162
    %v1712 = vunpack.c.l.b16 %v163
    %v1713 = vunpack.c.l.b16 %v164
    %v1714 = vunpack.c.l.b16 %v165
    %v1715 = vunpack.c.l.b16 %v166
    %v1716 = vunpack.c.l.b16 %v167
    %v1717 = vunpack.c.l.b16 %v168
    %v1718 = vunpack.c.l.b16 %v169
    %v1719 = vunpack.c.l.b16 %v170
    %v1720 = vunpack.c.l.b16 %v171
    %v1721 = vunpack.c.l.b16 %v172
    %v1722 = vunpack.c.l.b16 %v173
    %v1723 = vunpack.c.l.b16 %v174
    %v1724 = vunpack.c.l.b16 %v175
    %v1725 = vunpack.c.l.b16 %v176
    %v1726 = vunpack.c.l.b16 %v177
    %v1727 = vunpack.c.l.b16 %v178
    %v1728 = vunpack.c.l.b16 %v179
    %v1729 = vunpack.c.l.b16 %v180
    %v1730 = vunpack.c.l.b16 %v181
    %v1731 = vunpack.c.l.b16 %v182
    %v1732 = vunpack.c.l.b16 %v183
    %v1733 = vunpack.c.l.b16 %v184
    %v1734 = vunpack.c.l.b16 %v185
    %v1735 = vunpack.c.l.b16 %v186
    %v1736 = vunpack.c.l.b16 %v187
    %v1737 = vunpack.c.l.b16 %v188
    %v1738 = vunpack.c.l.b16 %v189
    %v1739 = vunpack.c.l.b16 %v190
    %v1740 = vunpack.c.l.b16 %v191
    %v1741 = vunpack.c.l.b16 %v192
    %v1742 = vunpack.c.l.b16 %v193
    %v1743 = vunpack.c.l.b16 %v194
    %v1744 = vunpack.c.l.b16 %v195
    %v1745 = vunpack.c.l.b16 %v196
    %v1746 = vunpack.c.l.b16 %v197
    %v1747 = vunpack.c.l.b16 %v198
    %v1748 = vunpack.c.l.b16 %v199
    %v1749 = vunpack.c.l.b16 %v200
    %v1750 = vunpack.c.l.b16 %v201
    %v1751 = vunpack.c.l.b16 %v202
    %v1752 = vunpack.c.l.b16 %v203
    %v1753 = vunpack.c.l.b16 %v204
    %v1754 = vunpack.c.l.b16 %v205
    %v1755 = vunpack.c.l.b16 %v206
    %v1756 = vunpack.c.l.b16 %v207
    %v1757 = vunpack.c.l.b16 %v208
    %v1758 = vunpack.c.l.b16 %v209
    %v1759 = vunpack.c.l.b16 %v210
    %v1760 = vunpack.c.l.b16 %v211
    %v1761 = vunpack.c.l.b16 %v212
    %v1762 = vunpack.c.l.b16 %v213
    %v1763 = vunpack.c.l.b16 %v214
    %v1764 = vunpack.c.l.b16 %v215
    %v1765 = vunpack.c.l.b16 %v216
    %v1766 = vunpack.c.l.b16 %v217
    %v1767 = vunpack.c.l.b16 %v218
    %v1768 = vunpack.c.l.b16 %v219
    %v1769 = vunpack.c.l.b16 %v220
    %v1770 = vunpack.c.l.b16 %v221
    %v1771 = vunpack.c.l.b16 %v222
    %v1772 = vunpack.c.l.b16 %v223
    %v1773 = vunpack.c.l.b16 %v224
    %v1774 = vunpack.c.l.b16 %v225
    %v1775 = vunpack.c.l.b16 %v226
    %v1776 = vunpack.c.l.b16 %v227
    %v1777 = vunpack.c.l.b16 %v228
    %v1778 = vunpack.c.l.b16 %v229
    %v1779 = vunpack.c.l.b16 %v230
    %v1780 = vunpack.c.l.b16 %v231
    %v1781 = vunpack.c.l.b16 %v232
    %v1782 = vunpack.c.l.b16 %v233
    %v1783 = vunpack.c.l.b16 %v234
    %v1784 = vunpack.c.l.b16 %v235
    %v1785 = vunpack.c.l.b16 %v236
    %v1786 = vunpack.c.l.b16 %v237
    %v1787 = vunpack.c.l.b16 %v238
    %v1788 = vunpack.c.l.b16 %v239
    %v1789 = vunpack.c.l.b16 %v240
    %v1790 = vunpack.c.l.b16 %v241
    %v1791 = vunpack.c.l.b16 %v242
    %v1792 = vunpack.c.l.b16 %v243
    %v1793 = vunpack.c.l.b16 %v244
    %v1794 = vunpack.c.l.b16 %v245
    %v1795 = vunpack.c.l.b16 %v246
    %v1796 = vunpack.c.l.b16 %v247
    %v1797 = vunpack.c.l.b16 %v248
    %v1798 = vunpack.c.l.b16 %v249
    %v1799 = vunpack.c.l.b16 %v250
    %v1800 = vunpack.c.l.b16 %v251
    %v1801 = vunpack.c.l.b16 %v252
    %v1802 = vunpack.c.l.b16 %v253
    %v1803 = vunpack.c.l.b16 %v254
    %v1804 = vunpack.c.l.b16 %v255
    %v1805 = vunpack.c.l.b16 %v256
    %v1806 = vunpack.c.l.b16 %v257
    %v1807 = vunpack.c.l.b16 %v258
    %v1808 = vunpack.c.l.b16 %v259
    %v1809 = vunpack.c.l.b16 %v260
    %v1810 = vunpack.c.l.b16 %v261
    %v1811 = vunpack.c.l.b16 %v262
    %v1812 = vunpack.c.l.b16 %v263
    %v1813 = vunpack.c.l.b16 %v264
    %v1814 = vunpack.c.l.b16 %v265
    %v1815 = vunpack.c.l.b16 %v266
    %v1816 = vunpack.c.l.b16 %v267
    %v1817 = vunpack.c.l.b16 %v268
    %v1818 = vunpack.c.l.b16 %v269
    %v1819 = vunpack.c.l.b16 %v270
    %v1820 = vunpack.c.l.b16 %v271
    %v1821 = vunpack.c.l.b16 %v272
    %v1822 = vunpack.c.l.b16 %v273
    %v1823 = vunpack.c.l.b16 %v274
    %v1824 = vunpack.c.l.b16 %v275
    %v1825 = vunpack.c.l.b16 %v276
    %v1826 = vunpack.c.l.b16 %v277
    %v1827 = vunpack.c.l.b16 %v278
    %v1828 = vunpack.c.l.b16 %v279
    %v1829 = vunpack.c.l.b16 %v280
    %v1830 = vunpack.c.l.b16 %v281
    %v1831 = vunpack.c.l.b16 %v282
    %v1832 = vunpack.c.l.b16 %v283
    %v1833 = vunpack.c.l.b16 %v284
    %v1834 = vunpack.c.l.b16 %v285
    %v1835 = vunpack.c.l.b16 %v286
    %v1836 = vunpack.c.l.b16 %v287
    %v1837 = vunpack.c.l.b16 %v288
    %v1838 = vunpack.c.l.b16 %v289
    %v1839 = vunpack.c.l.b16 %v290
    %v1840 = vunpack.c.l.b16 %v291
    %v1841 = vunpack.c.l.b16 %v292
    %v1842 = vunpack.c.l.b16 %v293
    %v1843 = vunpack.c.l.b16 %v294
    %v1844 = vunpack.c.l.b16 %v295
    %v1845 = vunpack.c.l.b16 %v296
    %v1846 = vunpack.c.l.b16 %v297
    %v1847 = vunpack.c.l.b16 %v298
    %v1848 = vunpack.c.l.b16 %v299
    %v1849 = vunpack.c.l.b16 %v300
    %v1850 = vunpack.c.l.b16 %v301
    %v1851 = vunpack.c.l.b16 %v302
    %v1852 = vunpack.c.l.b16 %v303
    %v1853 = vunpack.c.l.b16 %v304
    %v1854 = vunpack.c.l.b16 %v305
    %v1855 = vunpack.c.l.b16 %v306
    %v1856 = vunpack.c.l.b16 %v307
    %v1857 = vunpack.c.l.b16 %v308
    %v1858 = vunpack.c.l.b16 %v309
    %v1859 = vunpack.c.l.b16 %v310
    %v1860 = vunpack.c.l.b16 %v311
    %v1861 = vunpack.c.l.b16 %v312
    %v1862 = vunpack.c.l.b16 %v313
    %v1863 = vunpack.c.l.b16 %v314
    %v1864 = vunpack.c.l.b16 %v315
    %v1865 = vunpack.c.l.b16 %v316
    %v1866 = vunpack.c.l.b16 %v317
    %v1867 = vunpack.c.l.b16 %v318
    %v1868 = vunpack.c.l.b16 %v319
    %v1869 = vunpack.c.l.b16 %v320
    %v1870 = vunpack.c.l.b16 %v321
    %v1871 = vunpack.c.l.b16 %v322
    %v1872 = vunpack.c.l.b16 %v323
    %v1873 = vunpack.c.l.b16 %v324
    %v1874 = vunpack.c.l.b16 %v325
    %v1875 = vunpack.c.l.b16 %v326
    %v1876 = vunpack.c.l.b16 %v327
    %v1877 = vunpack.c.l.b16 %v328
    %v1878 = vunpack.c.l.b16 %v329
    %v1879 = vunpack.c.l.b16 %v330
    %v1880 = vunpack.c.l.b16 %v331
    %v1881 = vunpack.c.l.b16 %v332
    %v1882 = vunpack.c.l.b16 %v333
    %v1883 = vunpack.c.l.b16 %v334
    %v1884 = vunpack.c.l.b16 %v335
    %v1885 = vunpack.c.l.b16 %v336
    %v1886 = vunpack.c.l.b16 %v337
    %v1887 = vunpack.c.l.b16 %v338
    %v1888 = vunpack.c.l.b16 %v339
    %v1889 = vunpack.c.l.b16 %v340
    %v1890 = vunpack.c.l.b16 %v341
    %v1891 = vunpack.c.l.b16 %v342
    %v1892 = vunpack.c.l.b16 %v343
    %v1893 = vunpack.c.l.b16 %v344
    %v1894 = vunpack.c.l.b16 %v345
    %v1895 = vunpack.c.l.b16 %v346
    %v1896 = vunpack.c.l.b16 %v347
    %v1897 = vunpack.c.l.b16 %v348
    %v1898 = vunpack.c.l.b16 %v349
    %v1899 = vunpack.c.l.b16 %v350
    %v1900 = vunpack.c.l.b16 %v351
    %v1901 = vunpack.c.l.b16 %v352
    %v1902 = vunpack.c.l.b16 %v353
    %v1903 = vpack.c.b16 %v1704, %v1703
    %v1904 = vpack.c.b16 %v1706, %v1705
    %v1905 = vpack.c.b16 %v1708, %v1707
    %v1906 = vpack.c.b16 %v1710, %v1709
    %v1907 = vpack.c.b16 %v1712, %v1711
    %v1908 = vpack.c.b16 %v1714, %v1713
    %v1909 = vpack.c.b16 %v1716, %v1715
    %v1910 = vpack.c.b16 %v1718, %v1717
    %v1911 = vpack.c.b16 %v1720, %v1719
    %v1912 = vpack.c.b16 %v1722, %v1721
    %v1913 = vpack.c.b16 %v1724, %v1723
    %v1914 = vpack.c.b16 %v1726, %v1725
    %v1915 = vpack.c.b16 %v1728, %v1727
    %v1916 = vpack.c.b16 %v1730, %v1729
    %v1917 = vpack.c.b16 %v1732, %v1731
    %v1918 = vpack.c.b16 %v1734, %v1733
    %v1919 = vpack.c.b16 %v1736, %v1735
    %v1920 = vpack.c.b16 %v1738, %v1737
    %v1921 = vpack.c.b16 %v1740, %v1739
    %v1922 = vpack.c.b16 %v1742, %v1741
    %v1923 = vpack.c.b16 %v1744, %v1743
    %v1924 = vpack.c.b16 %v1746, %v1745
    %v1925 = vpack.c.b16 %v1748, %v1747
    %v1926 = vpack.c.b16 %v1750, %v1749
    %v1927 = vpack.c.b16 %v1752, %v1751
    %v1928 = vpack.c.b16 %v1754, %v1753
    %v1929 = vpack.c.b16 %v1756, %v1755
    %v1930 = vpack.c.b16 %v1758, %v1757
    %v1931 = vpack.c.b16 %v1760, %v1759
    %v1932 = vpack.c.b16 %v1762, %v1761
    %v1933 = vpack.c.b16 %v1764, %v1763
    %v1934 = vpack.c.b16 %v1766, %v1765
    %v1935 = vpack.c.b16 %v1768, %v1767
    %v1936 = vpack.c.b16 %v1770, %v1769
    %v1937 = vpack.c.b16 %v1772, %v1771
    %v1938 = vpack.c.b16 %v1774, %v1773
    %v1939 = vpack.c.b16 %v1776, %v1775
    %v1940 = vpack.c.b16 %v1778, %v1777
    %v1941 = vpack.c.b16 %v1780, %v1779
    %v1942 = vpack.c.b16 %v1782, %v1781
    %v1943 = vpack.c.b16 %v1784, %v1783
    %v1944 = vpack.c.b16 %v1786, %v1785
    %v1945 = vpack.c.b16 %v1788, %v1787
    %v1946 = vpack.c.b16 %v1790, %v1789
    %v1947 = vpack.c.b16 %v1792, %v1791
    %v1948 = vpack.c.b16 %v1794, %v1793
    %v1949 = vpack.c.b16 %v1796, %v1795
    %v1950 = vpack.c.b16 %v1798, %v1797
    %v1951 = vpack.c.b16 %v1800, %v1799
    %v1952 = vpack.c.b16 %v1802, %v1801
    %v1953 = vpack.c.b16 %v1804, %v1803
    %v1954 = vpack.c.b16 %v1806, %v1805
    %v1955 = vpack.c.b16 %v1808, %v1807
    %v1956 = vpack.c.b16 %v1810, %v1809
    %v1957 = vpack.c.b16 %v1812, %v1811
    %v1958 = vpack.c.b16 %v1814, %v1813
    %v1959 = vpack.c.b16 %v1816, %v1815
    %v1960 = vpack.c.b16 %v1818, %v1817
    %v1961 = vpack.c.b16 %v1820, %v1819
    %v1962 = vpack.c.b16 %v1822, %v1821
    %v1963 = vpack.c.b16 %v1824, %v1823
    %v1964 = vpack.c.b16 %v1826, %v1825
    %v1965 = vpack.c.b16 %v1828, %v1827
    %v1966 = vpack.c.b16 %v1830, %v1829
    %v1967 = vpack.c.b16 %v1832, %v1831
    %v1968 = vpack.c.b16 %v1834, %v1833
    %v1969 = vpack.c.b16 %v1836, %v1835
    %v1970 = vpack.c.b16 %v1838, %v1837
    %v1971 = vpack.c.b16 %v1840, %v1839
    %v1972 = vpack.c.b16 %v1842, %v1841
    %v1973 = vpack.c.b16 %v1844, %v1843
    %v1974 = vpack.c.b16 %v1846, %v1845
    %v1975 = vpack.c.b16 %v1848, %v1847
    %v1976 = vpack.c.b16 %v1850, %v1849
    %v1977 = vpack.c.b16 %v1852, %v1851
    %v1978 = vpack.c.b16 %v1854, %v1853
    %v1979 = vpack.c.b16 %v1856, %v1855
    %v1980 = vpack.c.b16 %v1858, %v1857
    %v1981 = vpack.c.b16 %v1860, %v1859
    %v1982 = vpack.c.b16 %v1862, %v1861
    %v1983 = vpack.c.b16 %v1864, %v1863
    %v1984 = vpack.c.b16 %v1866, %v1865
    %v1985 = vpack.c.b16 %v1868, %v1867
    %v1986 = vpack.c.b16 %v1870, %v1869
    %v1987 = vpack.c.b16 %v1872, %v1871
    %v1988 = vpack.c.b16 %v1874, %v1873
    %v1989 = vpack.c.b16 %v1876, %v1875
    %v1990 = vpack.c.b16 %v1878, %v1877
    %v1991 = vpack.c.b16 %v1880, %v1879
    %v1992 = vpack.c.b16 %v1882, %v1881
    %v1993 = vpack.c.b16 %v1884, %v1883
    %v1994 = vpack.c.b16 %v1886, %v1885
    %v1995 = vpack.c.b16 %v1888, %v1887
    %v1996 = vpack.c.b16 %v1890, %v1889
    %v1997 = vpack.c.b16 %v1892, %v1891
    %v1998 = vpack.c.b16 %v1894, %v1893
    %v1999 = vpack.c.b16 %v1896, %v1895
    %v2000 = vpack.c.b16 %v1898, %v1897
    %v2001 = vpack.c.b16 %v1900, %v1899
    %v2002 = vpack.c.b16 %v1902, %v1901
    %vm2103 = vcmask 523264
    %v2105 = vsel %vm2103, %v1502, 0
    %2107 = vmatprep.subr.bf16.mxu0 0
    %2108 = vmatpush1.bf16.msra.mxu0 %v1903
    %2109 = vmatprep.subr.bf16.mxu0 0
    %2110 = vmatpush1.bf16.msra.mxu0 %v1904
    %2111 = vmatprep.subr.bf16.mxu0 0
    %2112 = vmatpush1.bf16.msra.mxu0 %v1905
    %2113 = vmatprep.subr.bf16.mxu0 0
    %2114 = vmatpush1.bf16.msra.mxu0 %v1906
    %2115 = vmatprep.subr.bf16.mxu0 0
    %2116 = vmatpush1.bf16.msra.mxu0 %v1907
    %2117 = vmatprep.subr.bf16.mxu0 0
    %2118 = vmatpush1.bf16.msra.mxu0 %v1908
    %2119 = vmatprep.subr.bf16.mxu0 0
    %2120 = vmatpush1.bf16.msra.mxu0 %v1909
    %2121 = vmatprep.subr.bf16.mxu0 0
    %2122 = vmatpush1.bf16.msra.mxu0 %v1910
    %2123 = vmatprep.subr.bf16.mxu0 0
    %2124 = vmatpush1.bf16.msra.mxu0 %v1911
    %2125 = vmatprep.subr.bf16.mxu0 0
    %2126 = vmatpush1.bf16.msra.mxu0 %v1912
    %2127 = vmatprep.subr.bf16.mxu0 0
    %2128 = vmatpush1.bf16.msra.mxu0 %v1913
    %2129 = vmatprep.subr.bf16.mxu0 0
    %2130 = vmatpush1.bf16.msra.mxu0 %v1914
    %2131 = vmatprep.subr.bf16.mxu0 0
    %2132 = vmatpush1.bf16.msra.mxu0 %v1915
    %2133 = vmatprep.subr.bf16.mxu0 0
    %2134 = vmatpush1.bf16.msra.mxu0 %v1916
    %2135 = vmatprep.subr.bf16.mxu0 0
    %2136 = vmatpush1.bf16.msra.mxu0 %v1917
    %2137 = vmatprep.subr.bf16.mxu0 0
    %2138 = vmatpush1.bf16.msra.mxu0 %v1918
    %2139 = vmatprep.mubr.bf16.mxu0 %v1491
    %2140 = vmatmul.mubr.bf16.gmra.mrb[0].mxu0 %v1490
    %v2141 = vpop.f32.mrb[0].mxu0
    %v2142 = vadd.f32 0.0, %v2141
    %v2143 = vpop.f32.mrb[0].mxu0
    %v2144 = vpop.f32.mrb[0].mxu0
    %v2145 = vadd.f32 0.0, %v2144
    %v2146 = vpop.f32.mrb[0].mxu0
    %2147 = vdwg.mxu0
    %2148 = vmatprep.subr.bf16.mxu0 0
    %2149 = vmatpush1.bf16.msra.mxu0 %v1919
    %2150 = vmatprep.subr.bf16.mxu0 0
    %2151 = vmatpush1.bf16.msra.mxu0 %v1920
    %2152 = vmatprep.subr.bf16.mxu0 0
    %2153 = vmatpush1.bf16.msra.mxu0 %v1921
    %2154 = vmatprep.subr.bf16.mxu0 0
    %2155 = vmatpush1.bf16.msra.mxu0 %v1922
    %2156 = vmatprep.subr.bf16.mxu0 0
    %2157 = vmatpush1.bf16.msra.mxu0 %v1923
    %2158 = vmatprep.subr.bf16.mxu0 0
    %2159 = vmatpush1.bf16.msra.mxu0 %v1924
    %2160 = vmatprep.subr.bf16.mxu0 0
    %2161 = vmatpush1.bf16.msra.mxu0 %v1925
    %2162 = vmatprep.subr.bf16.mxu0 0
    %2163 = vmatpush1.bf16.msra.mxu0 %v1926
    %2164 = vmatprep.subr.bf16.mxu0 0
    %2165 = vmatpush1.bf16.msra.mxu0 %v1927
    %2166 = vmatprep.subr.bf16.mxu0 0
    %2167 = vmatpush1.bf16.msra.mxu0 %v1928
    %2168 = vmatprep.subr.bf16.mxu0 0
    %2169 = vmatpush1.bf16.msra.mxu0 %v1929
    %2170 = vmatprep.subr.bf16.mxu0 0
    %2171 = vmatpush1.bf16.msra.mxu0 %v1930
    %2172 = vmatprep.subr.bf16.mxu0 0
    %2173 = vmatpush1.bf16.msra.mxu0 %v1931
    %2174 = vmatprep.subr.bf16.mxu0 0
    %2175 = vmatpush1.bf16.msra.mxu0 %v1932
    %2176 = vmatprep.subr.bf16.mxu0 0
    %2177 = vmatpush1.bf16.msra.mxu0 %v1933
    %2178 = vmatprep.subr.bf16.mxu0 0
    %2179 = vmatpush1.bf16.msra.mxu0 %v1934
    %2180 = vmatprep.mubr.bf16.mxu0 %v1493
    %2181 = vmatmul.mubr.bf16.gmra.mrb[0].mxu0 %v1492
    %v2182 = vpop.f32.mrb[0].mxu0
    %v2183 = vadd.f32 %v2142, %v2182
    %v2184 = vpop.f32.mrb[0].mxu0
    %v2185 = vpop.f32.mrb[0].mxu0
    %v2186 = vadd.f32 %v2145, %v2185
    %v2187 = vpop.f32.mrb[0].mxu0
    %2188 = vdwg.mxu0
    %2189 = vmatprep.subr.bf16.mxu0 0
    %2190 = vmatpush1.bf16.msra.mxu0 %v1935
    %2191 = vmatprep.subr.bf16.mxu0 0
    %2192 = vmatpush1.bf16.msra.mxu0 %v1936
    %2193 = vmatprep.subr.bf16.mxu0 0
    %2194 = vmatpush1.bf16.msra.mxu0 %v1937
    %2195 = vmatprep.subr.bf16.mxu0 0
    %2196 = vmatpush1.bf16.msra.mxu0 %v1938
    %2197 = vmatprep.subr.bf16.mxu0 0
    %2198 = vmatpush1.bf16.msra.mxu0 %v1939
    %2199 = vmatprep.subr.bf16.mxu0 0
    %2200 = vmatpush1.bf16.msra.mxu0 %v1940
    %2201 = vmatprep.subr.bf16.mxu0 0
    %2202 = vmatpush1.bf16.msra.mxu0 %v1941
    %2203 = vmatprep.subr.bf16.mxu0 0
    %2204 = vmatpush1.bf16.msra.mxu0 %v1942
    %2205 = vmatprep.subr.bf16.mxu0 0
    %2206 = vmatpush1.bf16.msra.mxu0 %v1943
    %2207 = vmatprep.subr.bf16.mxu0 0
    %2208 = vmatpush1.bf16.msra.mxu0 %v1944
    %2209 = vmatprep.subr.bf16.mxu0 0
    %2210 = vmatpush1.bf16.msra.mxu0 %v1945
    %2211 = vmatprep.subr.bf16.mxu0 0
    %2212 = vmatpush1.bf16.msra.mxu0 %v1946
    %2213 = vmatprep.subr.bf16.mxu0 0
    %2214 = vmatpush1.bf16.msra.mxu0 %v1947
    %2215 = vmatprep.subr.bf16.mxu0 0
    %2216 = vmatpush1.bf16.msra.mxu0 %v1948
    %2217 = vmatprep.subr.bf16.mxu0 0
    %2218 = vmatpush1.bf16.msra.mxu0 %v1949
    %2219 = vmatprep.subr.bf16.mxu0 0
    %2220 = vmatpush1.bf16.msra.mxu0 %v1950
    %2221 = vmatprep.mubr.bf16.mxu0 %v1495
    %2222 = vmatmul.mubr.bf16.gmra.mrb[0].mxu0 %v1494
    %v2223 = vpop.f32.mrb[0].mxu0
    %v2224 = vadd.f32 %v2183, %v2223
    %v2225 = vpop.f32.mrb[0].mxu0
    %v2226 = vpop.f32.mrb[0].mxu0
    %v2227 = vadd.f32 %v2186, %v2226
    %v2228 = vpop.f32.mrb[0].mxu0
    %2229 = vdwg.mxu0
    %2230 = vmatprep.subr.bf16.mxu0 0
    %2231 = vmatpush1.bf16.msra.mxu0 %v1951
    %2232 = vmatprep.subr.bf16.mxu0 0
    %2233 = vmatpush1.bf16.msra.mxu0 %v1952
    %2234 = vmatprep.subr.bf16.mxu0 0
    %2235 = vmatpush1.bf16.msra.mxu0 %v1953
    %2236 = vmatprep.subr.bf16.mxu0 0
    %2237 = vmatpush1.bf16.msra.mxu0 %v1954
    %2238 = vmatprep.subr.bf16.mxu0 0
    %2239 = vmatpush1.bf16.msra.mxu0 %v1955
    %2240 = vmatprep.subr.bf16.mxu0 0
    %2241 = vmatpush1.bf16.msra.mxu0 %v1956
    %2242 = vmatprep.subr.bf16.mxu0 0
    %2243 = vmatpush1.bf16.msra.mxu0 %v1957
    %2244 = vmatprep.subr.bf16.mxu0 0
    %2245 = vmatpush1.bf16.msra.mxu0 %v1958
    %2246 = vmatprep.subr.bf16.mxu0 0
    %2247 = vmatpush1.bf16.msra.mxu0 %v1959
    %2248 = vmatprep.subr.bf16.mxu0 0
    %2249 = vmatpush1.bf16.msra.mxu0 %v1960
    %2250 = vmatprep.subr.bf16.mxu0 0
    %2251 = vmatpush1.bf16.msra.mxu0 %v1961
    %2252 = vmatprep.subr.bf16.mxu0 0
    %2253 = vmatpush1.bf16.msra.mxu0 %v1962
    %2254 = vmatprep.subr.bf16.mxu0 0
    %2255 = vmatpush1.bf16.msra.mxu0 %v1963
    %2256 = vmatprep.subr.bf16.mxu0 0
    %2257 = vmatpush1.bf16.msra.mxu0 %v1964
    %2258 = vmatprep.subr.bf16.mxu0 0
    %2259 = vmatpush1.bf16.msra.mxu0 %v1965
    %2260 = vmatprep.subr.bf16.mxu0 0
    %2261 = vmatpush1.bf16.msra.mxu0 %v1966
    %2262 = vmatprep.mubr.bf16.mxu0 %v1497
    %2263 = vmatmul.mubr.bf16.gmra.mrb[0].mxu0 %v1496
    %v2264 = vpop.f32.mrb[0].mxu0
    %v2265 = vadd.f32 %v2224, %v2264
    %v2266 = vpop.f32.mrb[0].mxu0
    %v2267 = vpop.f32.mrb[0].mxu0
    %v2268 = vadd.f32 %v2227, %v2267
    %v2269 = vpop.f32.mrb[0].mxu0
    %2270 = vdwg.mxu0
    %2271 = vmatprep.subr.bf16.mxu0 0
    %2272 = vmatpush1.bf16.msra.mxu0 %v1967
    %2273 = vmatprep.subr.bf16.mxu0 0
    %2274 = vmatpush1.bf16.msra.mxu0 %v1968
    %2275 = vmatprep.subr.bf16.mxu0 0
    %2276 = vmatpush1.bf16.msra.mxu0 %v1969
    %2277 = vmatprep.subr.bf16.mxu0 0
    %2278 = vmatpush1.bf16.msra.mxu0 %v1970
    %2279 = vmatprep.subr.bf16.mxu0 0
    %2280 = vmatpush1.bf16.msra.mxu0 %v1971
    %2281 = vmatprep.subr.bf16.mxu0 0
    %2282 = vmatpush1.bf16.msra.mxu0 %v1972
    %2283 = vmatprep.subr.bf16.mxu0 0
    %2284 = vmatpush1.bf16.msra.mxu0 %v1973
    %2285 = vmatprep.subr.bf16.mxu0 0
    %2286 = vmatpush1.bf16.msra.mxu0 %v1974
    %2287 = vmatprep.subr.bf16.mxu0 0
    %2288 = vmatpush1.bf16.msra.mxu0 %v1975
    %2289 = vmatprep.subr.bf16.mxu0 0
    %2290 = vmatpush1.bf16.msra.mxu0 %v1976
    %2291 = vmatprep.subr.bf16.mxu0 0
    %2292 = vmatpush1.bf16.msra.mxu0 %v1977
    %2293 = vmatprep.subr.bf16.mxu0 0
    %2294 = vmatpush1.bf16.msra.mxu0 %v1978
    %2295 = vmatprep.subr.bf16.mxu0 0
    %2296 = vmatpush1.bf16.msra.mxu0 %v1979
    %2297 = vmatprep.subr.bf16.mxu0 0
    %2298 = vmatpush1.bf16.msra.mxu0 %v1980
    %2299 = vmatprep.subr.bf16.mxu0 0
    %2300 = vmatpush1.bf16.msra.mxu0 %v1981
    %2301 = vmatprep.subr.bf16.mxu0 0
    %2302 = vmatpush1.bf16.msra.mxu0 %v1982
    %2303 = vmatprep.mubr.bf16.mxu0 %v1499
    %2304 = vmatmul.mubr.bf16.gmra.mrb[0].mxu0 %v1498
    %v2305 = vpop.f32.mrb[0].mxu0
    %v2306 = vadd.f32 %v2265, %v2305
    %v2307 = vpop.f32.mrb[0].mxu0
    %v2308 = vpop.f32.mrb[0].mxu0
    %v2309 = vadd.f32 %v2268, %v2308
    %v2310 = vpop.f32.mrb[0].mxu0
    %2311 = vdwg.mxu0
    %2312 = vmatprep.subr.bf16.mxu0 0
    %2313 = vmatpush1.bf16.msra.mxu0 %v1983
    %2314 = vmatprep.subr.bf16.mxu0 0
    %2315 = vmatpush1.bf16.msra.mxu0 %v1984
    %2316 = vmatprep.subr.bf16.mxu0 0
    %2317 = vmatpush1.bf16.msra.mxu0 %v1985
    %2318 = vmatprep.subr.bf16.mxu0 0
    %2319 = vmatpush1.bf16.msra.mxu0 %v1986
    %2320 = vmatprep.subr.bf16.mxu0 0
    %2321 = vmatpush1.bf16.msra.mxu0 %v1987
    %2322 = vmatprep.subr.bf16.mxu0 0
    %2323 = vmatpush1.bf16.msra.mxu0 %v1988
    %2324 = vmatprep.subr.bf16.mxu0 0
    %2325 = vmatpush1.bf16.msra.mxu0 %v1989
    %2326 = vmatprep.subr.bf16.mxu0 0
    %2327 = vmatpush1.bf16.msra.mxu0 %v1990
    %2328 = vmatprep.subr.bf16.mxu0 0
    %2329 = vmatpush1.bf16.msra.mxu0 %v1991
    %2330 = vmatprep.subr.bf16.mxu0 0
    %2331 = vmatpush1.bf16.msra.mxu0 %v1992
    %2332 = vmatprep.subr.bf16.mxu0 0
    %2333 = vmatpush1.bf16.msra.mxu0 %v1993
    %2334 = vmatprep.subr.bf16.mxu0 0
    %2335 = vmatpush1.bf16.msra.mxu0 %v1994
    %2336 = vmatprep.subr.bf16.mxu0 0
    %2337 = vmatpush1.bf16.msra.mxu0 %v1995
    %2338 = vmatprep.subr.bf16.mxu0 0
    %2339 = vmatpush1.bf16.msra.mxu0 %v1996
    %2340 = vmatprep.subr.bf16.mxu0 0
    %2341 = vmatpush1.bf16.msra.mxu0 %v1997
    %2342 = vmatprep.subr.bf16.mxu0 0
    %2343 = vmatpush1.bf16.msra.mxu0 %v1998
    %2344 = vmatprep.mubr.bf16.mxu0 %v1501
    %2345 = vmatmul.mubr.bf16.gmra.mrb[0].mxu0 %v1500
    %v2346 = vpop.f32.mrb[0].mxu0
    %v2347 = vadd.f32 %v2306, %v2346
    %v2348 = vpop.f32.mrb[0].mxu0
    %v2349 = vpop.f32.mrb[0].mxu0
    %v2350 = vadd.f32 %v2309, %v2349
    %v2351 = vpop.f32.mrb[0].mxu0
    %2352 = vdwg.mxu0
    %2353 = vmatprep.subr.bf16.mxu0 0
    %2354 = vmatpush1.bf16.msra.mxu0 %v1999
    %2355 = vmatprep.subr.bf16.mxu0 0
    %2356 = vmatpush1.bf16.msra.mxu0 %v2000
    %2357 = vmatprep.subr.bf16.mxu0 0
    %2358 = vmatpush1.bf16.msra.mxu0 %v2001
    %2359 = vmatprep.subr.bf16.mxu0 0
    %2360 = vmatpush1.bf16.msra.mxu0 %v2002
    %2361 = vmatprep.subr.bf16.mxu0 0
    %2362 = vmatpush1.bf16.msra.mxu0 0
    %2363 = vmatprep.subr.bf16.mxu0 0
    %2364 = vmatpush1.bf16.msra.mxu0 0
    %2365 = vmatprep.subr.bf16.mxu0 0
    %2366 = vmatpush1.bf16.msra.mxu0 0
    %2367 = vmatprep.subr.bf16.mxu0 0
    %2368 = vmatpush1.bf16.msra.mxu0 0
    %2369 = vmatprep.subr.bf16.mxu0 0
    %2370 = vmatpush1.bf16.msra.mxu0 0
    %2371 = vmatprep.subr.bf16.mxu0 0
    %2372 = vmatpush1.bf16.msra.mxu0 0
    %2373 = vmatprep.subr.bf16.mxu0 0
    %2374 = vmatpush1.bf16.msra.mxu0 0
    %2375 = vmatprep.subr.bf16.mxu0 0
    %2376 = vmatpush1.bf16.msra.mxu0 0
    %2377 = vmatprep.subr.bf16.mxu0 0
    %2378 = vmatpush1.bf16.msra.mxu0 0
    %2379 = vmatprep.subr.bf16.mxu0 0
    %2380 = vmatpush1.bf16.msra.mxu0 0
    %2381 = vmatprep.subr.bf16.mxu0 0
    %2382 = vmatpush1.bf16.msra.mxu0 0
    %2383 = vmatprep.subr.bf16.mxu0 0
    %2384 = vmatpush1.bf16.msra.mxu0 0
    %2385 = vmatprep.mubr.bf16.mxu0 0
    %2386 = vmatmul.mubr.bf16.gmra.mrb[0].mxu0 %v2105
    %v2387 = vpop.f32.mrb[0].mxu0
    %v2388 = vadd.f32 %v2347, %v2387
    %v2389 = vpop.f32.mrb[0].mxu0
    %v2390 = vpop.f32.mrb[0].mxu0
    %v2391 = vadd.f32 %v2350, %v2390
    %v2392 = vpop.f32.mrb[0].mxu0
    %2393 = vdwg.mxu0
    %v2394 = vmul.f32 %v2388, 0.1
    %v2395 = vmul.f32 %v2391, 0.1
    %v2396 = vadd.f32 %v2394, %v411
    %v2397 = vadd.f32 %v2395, %v414
    %v2399 = vsel %vm618, %v2396, 0
    %v2402 = vsel %vm618, %v2397, 0
    %2404 = vmatprep.subr.mxu0 0.0
    %2405 = vmatpush1.msra.mxu0 %v354
    %2406 = vmatprep.subr.mxu0 0.0
    %2407 = vmatpush1.msra.mxu0 %v355
    %2408 = vmatprep.subr.mxu0 0.0
    %2409 = vmatpush1.msra.mxu0 %v356
    %2410 = vmatprep.subr.mxu0 0.0
    %2411 = vmatpush1.msra.mxu0 %v357
    %2412 = vmatprep.subr.mxu0 0.0
    %2413 = vmatpush1.msra.mxu0 %v358
    %2414 = vmatprep.subr.mxu0 0.0
    %2415 = vmatpush1.msra.mxu0 0.0
    %2416 = vmatprep.subr.mxu0 0.0
    %2417 = vmatpush1.msra.mxu0 0.0
    %2418 = vmatprep.subr.mxu0 0.0
    %2419 = vmatpush1.msra.mxu0 0.0
    %2420 = vmatprep.subr.mxu0 0.0
    %2421 = vmatpush1.msra.mxu0 0.0
    %2422 = vmatprep.subr.mxu0 0.0
    %2423 = vmatpush1.msra.mxu0 0.0
    %2424 = vmatprep.subr.mxu0 0.0
    %2425 = vmatpush1.msra.mxu0 0.0
    %2426 = vmatprep.subr.mxu0 0.0
    %2427 = vmatpush1.msra.mxu0 0.0
    %2428 = vmatprep.subr.mxu0 0.0
    %2429 = vmatpush1.msra.mxu0 0.0
    %2430 = vmatprep.subr.mxu0 0.0
    %2431 = vmatpush1.msra.mxu0 0.0
    %2432 = vmatprep.subr.mxu0 0.0
    %2433 = vmatpush1.msra.mxu0 0.0
    %2434 = vmatprep.subr.mxu0 0.0
    %2435 = vmatpush1.msra.mxu0 0.0
    %2436 = vmatprep.subr.mxu0 0.0
    %2437 = vmatpush1.msra.mxu0 0.0
    %2438 = vmatprep.subr.mxu0 0.0
    %2439 = vmatpush1.msra.mxu0 0.0
    %2440 = vmatprep.subr.mxu0 0.0
    %2441 = vmatpush1.msra.mxu0 0.0
    %2442 = vmatprep.subr.mxu0 0.0
    %2443 = vmatpush1.msra.mxu0 0.0
    %2444 = vmatprep.subr.mxu0 0.0
    %2445 = vmatpush1.msra.mxu0 0.0
    %2446 = vmatprep.subr.mxu0 0.0
    %2447 = vmatpush1.msra.mxu0 0.0
    %2448 = vmatprep.subr.mxu0 0.0
    %2449 = vmatpush1.msra.mxu0 0.0
    %2450 = vmatprep.subr.mxu0 0.0
    %2451 = vmatpush1.msra.mxu0 0.0
    %2452 = vmatprep.subr.mxu0 0.0
    %2453 = vmatpush1.msra.mxu0 0.0
    %2454 = vmatprep.subr.mxu0 0.0
    %2455 = vmatpush1.msra.mxu0 0.0
    %2456 = vmatprep.subr.mxu0 0.0
    %2457 = vmatpush1.msra.mxu0 0.0
    %2458 = vmatprep.subr.mxu0 0.0
    %2459 = vmatpush1.msra.mxu0 0.0
    %2460 = vmatprep.subr.mxu0 0.0
    %2461 = vmatpush1.msra.mxu0 0.0
    %2462 = vmatprep.subr.mxu0 0.0
    %2463 = vmatpush1.msra.mxu0 0.0
    %2464 = vmatprep.subr.mxu0 0.0
    %2465 = vmatpush1.msra.mxu0 0.0
    %2466 = vmatprep.subr.mxu0 0.0
    %2467 = vmatpush1.msra.mxu0 0.0
    %2468 = vmatprep.mubr.f32.mxu0 0.0
    %2469 = vmatmul.mubr.f32.gmra.mrb[0].mxu0 %v2399
    %v2470 = vpop.f32.mrb[0].mxu0
    %v2471 = vadd.f32 0.0, %v2470
    %v2472 = vpop.f32.mrb[0].mxu0
    %2473 = vmatprep.mubr.f32.mxu0 0.0
    %2474 = vmatmul.mubr.f32.gmra.mrb[0].mxu0 %v2402
    %v2475 = vpop.f32.mrb[0].mxu0
    %v2476 = vadd.f32 0.0, %v2475
    %v2477 = vpop.f32.mrb[0].mxu0
    %2478 = vdwg.mxu0
    %v2479 = vxor.u32 %v2471, 2147483648
    %v2480 = vxor.u32 %v2476, 2147483648
    %v2481 = vmul.f32 %v2479, 1.442695
    %v2482 = vpow.pop %v2481
    %v2483 = vmul.f32 %v2480, 1.442695
    %v2484 = vpow.pop %v2483
    %v2485 = vadd.f32 %v2482, 1.0
    %v2486 = vadd.f32 %v2484, 1.0
    %v2487 = vrcp.pop %v2485
    %v2488 = vmul.f32 1.0, %v2487
    %v2489 = vrcp.pop %v2486
    %v2490 = vmul.f32 1.0, %v2489
    %v2491 = vmul.f32 %v2488, %v2396
    %v2492 = vmul.f32 %v2490, %v2397
    %v2493 = vpack.c.bf16 %v2492, %v2491
    %v2494 = vld [vmem:[%s7] sm:$0xf]
    %v2495 = vld [vmem:[%s7 + $0x4] sm:$0xf]
    %v2496 = vld [vmem:[%s7 + $0x8] sm:$0xf]
    %v2497 = vld [vmem:[%s7 + $0xc] sm:$0xf]
    %v2498 = vld [vmem:[%s2] sm:$0xff]
    %v2499 = vld [vmem:[%s2 + $0x8] sm:$0xff]
    %v2504 = vunpack.c.l.b16 %v2494
    %v2505 = vunpack.c.l.b16 %v2495
    %v2506 = vunpack.c.l.b16 %v2496
    %v2507 = vunpack.c.l.b16 %v2497
    %v2508 = vpack.c.b16 %v2505, %v2504
    %v2509 = vpack.c.b16 %v2507, %v2506
    %vm2512 = vcmask 261120
    %v2514 = vsel %vm2512, %v2493, 0
    %2516 = vmatprep.subr.bf16.mxu0 0
    %2517 = vmatpush1.bf16.msra.mxu0 %v2508
    %2518 = vmatprep.subr.bf16.mxu0 0
    %2519 = vmatpush1.bf16.msra.mxu0 %v2509
    %2520 = vmatprep.subr.bf16.mxu0 0
    %2521 = vmatpush1.bf16.msra.mxu0 0
    %2522 = vmatprep.subr.bf16.mxu0 0
    %2523 = vmatpush1.bf16.msra.mxu0 0
    %2524 = vmatprep.subr.bf16.mxu0 0
    %2525 = vmatpush1.bf16.msra.mxu0 0
    %2526 = vmatprep.subr.bf16.mxu0 0
    %2527 = vmatpush1.bf16.msra.mxu0 0
    %2528 = vmatprep.subr.bf16.mxu0 0
    %2529 = vmatpush1.bf16.msra.mxu0 0
    %2530 = vmatprep.subr.bf16.mxu0 0
    %2531 = vmatpush1.bf16.msra.mxu0 0
    %2532 = vmatprep.subr.bf16.mxu0 0
    %2533 = vmatpush1.bf16.msra.mxu0 0
    %2534 = vmatprep.subr.bf16.mxu0 0
    %2535 = vmatpush1.bf16.msra.mxu0 0
    %2536 = vmatprep.subr.bf16.mxu0 0
    %2537 = vmatpush1.bf16.msra.mxu0 0
    %2538 = vmatprep.subr.bf16.mxu0 0
    %2539 = vmatpush1.bf16.msra.mxu0 0
    %2540 = vmatprep.subr.bf16.mxu0 0
    %2541 = vmatpush1.bf16.msra.mxu0 0
    %2542 = vmatprep.subr.bf16.mxu0 0
    %2543 = vmatpush1.bf16.msra.mxu0 0
    %2544 = vmatprep.subr.bf16.mxu0 0
    %2545 = vmatpush1.bf16.msra.mxu0 0
    %2546 = vmatprep.subr.bf16.mxu0 0
    %2547 = vmatpush1.bf16.msra.mxu0 0
    %2548 = vmatprep.mubr.bf16.mxu0 0
    %2549 = vmatmul.mubr.bf16.gmra.mrb[0].mxu0 %v2514
    %v2550 = vpop.f32.mrb[0].mxu0
    %v2551 = vadd.f32 %v2498, %v2550
    %v2552 = vpop.f32.mrb[0].mxu0
    %v2553 = vpop.f32.mrb[0].mxu0
    %v2554 = vadd.f32 %v2499, %v2553
    %v2555 = vpop.f32.mrb[0].mxu0
    %2556 = vdwg.mxu0
    %v2557 = vpack.c.bf16 %v2554, %v2551
    %v2558 = vld [vmem:[#allocation4] sm:$0xff]
    %v2559 = vld [vmem:[#allocation4 + $0x8] sm:$0xff]
    %v2560 = vld [vmem:[#allocation4 + $0x10] sm:$0xff]
    %v2561 = vld [vmem:[#allocation4 + $0x18] sm:$0xff]
    %v2562 = vld [vmem:[#allocation4 + $0x20] sm:$0xff]
    %v2563 = vld [vmem:[#allocation4 + $0x28] sm:$0xff]
    %v2564 = vld [vmem:[#allocation4 + $0x30] sm:$0xf]
    %v2565 = vld [vmem:[#allocation4 + $0x34] sm:$0xff]
    %v2566 = vld [vmem:[#allocation4 + $0x3c] sm:$0xff]
    %v2567 = vld [vmem:[#allocation4 + $0x44] sm:$0xff]
    %v2568 = vld [vmem:[#allocation4 + $0x4c] sm:$0xff]
    %v2569 = vld [vmem:[#allocation4 + $0x54] sm:$0xff]
    %v2570 = vld [vmem:[#allocation4 + $0x5c] sm:$0xff]
    %v2571 = vld [vmem:[#allocation4 + $0x64] sm:$0xf]
    %v2572 = vld [vmem:[#allocation4 + $0x68] sm:$0xff]
    %v2573 = vld [vmem:[#allocation4 + $0x70] sm:$0xff]
    %v2574 = vld [vmem:[#allocation4 + $0x78] sm:$0xff]
    %v2575 = vld [vmem:[#allocation4 + $0x80] sm:$0xff]
    %v2576 = vld [vmem:[#allocation4 + $0x88] sm:$0xff]
    %v2577 = vld [vmem:[#allocation4 + $0x90] sm:$0xff]
    %v2578 = vld [vmem:[#allocation4 + $0x98] sm:$0xf]
    %v2579 = vld [vmem:[#allocation4 + $0x9c] sm:$0xff]
    %v2580 = vld [vmem:[#allocation4 + $0xa4] sm:$0xff]
    %v2581 = vld [vmem:[#allocation4 + $0xac] sm:$0xff]
    %v2582 = vld [vmem:[#allocation4 + $0xb4] sm:$0xff]
    %v2583 = vld [vmem:[#allocation4 + $0xbc] sm:$0xff]
    %v2584 = vld [vmem:[#allocation4 + $0xc4] sm:$0xff]
    %v2585 = vld [vmem:[#allocation4 + $0xcc] sm:$0xf]
    %v2586 = vld [vmem:[#allocation4 + $0xd0] sm:$0xff]
    %v2587 = vld [vmem:[#allocation4 + $0xd8] sm:$0xff]
    %v2588 = vld [vmem:[#allocation4 + $0xe0] sm:$0xff]
    %v2589 = vld [vmem:[#allocation4 + $0xe8] sm:$0xff]
    %v2590 = vld [vmem:[#allocation4 + $0xf0] sm:$0xff]
    %v2591 = vld [vmem:[#allocation4 + $0xf8] sm:$0xff]
    %v2592 = vld [vmem:[#allocation4 + $0x100] sm:$0xf]
    %v2628 = vunpack.c.l.b16 %v2558
    %v2629 = vunpack.c.h.b16 %v2558
    %v2630 = vunpack.c.l.b16 %v2559
    %v2631 = vunpack.c.h.b16 %v2559
    %v2632 = vunpack.c.l.b16 %v2560
    %v2633 = vunpack.c.h.b16 %v2560
    %v2634 = vunpack.c.l.b16 %v2561
    %v2635 = vunpack.c.h.b16 %v2561
    %v2636 = vunpack.c.l.b16 %v2562
    %v2637 = vunpack.c.h.b16 %v2562
    %v2638 = vunpack.c.l.b16 %v2563
    %v2639 = vunpack.c.h.b16 %v2563
    %v2640 = vunpack.c.l.b16 %v2564
    %v2641 = vunpack.c.l.b16 %v2565
    %v2642 = vunpack.c.h.b16 %v2565
    %v2643 = vunpack.c.l.b16 %v2566
    %v2644 = vunpack.c.h.b16 %v2566
    %v2645 = vunpack.c.l.b16 %v2567
    %v2646 = vunpack.c.h.b16 %v2567
    %v2647 = vunpack.c.l.b16 %v2568
    %v2648 = vunpack.c.h.b16 %v2568
    %v2649 = vunpack.c.l.b16 %v2569
    %v2650 = vunpack.c.h.b16 %v2569
    %v2651 = vunpack.c.l.b16 %v2570
    %v2652 = vunpack.c.h.b16 %v2570
    %v2653 = vunpack.c.l.b16 %v2571
    %v2654 = vunpack.c.l.b16 %v2572
    %v2655 = vunpack.c.h.b16 %v2572
    %v2656 = vunpack.c.l.b16 %v2573
    %v2657 = vunpack.c.h.b16 %v2573
    %v2658 = vunpack.c.l.b16 %v2574
    %v2659 = vunpack.c.h.b16 %v2574
    %v2660 = vunpack.c.l.b16 %v2575
    %v2661 = vunpack.c.h.b16 %v2575
    %v2662 = vunpack.c.l.b16 %v2576
    %v2663 = vunpack.c.h.b16 %v2576
    %v2664 = vunpack.c.l.b16 %v2577
    %v2665 = vunpack.c.h.b16 %v2577
    %v2666 = vunpack.c.l.b16 %v2578
    %v2667 = vunpack.c.l.b16 %v2579
    %v2668 = vunpack.c.h.b16 %v2579
    %v2669 = vunpack.c.l.b16 %v2580
    %v2670 = vunpack.c.h.b16 %v2580
    %v2671 = vunpack.c.l.b16 %v2581
    %v2672 = vunpack.c.h.b16 %v2581
    %v2673 = vunpack.c.l.b16 %v2582
    %v2674 = vunpack.c.h.b16 %v2582
    %v2675 = vunpack.c.l.b16 %v2583
    %v2676 = vunpack.c.h.b16 %v2583
    %v2677 = vunpack.c.l.b16 %v2584
    %v2678 = vunpack.c.h.b16 %v2584
    %v2679 = vunpack.c.l.b16 %v2585
    %v2680 = vunpack.c.l.b16 %v2586
    %v2681 = vunpack.c.h.b16 %v2586
    %v2682 = vunpack.c.l.b16 %v2587
    %v2683 = vunpack.c.h.b16 %v2587
    %v2684 = vunpack.c.l.b16 %v2588
    %v2685 = vunpack.c.h.b16 %v2588
    %v2686 = vunpack.c.l.b16 %v2589
    %v2687 = vunpack.c.h.b16 %v2589
    %v2688 = vunpack.c.l.b16 %v2590
    %v2689 = vunpack.c.h.b16 %v2590
    %v2690 = vunpack.c.l.b16 %v2591
    %v2691 = vunpack.c.h.b16 %v2591
    %v2692 = vunpack.c.l.b16 %v2592
    %v2693 = vpack.c.b16 %v2641, %v2628
    %v2694 = vpack.c.b16 %v2642, %v2629
    %v2695 = vpack.c.b16 %v2643, %v2630
    %v2696 = vpack.c.b16 %v2644, %v2631
    %v2697 = vpack.c.b16 %v2645, %v2632
    %v2698 = vpack.c.b16 %v2646, %v2633
    %v2699 = vpack.c.b16 %v2647, %v2634
    %v2700 = vpack.c.b16 %v2648, %v2635
    %v2701 = vpack.c.b16 %v2649, %v2636
    %v2702 = vpack.c.b16 %v2650, %v2637
    %v2703 = vpack.c.b16 %v2651, %v2638
    %v2704 = vpack.c.b16 %v2652, %v2639
    %v2705 = vpack.c.b16 %v2653, %v2640
    %v2706 = vpack.c.b16 %v2667, %v2654
    %v2707 = vpack.c.b16 %v2668, %v2655
    %v2708 = vpack.c.b16 %v2669, %v2656
    %v2709 = vpack.c.b16 %v2670, %v2657
    %v2710 = vpack.c.b16 %v2671, %v2658
    %v2711 = vpack.c.b16 %v2672, %v2659
    %v2712 = vpack.c.b16 %v2673, %v2660
    %v2713 = vpack.c.b16 %v2674, %v2661
    %v2714 = vpack.c.b16 %v2675, %v2662
    %v2715 = vpack.c.b16 %v2676, %v2663
    %v2716 = vpack.c.b16 %v2677, %v2664
    %v2717 = vpack.c.b16 %v2678, %v2665
    %v2718 = vpack.c.b16 %v2679, %v2666
    %v2719 = vpack.c.b16 %v2680, %v2680
    %v2720 = vpack.c.b16 %v2681, %v2681
    %v2721 = vpack.c.b16 %v2682, %v2682
    %v2722 = vpack.c.b16 %v2683, %v2683
    %v2723 = vpack.c.b16 %v2684, %v2684
    %v2724 = vpack.c.b16 %v2685, %v2685
    %v2725 = vpack.c.b16 %v2686, %v2686
    %v2726 = vpack.c.b16 %v2687, %v2687
    %v2727 = vpack.c.b16 %v2688, %v2688
    %v2728 = vpack.c.b16 %v2689, %v2689
    %v2729 = vpack.c.b16 %v2690, %v2690
    %v2730 = vpack.c.b16 %v2691, %v2691
    %v2731 = vpack.c.b16 %v2692, %v2692
    %v2759 = vsel %vm618, %v2557, 0
    %v2762 = vsel %vm622, %v2719, 0
    %v2765 = vsel %vm622, %v2720, 0
    %v2768 = vsel %vm622, %v2721, 0
    %v2771 = vsel %vm622, %v2722, 0
    %v2774 = vsel %vm622, %v2723, 0
    %v2777 = vsel %vm622, %v2724, 0
    %v2780 = vsel %vm622, %v2725, 0
    %v2783 = vsel %vm622, %v2726, 0
    %v2786 = vsel %vm622, %v2727, 0
    %v2789 = vsel %vm622, %v2728, 0
    %v2792 = vsel %vm622, %v2729, 0
    %v2795 = vsel %vm622, %v2730, 0
    %v2798 = vsel %vm622, %v2731, 0
    %2800 = vmatprep.subr.bf16.mxu0 %v2694
    %2801 = vmatpush1.bf16.msra.mxu0 %v2693
    %2802 = vmatprep.subr.bf16.mxu0 %v2707
    %2803 = vmatpush1.bf16.msra.mxu0 %v2706
    %2804 = vmatprep.subr.bf16.mxu0 %v2765
    %2805 = vmatpush1.bf16.msra.mxu0 %v2762
    %2806 = vmatprep.subr.bf16.mxu0 0
    %2807 = vmatpush1.bf16.msra.mxu0 0
    %2808 = vmatprep.subr.bf16.mxu0 0
    %2809 = vmatpush1.bf16.msra.mxu0 0
    %2810 = vmatprep.subr.bf16.mxu0 0
    %2811 = vmatpush1.bf16.msra.mxu0 0
    %2812 = vmatprep.subr.bf16.mxu0 0
    %2813 = vmatpush1.bf16.msra.mxu0 0
    %2814 = vmatprep.subr.bf16.mxu0 0
    %2815 = vmatpush1.bf16.msra.mxu0 0
    %2816 = vmatprep.subr.bf16.mxu0 0
    %2817 = vmatpush1.bf16.msra.mxu0 0
    %2818 = vmatprep.subr.bf16.mxu0 0
    %2819 = vmatpush1.bf16.msra.mxu0 0
    %2820 = vmatprep.subr.bf16.mxu0 0
    %2821 = vmatpush1.bf16.msra.mxu0 0
    %2822 = vmatprep.subr.bf16.mxu0 0
    %2823 = vmatpush1.bf16.msra.mxu0 0
    %2824 = vmatprep.subr.bf16.mxu0 0
    %2825 = vmatpush1.bf16.msra.mxu0 0
    %2826 = vmatprep.subr.bf16.mxu0 0
    %2827 = vmatpush1.bf16.msra.mxu0 0
    %2828 = vmatprep.subr.bf16.mxu0 0
    %2829 = vmatpush1.bf16.msra.mxu0 0
    %2830 = vmatprep.subr.bf16.mxu0 0
    %2831 = vmatpush1.bf16.msra.mxu0 0
    %2832 = vmatprep.mubr.bf16.mxu0 0
    %2833 = vmatmul.mubr.bf16.gmra.mrb[0].mxu0 %v2759
    %v2834 = vpop.f32.mrb[0].mxu0
    %v2835 = vadd.f32 0.0, %v2834
    %v2836 = vpop.f32.mrb[0].mxu0
    %v2837 = vadd.f32 0.0, %v2836
    %v2838 = vpop.f32.mrb[0].mxu0
    %v2839 = vadd.f32 0.0, %v2838
    %v2840 = vpop.f32.mrb[0].mxu0
    %v2841 = vadd.f32 0.0, %v2840
    %2842 = vdwg.mxu0
    %2843 = vmatprep.subr.bf16.mxu0 %v2696
    %2844 = vmatpush1.bf16.msra.mxu0 %v2695
    %2845 = vmatprep.subr.bf16.mxu0 %v2709
    %2846 = vmatpush1.bf16.msra.mxu0 %v2708
    %2847 = vmatprep.subr.bf16.mxu0 %v2771
    %2848 = vmatpush1.bf16.msra.mxu0 %v2768
    %2849 = vmatprep.subr.bf16.mxu0 0
    %2850 = vmatpush1.bf16.msra.mxu0 0
    %2851 = vmatprep.subr.bf16.mxu0 0
    %2852 = vmatpush1.bf16.msra.mxu0 0
    %2853 = vmatprep.subr.bf16.mxu0 0
    %2854 = vmatpush1.bf16.msra.mxu0 0
    %2855 = vmatprep.subr.bf16.mxu0 0
    %2856 = vmatpush1.bf16.msra.mxu0 0
    %2857 = vmatprep.subr.bf16.mxu0 0
    %2858 = vmatpush1.bf16.msra.mxu0 0
    %2859 = vmatprep.subr.bf16.mxu0 0
    %2860 = vmatpush1.bf16.msra.mxu0 0
    %2861 = vmatprep.subr.bf16.mxu0 0
    %2862 = vmatpush1.bf16.msra.mxu0 0
    %2863 = vmatprep.subr.bf16.mxu0 0
    %2864 = vmatpush1.bf16.msra.mxu0 0
    %2865 = vmatprep.subr.bf16.mxu0 0
    %2866 = vmatpush1.bf16.msra.mxu0 0
    %2867 = vmatprep.subr.bf16.mxu0 0
    %2868 = vmatpush1.bf16.msra.mxu0 0
    %2869 = vmatprep.subr.bf16.mxu0 0
    %2870 = vmatpush1.bf16.msra.mxu0 0
    %2871 = vmatprep.subr.bf16.mxu0 0
    %2872 = vmatpush1.bf16.msra.mxu0 0
    %2873 = vmatprep.subr.bf16.mxu0 0
    %2874 = vmatpush1.bf16.msra.mxu0 0
    %2875 = vmatprep.mubr.bf16.mxu0 0
    %2876 = vmatmul.mubr.bf16.gmra.mrb[0].mxu0 %v2759
    %v2877 = vpop.f32.mrb[0].mxu0
    %v2878 = vadd.f32 0.0, %v2877
    %v2879 = vpop.f32.mrb[0].mxu0
    %v2880 = vadd.f32 0.0, %v2879
    %v2881 = vpop.f32.mrb[0].mxu0
    %v2882 = vadd.f32 0.0, %v2881
    %v2883 = vpop.f32.mrb[0].mxu0
    %v2884 = vadd.f32 0.0, %v2883
    %2885 = vdwg.mxu0
    %2886 = vmatprep.subr.bf16.mxu0 %v2698
    %2887 = vmatpush1.bf16.msra.mxu0 %v2697
    %2888 = vmatprep.subr.bf16.mxu0 %v2711
    %2889 = vmatpush1.bf16.msra.mxu0 %v2710
    %2890 = vmatprep.subr.bf16.mxu0 %v2777
    %2891 = vmatpush1.bf16.msra.mxu0 %v2774
    %2892 = vmatprep.subr.bf16.mxu0 0
    %2893 = vmatpush1.bf16.msra.mxu0 0
    %2894 = vmatprep.subr.bf16.mxu0 0
    %2895 = vmatpush1.bf16.msra.mxu0 0
    %2896 = vmatprep.subr.bf16.mxu0 0
    %2897 = vmatpush1.bf16.msra.mxu0 0
    %2898 = vmatprep.subr.bf16.mxu0 0
    %2899 = vmatpush1.bf16.msra.mxu0 0
    %2900 = vmatprep.subr.bf16.mxu0 0
    %2901 = vmatpush1.bf16.msra.mxu0 0
    %2902 = vmatprep.subr.bf16.mxu0 0
    %2903 = vmatpush1.bf16.msra.mxu0 0
    %2904 = vmatprep.subr.bf16.mxu0 0
    %2905 = vmatpush1.bf16.msra.mxu0 0
    %2906 = vmatprep.subr.bf16.mxu0 0
    %2907 = vmatpush1.bf16.msra.mxu0 0
    %2908 = vmatprep.subr.bf16.mxu0 0
    %2909 = vmatpush1.bf16.msra.mxu0 0
    %2910 = vmatprep.subr.bf16.mxu0 0
    %2911 = vmatpush1.bf16.msra.mxu0 0
    %2912 = vmatprep.subr.bf16.mxu0 0
    %2913 = vmatpush1.bf16.msra.mxu0 0
    %2914 = vmatprep.subr.bf16.mxu0 0
    %2915 = vmatpush1.bf16.msra.mxu0 0
    %2916 = vmatprep.subr.bf16.mxu0 0
    %2917 = vmatpush1.bf16.msra.mxu0 0
    %2918 = vmatprep.mubr.bf16.mxu0 0
    %2919 = vmatmul.mubr.bf16.gmra.mrb[0].mxu0 %v2759
    %v2920 = vpop.f32.mrb[0].mxu0
    %v2921 = vadd.f32 0.0, %v2920
    %v2922 = vpop.f32.mrb[0].mxu0
    %v2923 = vadd.f32 0.0, %v2922
    %v2924 = vpop.f32.mrb[0].mxu0
    %v2925 = vadd.f32 0.0, %v2924
    %v2926 = vpop.f32.mrb[0].mxu0
    %v2927 = vadd.f32 0.0, %v2926
    %2928 = vdwg.mxu0
    %2929 = vmatprep.subr.bf16.mxu0 %v2700
    %2930 = vmatpush1.bf16.msra.mxu0 %v2699
    %2931 = vmatprep.subr.bf16.mxu0 %v2713
    %2932 = vmatpush1.bf16.msra.mxu0 %v2712
    %2933 = vmatprep.subr.bf16.mxu0 %v2783
    %2934 = vmatpush1.bf16.msra.mxu0 %v2780
    %2935 = vmatprep.subr.bf16.mxu0 0
    %2936 = vmatpush1.bf16.msra.mxu0 0
    %2937 = vmatprep.subr.bf16.mxu0 0
    %2938 = vmatpush1.bf16.msra.mxu0 0
    %2939 = vmatprep.subr.bf16.mxu0 0
    %2940 = vmatpush1.bf16.msra.mxu0 0
    %2941 = vmatprep.subr.bf16.mxu0 0
    %2942 = vmatpush1.bf16.msra.mxu0 0
    %2943 = vmatprep.subr.bf16.mxu0 0
    %2944 = vmatpush1.bf16.msra.mxu0 0
    %2945 = vmatprep.subr.bf16.mxu0 0
    %2946 = vmatpush1.bf16.msra.mxu0 0
    %2947 = vmatprep.subr.bf16.mxu0 0
    %2948 = vmatpush1.bf16.msra.mxu0 0
    %2949 = vmatprep.subr.bf16.mxu0 0
    %2950 = vmatpush1.bf16.msra.mxu0 0
    %2951 = vmatprep.subr.bf16.mxu0 0
    %2952 = vmatpush1.bf16.msra.mxu0 0
    %2953 = vmatprep.subr.bf16.mxu0 0
    %2954 = vmatpush1.bf16.msra.mxu0 0
    %2955 = vmatprep.subr.bf16.mxu0 0
    %2956 = vmatpush1.bf16.msra.mxu0 0
    %2957 = vmatprep.subr.bf16.mxu0 0
    %2958 = vmatpush1.bf16.msra.mxu0 0
    %2959 = vmatprep.subr.bf16.mxu0 0
    %2960 = vmatpush1.bf16.msra.mxu0 0
    %2961 = vmatprep.mubr.bf16.mxu0 0
    %2962 = vmatmul.mubr.bf16.gmra.mrb[0].mxu0 %v2759
    %v2963 = vpop.f32.mrb[0].mxu0
    %v2964 = vadd.f32 0.0, %v2963
    %v2965 = vpop.f32.mrb[0].mxu0
    %v2966 = vadd.f32 0.0, %v2965
    %v2967 = vpop.f32.mrb[0].mxu0
    %v2968 = vadd.f32 0.0, %v2967
    %v2969 = vpop.f32.mrb[0].mxu0
    %v2970 = vadd.f32 0.0, %v2969
    %2971 = vdwg.mxu0
    %2972 = vmatprep.subr.bf16.mxu0 %v2702
    %2973 = vmatpush1.bf16.msra.mxu0 %v2701
    %2974 = vmatprep.subr.bf16.mxu0 %v2715
    %2975 = vmatpush1.bf16.msra.mxu0 %v2714
    %2976 = vmatprep.subr.bf16.mxu0 %v2789
    %2977 = vmatpush1.bf16.msra.mxu0 %v2786
    %2978 = vmatprep.subr.bf16.mxu0 0
    %2979 = vmatpush1.bf16.msra.mxu0 0
    %2980 = vmatprep.subr.bf16.mxu0 0
    %2981 = vmatpush1.bf16.msra.mxu0 0
    %2982 = vmatprep.subr.bf16.mxu0 0
    %2983 = vmatpush1.bf16.msra.mxu0 0
    %2984 = vmatprep.subr.bf16.mxu0 0
    %2985 = vmatpush1.bf16.msra.mxu0 0
    %2986 = vmatprep.subr.bf16.mxu0 0
    %2987 = vmatpush1.bf16.msra.mxu0 0
    %2988 = vmatprep.subr.bf16.mxu0 0
    %2989 = vmatpush1.bf16.msra.mxu0 0
    %2990 = vmatprep.subr.bf16.mxu0 0
    %2991 = vmatpush1.bf16.msra.mxu0 0
    %2992 = vmatprep.subr.bf16.mxu0 0
    %2993 = vmatpush1.bf16.msra.mxu0 0
    %2994 = vmatprep.subr.bf16.mxu0 0
    %2995 = vmatpush1.bf16.msra.mxu0 0
    %2996 = vmatprep.subr.bf16.mxu0 0
    %2997 = vmatpush1.bf16.msra.mxu0 0
    %2998 = vmatprep.subr.bf16.mxu0 0
    %2999 = vmatpush1.bf16.msra.mxu0 0
    %3000 = vmatprep.subr.bf16.mxu0 0
    %3001 = vmatpush1.bf16.msra.mxu0 0
    %3002 = vmatprep.subr.bf16.mxu0 0
    %3003 = vmatpush1.bf16.msra.mxu0 0
    %3004 = vmatprep.mubr.bf16.mxu0 0
    %3005 = vmatmul.mubr.bf16.gmra.mrb[0].mxu0 %v2759
    %v3006 = vpop.f32.mrb[0].mxu0
    %v3007 = vadd.f32 0.0, %v3006
    %v3008 = vpop.f32.mrb[0].mxu0
    %v3009 = vadd.f32 0.0, %v3008
    %v3010 = vpop.f32.mrb[0].mxu0
    %v3011 = vadd.f32 0.0, %v3010
    %v3012 = vpop.f32.mrb[0].mxu0
    %v3013 = vadd.f32 0.0, %v3012
    %3014 = vdwg.mxu0
    %3015 = vmatprep.subr.bf16.mxu0 %v2704
    %3016 = vmatpush1.bf16.msra.mxu0 %v2703
    %3017 = vmatprep.subr.bf16.mxu0 %v2717
    %3018 = vmatpush1.bf16.msra.mxu0 %v2716
    %3019 = vmatprep.subr.bf16.mxu0 %v2795
    %3020 = vmatpush1.bf16.msra.mxu0 %v2792
    %3021 = vmatprep.subr.bf16.mxu0 0
    %3022 = vmatpush1.bf16.msra.mxu0 0
    %3023 = vmatprep.subr.bf16.mxu0 0
    %3024 = vmatpush1.bf16.msra.mxu0 0
    %3025 = vmatprep.subr.bf16.mxu0 0
    %3026 = vmatpush1.bf16.msra.mxu0 0
    %3027 = vmatprep.subr.bf16.mxu0 0
    %3028 = vmatpush1.bf16.msra.mxu0 0
    %3029 = vmatprep.subr.bf16.mxu0 0
    %3030 = vmatpush1.bf16.msra.mxu0 0
    %3031 = vmatprep.subr.bf16.mxu0 0
    %3032 = vmatpush1.bf16.msra.mxu0 0
    %3033 = vmatprep.subr.bf16.mxu0 0
    %3034 = vmatpush1.bf16.msra.mxu0 0
    %3035 = vmatprep.subr.bf16.mxu0 0
    %3036 = vmatpush1.bf16.msra.mxu0 0
    %3037 = vmatprep.subr.bf16.mxu0 0
    %3038 = vmatpush1.bf16.msra.mxu0 0
    %3039 = vmatprep.subr.bf16.mxu0 0
    %3040 = vmatpush1.bf16.msra.mxu0 0
    %3041 = vmatprep.subr.bf16.mxu0 0
    %3042 = vmatpush1.bf16.msra.mxu0 0
    %3043 = vmatprep.subr.bf16.mxu0 0
    %3044 = vmatpush1.bf16.msra.mxu0 0
    %3045 = vmatprep.subr.bf16.mxu0 0
    %3046 = vmatpush1.bf16.msra.mxu0 0
    %3047 = vmatprep.mubr.bf16.mxu0 0
    %3048 = vmatmul.mubr.bf16.gmra.mrb[0].mxu0 %v2759
    %v3049 = vpop.f32.mrb[0].mxu0
    %v3050 = vadd.f32 0.0, %v3049
    %v3051 = vpop.f32.mrb[0].mxu0
    %v3052 = vadd.f32 0.0, %v3051
    %v3053 = vpop.f32.mrb[0].mxu0
    %v3054 = vadd.f32 0.0, %v3053
    %v3055 = vpop.f32.mrb[0].mxu0
    %v3056 = vadd.f32 0.0, %v3055
    %3057 = vdwg.mxu0
    %3058 = vmatprep.subr.bf16.mxu0 0
    %3059 = vmatpush1.bf16.msra.mxu0 %v2705
    %3060 = vmatprep.subr.bf16.mxu0 0
    %3061 = vmatpush1.bf16.msra.mxu0 %v2718
    %3062 = vmatprep.subr.bf16.mxu0 0
    %3063 = vmatpush1.bf16.msra.mxu0 %v2798
    %3064 = vmatprep.subr.bf16.mxu0 0
    %3065 = vmatpush1.bf16.msra.mxu0 0
    %3066 = vmatprep.subr.bf16.mxu0 0
    %3067 = vmatpush1.bf16.msra.mxu0 0
    %3068 = vmatprep.subr.bf16.mxu0 0
    %3069 = vmatpush1.bf16.msra.mxu0 0
    %3070 = vmatprep.subr.bf16.mxu0 0
    %3071 = vmatpush1.bf16.msra.mxu0 0
    %3072 = vmatprep.subr.bf16.mxu0 0
    %3073 = vmatpush1.bf16.msra.mxu0 0
    %3074 = vmatprep.subr.bf16.mxu0 0
    %3075 = vmatpush1.bf16.msra.mxu0 0
    %3076 = vmatprep.subr.bf16.mxu0 0
    %3077 = vmatpush1.bf16.msra.mxu0 0
    %3078 = vmatprep.subr.bf16.mxu0 0
    %3079 = vmatpush1.bf16.msra.mxu0 0
    %3080 = vmatprep.subr.bf16.mxu0 0
    %3081 = vmatpush1.bf16.msra.mxu0 0
    %3082 = vmatprep.subr.bf16.mxu0 0
    %3083 = vmatpush1.bf16.msra.mxu0 0
    %3084 = vmatprep.subr.bf16.mxu0 0
    %3085 = vmatpush1.bf16.msra.mxu0 0
    %3086 = vmatprep.subr.bf16.mxu0 0
    %3087 = vmatpush1.bf16.msra.mxu0 0
    %3088 = vmatprep.subr.bf16.mxu0 0
    %3089 = vmatpush1.bf16.msra.mxu0 0
    %3090 = vmatprep.mubr.bf16.mxu0 0
    %3091 = vmatmul.mubr.bf16.gmra.mrb[0].mxu0 %v2759
    %v3092 = vpop.f32.mrb[0].mxu0
    %v3093 = vadd.f32 0.0, %v3092
    %v3094 = vpop.f32.mrb[0].mxu0
    %v3095 = vpop.f32.mrb[0].mxu0
    %v3096 = vadd.f32 0.0, %v3095
    %v3097 = vpop.f32.mrb[0].mxu0
    %3098 = vdwg.mxu0
    %3099 = vmatprep.subr.bf16.mxu0 %v1062
    %3100 = vmatpush1.bf16.msra.mxu0 %v1061
    %3101 = vmatprep.subr.bf16.mxu0 %v1075
    %3102 = vmatpush1.bf16.msra.mxu0 %v1074
    %3103 = vmatprep.subr.bf16.mxu0 %v1130
    %3104 = vmatpush1.bf16.msra.mxu0 %v1127
    %3105 = vmatprep.subr.bf16.mxu0 0
    %3106 = vmatpush1.bf16.msra.mxu0 0
    %3107 = vmatprep.subr.bf16.mxu0 0
    %3108 = vmatpush1.bf16.msra.mxu0 0
    %3109 = vmatprep.subr.bf16.mxu0 0
    %3110 = vmatpush1.bf16.msra.mxu0 0
    %3111 = vmatprep.subr.bf16.mxu0 0
    %3112 = vmatpush1.bf16.msra.mxu0 0
    %3113 = vmatprep.subr.bf16.mxu0 0
    %3114 = vmatpush1.bf16.msra.mxu0 0
    %3115 = vmatprep.subr.bf16.mxu0 0
    %3116 = vmatpush1.bf16.msra.mxu0 0
    %3117 = vmatprep.subr.bf16.mxu0 0
    %3118 = vmatpush1.bf16.msra.mxu0 0
    %3119 = vmatprep.subr.bf16.mxu0 0
    %3120 = vmatpush1.bf16.msra.mxu0 0
    %3121 = vmatprep.subr.bf16.mxu0 0
    %3122 = vmatpush1.bf16.msra.mxu0 0
    %3123 = vmatprep.subr.bf16.mxu0 0
    %3124 = vmatpush1.bf16.msra.mxu0 0
    %3125 = vmatprep.subr.bf16.mxu0 0
    %3126 = vmatpush1.bf16.msra.mxu0 0
    %3127 = vmatprep.subr.bf16.mxu0 0
    %3128 = vmatpush1.bf16.msra.mxu0 0
    %3129 = vmatprep.subr.bf16.mxu0 0
    %3130 = vmatpush1.bf16.msra.mxu0 0
    %3131 = vmatprep.mubr.bf16.mxu0 0
    %3132 = vmatmul.mubr.bf16.gmra.mrb[0].mxu0 %v2759
    %v3133 = vpop.f32.mrb[0].mxu0
    %v3134 = vadd.f32 0.0, %v3133
    %v3135 = vpop.f32.mrb[0].mxu0
    %v3136 = vadd.f32 0.0, %v3135
    %v3137 = vpop.f32.mrb[0].mxu0
    %v3138 = vadd.f32 0.0, %v3137
    %v3139 = vpop.f32.mrb[0].mxu0
    %v3140 = vadd.f32 0.0, %v3139
    %3141 = vdwg.mxu0
    %3142 = vmatprep.subr.bf16.mxu0 %v1064
    %3143 = vmatpush1.bf16.msra.mxu0 %v1063
    %3144 = vmatprep.subr.bf16.mxu0 %v1077
    %3145 = vmatpush1.bf16.msra.mxu0 %v1076
    %3146 = vmatprep.subr.bf16.mxu0 %v1136
    %3147 = vmatpush1.bf16.msra.mxu0 %v1133
    %3148 = vmatprep.subr.bf16.mxu0 0
    %3149 = vmatpush1.bf16.msra.mxu0 0
    %3150 = vmatprep.subr.bf16.mxu0 0
    %3151 = vmatpush1.bf16.msra.mxu0 0
    %3152 = vmatprep.subr.bf16.mxu0 0
    %3153 = vmatpush1.bf16.msra.mxu0 0
    %3154 = vmatprep.subr.bf16.mxu0 0
    %3155 = vmatpush1.bf16.msra.mxu0 0
    %3156 = vmatprep.subr.bf16.mxu0 0
    %3157 = vmatpush1.bf16.msra.mxu0 0
    %3158 = vmatprep.subr.bf16.mxu0 0
    %3159 = vmatpush1.bf16.msra.mxu0 0
    %3160 = vmatprep.subr.bf16.mxu0 0
    %3161 = vmatpush1.bf16.msra.mxu0 0
    %3162 = vmatprep.subr.bf16.mxu0 0
    %3163 = vmatpush1.bf16.msra.mxu0 0
    %3164 = vmatprep.subr.bf16.mxu0 0
    %3165 = vmatpush1.bf16.msra.mxu0 0
    %3166 = vmatprep.subr.bf16.mxu0 0
    %3167 = vmatpush1.bf16.msra.mxu0 0
    %3168 = vmatprep.subr.bf16.mxu0 0
    %3169 = vmatpush1.bf16.msra.mxu0 0
    %3170 = vmatprep.subr.bf16.mxu0 0
    %3171 = vmatpush1.bf16.msra.mxu0 0
    %3172 = vmatprep.subr.bf16.mxu0 0
    %3173 = vmatpush1.bf16.msra.mxu0 0
    %3174 = vmatprep.mubr.bf16.mxu0 0
    %3175 = vmatmul.mubr.bf16.gmra.mrb[0].mxu0 %v2759
    %v3176 = vpop.f32.mrb[0].mxu0
    %v3177 = vadd.f32 0.0, %v3176
    %v3178 = vpop.f32.mrb[0].mxu0
    %v3179 = vadd.f32 0.0, %v3178
    %v3180 = vpop.f32.mrb[0].mxu0
    %v3181 = vadd.f32 0.0, %v3180
    %v3182 = vpop.f32.mrb[0].mxu0
    %v3183 = vadd.f32 0.0, %v3182
    %3184 = vdwg.mxu0
    %3185 = vmatprep.subr.bf16.mxu0 %v1066
    %3186 = vmatpush1.bf16.msra.mxu0 %v1065
    %3187 = vmatprep.subr.bf16.mxu0 %v1079
    %3188 = vmatpush1.bf16.msra.mxu0 %v1078
    %3189 = vmatprep.subr.bf16.mxu0 %v1142
    %3190 = vmatpush1.bf16.msra.mxu0 %v1139
    %3191 = vmatprep.subr.bf16.mxu0 0
    %3192 = vmatpush1.bf16.msra.mxu0 0
    %3193 = vmatprep.subr.bf16.mxu0 0
    %3194 = vmatpush1.bf16.msra.mxu0 0
    %3195 = vmatprep.subr.bf16.mxu0 0
    %3196 = vmatpush1.bf16.msra.mxu0 0
    %3197 = vmatprep.subr.bf16.mxu0 0
    %3198 = vmatpush1.bf16.msra.mxu0 0
    %3199 = vmatprep.subr.bf16.mxu0 0
    %3200 = vmatpush1.bf16.msra.mxu0 0
    %3201 = vmatprep.subr.bf16.mxu0 0
    %3202 = vmatpush1.bf16.msra.mxu0 0
    %3203 = vmatprep.subr.bf16.mxu0 0
    %3204 = vmatpush1.bf16.msra.mxu0 0
    %3205 = vmatprep.subr.bf16.mxu0 0
    %3206 = vmatpush1.bf16.msra.mxu0 0
    %3207 = vmatprep.subr.bf16.mxu0 0
    %3208 = vmatpush1.bf16.msra.mxu0 0
    %3209 = vmatprep.subr.bf16.mxu0 0
    %3210 = vmatpush1.bf16.msra.mxu0 0
    %3211 = vmatprep.subr.bf16.mxu0 0
    %3212 = vmatpush1.bf16.msra.mxu0 0
    %3213 = vmatprep.subr.bf16.mxu0 0
    %3214 = vmatpush1.bf16.msra.mxu0 0
    %3215 = vmatprep.subr.bf16.mxu0 0
    %3216 = vmatpush1.bf16.msra.mxu0 0
    %3217 = vmatprep.mubr.bf16.mxu0 0
    %3218 = vmatmul.mubr.bf16.gmra.mrb[0].mxu0 %v2759
    %v3219 = vpop.f32.mrb[0].mxu0
    %v3220 = vadd.f32 0.0, %v3219
    %v3221 = vpop.f32.mrb[0].mxu0
    %v3222 = vadd.f32 0.0, %v3221
    %v3223 = vpop.f32.mrb[0].mxu0
    %v3224 = vadd.f32 0.0, %v3223
    %v3225 = vpop.f32.mrb[0].mxu0
    %v3226 = vadd.f32 0.0, %v3225
    %3227 = vdwg.mxu0
    %3228 = vmatprep.subr.bf16.mxu0 %v1068
    %3229 = vmatpush1.bf16.msra.mxu0 %v1067
    %3230 = vmatprep.subr.bf16.mxu0 %v1081
    %3231 = vmatpush1.bf16.msra.mxu0 %v1080
    %3232 = vmatprep.subr.bf16.mxu0 %v1148
    %3233 = vmatpush1.bf16.msra.mxu0 %v1145
    %3234 = vmatprep.subr.bf16.mxu0 0
    %3235 = vmatpush1.bf16.msra.mxu0 0
    %3236 = vmatprep.subr.bf16.mxu0 0
    %3237 = vmatpush1.bf16.msra.mxu0 0
    %3238 = vmatprep.subr.bf16.mxu0 0
    %3239 = vmatpush1.bf16.msra.mxu0 0
    %3240 = vmatprep.subr.bf16.mxu0 0
    %3241 = vmatpush1.bf16.msra.mxu0 0
    %3242 = vmatprep.subr.bf16.mxu0 0
    %3243 = vmatpush1.bf16.msra.mxu0 0
    %3244 = vmatprep.subr.bf16.mxu0 0
    %3245 = vmatpush1.bf16.msra.mxu0 0
    %3246 = vmatprep.subr.bf16.mxu0 0
    %3247 = vmatpush1.bf16.msra.mxu0 0
    %3248 = vmatprep.subr.bf16.mxu0 0
    %3249 = vmatpush1.bf16.msra.mxu0 0
    %3250 = vmatprep.subr.bf16.mxu0 0
    %3251 = vmatpush1.bf16.msra.mxu0 0
    %3252 = vmatprep.subr.bf16.mxu0 0
    %3253 = vmatpush1.bf16.msra.mxu0 0
    %3254 = vmatprep.subr.bf16.mxu0 0
    %3255 = vmatpush1.bf16.msra.mxu0 0
    %3256 = vmatprep.subr.bf16.mxu0 0
    %3257 = vmatpush1.bf16.msra.mxu0 0
    %3258 = vmatprep.subr.bf16.mxu0 0
    %3259 = vmatpush1.bf16.msra.mxu0 0
    %3260 = vmatprep.mubr.bf16.mxu0 0
    %3261 = vmatmul.mubr.bf16.gmra.mrb[0].mxu0 %v2759
    %v3262 = vpop.f32.mrb[0].mxu0
    %v3263 = vadd.f32 0.0, %v3262
    %v3264 = vpop.f32.mrb[0].mxu0
    %v3265 = vadd.f32 0.0, %v3264
    %v3266 = vpop.f32.mrb[0].mxu0
    %v3267 = vadd.f32 0.0, %v3266
    %v3268 = vpop.f32.mrb[0].mxu0
    %v3269 = vadd.f32 0.0, %v3268
    %3270 = vdwg.mxu0
    %3271 = vmatprep.subr.bf16.mxu0 %v1070
    %3272 = vmatpush1.bf16.msra.mxu0 %v1069
    %3273 = vmatprep.subr.bf16.mxu0 %v1083
    %3274 = vmatpush1.bf16.msra.mxu0 %v1082
    %3275 = vmatprep.subr.bf16.mxu0 %v1154
    %3276 = vmatpush1.bf16.msra.mxu0 %v1151
    %3277 = vmatprep.subr.bf16.mxu0 0
    %3278 = vmatpush1.bf16.msra.mxu0 0
    %3279 = vmatprep.subr.bf16.mxu0 0
    %3280 = vmatpush1.bf16.msra.mxu0 0
    %3281 = vmatprep.subr.bf16.mxu0 0
    %3282 = vmatpush1.bf16.msra.mxu0 0
    %3283 = vmatprep.subr.bf16.mxu0 0
    %3284 = vmatpush1.bf16.msra.mxu0 0
    %3285 = vmatprep.subr.bf16.mxu0 0
    %3286 = vmatpush1.bf16.msra.mxu0 0
    %3287 = vmatprep.subr.bf16.mxu0 0
    %3288 = vmatpush1.bf16.msra.mxu0 0
    %3289 = vmatprep.subr.bf16.mxu0 0
    %3290 = vmatpush1.bf16.msra.mxu0 0
    %3291 = vmatprep.subr.bf16.mxu0 0
    %3292 = vmatpush1.bf16.msra.mxu0 0
    %3293 = vmatprep.subr.bf16.mxu0 0
    %3294 = vmatpush1.bf16.msra.mxu0 0
    %3295 = vmatprep.subr.bf16.mxu0 0
    %3296 = vmatpush1.bf16.msra.mxu0 0
    %3297 = vmatprep.subr.bf16.mxu0 0
    %3298 = vmatpush1.bf16.msra.mxu0 0
    %3299 = vmatprep.subr.bf16.mxu0 0
    %3300 = vmatpush1.bf16.msra.mxu0 0
    %3301 = vmatprep.subr.bf16.mxu0 0
    %3302 = vmatpush1.bf16.msra.mxu0 0
    %3303 = vmatprep.mubr.bf16.mxu0 0
    %3304 = vmatmul.mubr.bf16.gmra.mrb[0].mxu0 %v2759
    %v3305 = vpop.f32.mrb[0].mxu0
    %v3306 = vadd.f32 0.0, %v3305
    %v3307 = vpop.f32.mrb[0].mxu0
    %v3308 = vadd.f32 0.0, %v3307
    %v3309 = vpop.f32.mrb[0].mxu0
    %v3310 = vadd.f32 0.0, %v3309
    %v3311 = vpop.f32.mrb[0].mxu0
    %v3312 = vadd.f32 0.0, %v3311
    %3313 = vdwg.mxu0
    %3314 = vmatprep.subr.bf16.mxu0 %v1072
    %3315 = vmatpush1.bf16.msra.mxu0 %v1071
    %3316 = vmatprep.subr.bf16.mxu0 %v1085
    %3317 = vmatpush1.bf16.msra.mxu0 %v1084
    %3318 = vmatprep.subr.bf16.mxu0 %v1160
    %3319 = vmatpush1.bf16.msra.mxu0 %v1157
    %3320 = vmatprep.subr.bf16.mxu0 0
    %3321 = vmatpush1.bf16.msra.mxu0 0
    %3322 = vmatprep.subr.bf16.mxu0 0
    %3323 = vmatpush1.bf16.msra.mxu0 0
    %3324 = vmatprep.subr.bf16.mxu0 0
    %3325 = vmatpush1.bf16.msra.mxu0 0
    %3326 = vmatprep.subr.bf16.mxu0 0
    %3327 = vmatpush1.bf16.msra.mxu0 0
    %3328 = vmatprep.subr.bf16.mxu0 0
    %3329 = vmatpush1.bf16.msra.mxu0 0
    %3330 = vmatprep.subr.bf16.mxu0 0
    %3331 = vmatpush1.bf16.msra.mxu0 0
    %3332 = vmatprep.subr.bf16.mxu0 0
    %3333 = vmatpush1.bf16.msra.mxu0 0
    %3334 = vmatprep.subr.bf16.mxu0 0
    %3335 = vmatpush1.bf16.msra.mxu0 0
    %3336 = vmatprep.subr.bf16.mxu0 0
    %3337 = vmatpush1.bf16.msra.mxu0 0
    %3338 = vmatprep.subr.bf16.mxu0 0
    %3339 = vmatpush1.bf16.msra.mxu0 0
    %3340 = vmatprep.subr.bf16.mxu0 0
    %3341 = vmatpush1.bf16.msra.mxu0 0
    %3342 = vmatprep.subr.bf16.mxu0 0
    %3343 = vmatpush1.bf16.msra.mxu0 0
    %3344 = vmatprep.subr.bf16.mxu0 0
    %3345 = vmatpush1.bf16.msra.mxu0 0
    %3346 = vmatprep.mubr.bf16.mxu0 0
    %3347 = vmatmul.mubr.bf16.gmra.mrb[0].mxu0 %v2759
    %v3348 = vpop.f32.mrb[0].mxu0
    %v3349 = vadd.f32 0.0, %v3348
    %v3350 = vpop.f32.mrb[0].mxu0
    %v3351 = vadd.f32 0.0, %v3350
    %v3352 = vpop.f32.mrb[0].mxu0
    %v3353 = vadd.f32 0.0, %v3352
    %v3354 = vpop.f32.mrb[0].mxu0
    %v3355 = vadd.f32 0.0, %v3354
    %3356 = vdwg.mxu0
    %3357 = vmatprep.subr.bf16.mxu0 0
    %3358 = vmatpush1.bf16.msra.mxu0 %v1073
    %3359 = vmatprep.subr.bf16.mxu0 0
    %3360 = vmatpush1.bf16.msra.mxu0 %v1086
    %3361 = vmatprep.subr.bf16.mxu0 0
    %3362 = vmatpush1.bf16.msra.mxu0 %v1163
    %3363 = vmatprep.subr.bf16.mxu0 0
    %3364 = vmatpush1.bf16.msra.mxu0 0
    %3365 = vmatprep.subr.bf16.mxu0 0
    %3366 = vmatpush1.bf16.msra.mxu0 0
    %3367 = vmatprep.subr.bf16.mxu0 0
    %3368 = vmatpush1.bf16.msra.mxu0 0
    %3369 = vmatprep.subr.bf16.mxu0 0
    %3370 = vmatpush1.bf16.msra.mxu0 0
    %3371 = vmatprep.subr.bf16.mxu0 0
    %3372 = vmatpush1.bf16.msra.mxu0 0
    %3373 = vmatprep.subr.bf16.mxu0 0
    %3374 = vmatpush1.bf16.msra.mxu0 0
    %3375 = vmatprep.subr.bf16.mxu0 0
    %3376 = vmatpush1.bf16.msra.mxu0 0
    %3377 = vmatprep.subr.bf16.mxu0 0
    %3378 = vmatpush1.bf16.msra.mxu0 0
    %3379 = vmatprep.subr.bf16.mxu0 0
    %3380 = vmatpush1.bf16.msra.mxu0 0
    %3381 = vmatprep.subr.bf16.mxu0 0
    %3382 = vmatpush1.bf16.msra.mxu0 0
    %3383 = vmatprep.subr.bf16.mxu0 0
    %3384 = vmatpush1.bf16.msra.mxu0 0
    %3385 = vmatprep.subr.bf16.mxu0 0
    %3386 = vmatpush1.bf16.msra.mxu0 0
    %3387 = vmatprep.subr.bf16.mxu0 0
    %3388 = vmatpush1.bf16.msra.mxu0 0
    %3389 = vmatprep.mubr.bf16.mxu0 0
    %3390 = vmatmul.mubr.bf16.gmra.mrb[0].mxu0 %v2759
    %v3391 = vpop.f32.mrb[0].mxu0
    %v3392 = vadd.f32 0.0, %v3391
    %v3393 = vpop.f32.mrb[0].mxu0
    %v3394 = vpop.f32.mrb[0].mxu0
    %v3395 = vadd.f32 0.0, %v3394
    %v3396 = vpop.f32.mrb[0].mxu0
    %3397 = vdwg.mxu0
    %v3398 = vmul.f32 %v2835, %v3134
    %v3399 = vmul.f32 %v2837, %v3136
    %v3400 = vmul.f32 %v2878, %v3177
    %v3401 = vmul.f32 %v2880, %v3179
    %v3402 = vmul.f32 %v2921, %v3220
    %v3403 = vmul.f32 %v2923, %v3222
    %v3404 = vmul.f32 %v2964, %v3263
    %v3405 = vmul.f32 %v2966, %v3265
    %v3406 = vmul.f32 %v3007, %v3306
    %v3407 = vmul.f32 %v3009, %v3308
    %v3408 = vmul.f32 %v3050, %v3349
    %v3409 = vmul.f32 %v3052, %v3351
    %v3410 = vmul.f32 %v3093, %v3392
    %v3411 = vmul.f32 %v2839, %v3138
    %v3412 = vmul.f32 %v2841, %v3140
    %v3413 = vmul.f32 %v2882, %v3181
    %v3414 = vmul.f32 %v2884, %v3183
    %v3415 = vmul.f32 %v2925, %v3224
    %v3416 = vmul.f32 %v2927, %v3226
    %v3417 = vmul.f32 %v2968, %v3267
    %v3418 = vmul.f32 %v2970, %v3269
    %v3419 = vmul.f32 %v3011, %v3310
    %v3420 = vmul.f32 %v3013, %v3312
    %v3421 = vmul.f32 %v3054, %v3353
    %v3422 = vmul.f32 %v3056, %v3355
    %v3423 = vmul.f32 %v3096, %v3395
    %v3424 = vpack.c.bf16 %v3411, %v3398
    %v3425 = vpack.c.bf16 %v3412, %v3399
    %v3426 = vpack.c.bf16 %v3413, %v3400
    %v3427 = vpack.c.bf16 %v3414, %v3401
    %v3428 = vpack.c.bf16 %v3415, %v3402
    %v3429 = vpack.c.bf16 %v3416, %v3403
    %v3430 = vpack.c.bf16 %v3417, %v3404
    %v3431 = vpack.c.bf16 %v3418, %v3405
    %v3432 = vpack.c.bf16 %v3419, %v3406
    %v3433 = vpack.c.bf16 %v3420, %v3407
    %v3434 = vpack.c.bf16 %v3421, %v3408
    %v3435 = vpack.c.bf16 %v3422, %v3409
    %v3436 = vpack.c.bf16 %v3423, %v3410
    %v3438 = vsel %vm2103, %v3436, 0
    %3440 = vmatprep.subr.bf16.mxu0 0
    %3441 = vmatpush1.bf16.msra.mxu0 %v1903
    %3442 = vmatprep.subr.bf16.mxu0 0
    %3443 = vmatpush1.bf16.msra.mxu0 %v1904
    %3444 = vmatprep.subr.bf16.mxu0 0
    %3445 = vmatpush1.bf16.msra.mxu0 %v1905
    %3446 = vmatprep.subr.bf16.mxu0 0
    %3447 = vmatpush1.bf16.msra.mxu0 %v1906
    %3448 = vmatprep.subr.bf16.mxu0 0
    %3449 = vmatpush1.bf16.msra.mxu0 %v1907
    %3450 = vmatprep.subr.bf16.mxu0 0
    %3451 = vmatpush1.bf16.msra.mxu0 %v1908
    %3452 = vmatprep.subr.bf16.mxu0 0
    %3453 = vmatpush1.bf16.msra.mxu0 %v1909
    %3454 = vmatprep.subr.bf16.mxu0 0
    %3455 = vmatpush1.bf16.msra.mxu0 %v1910
    %3456 = vmatprep.subr.bf16.mxu0 0
    %3457 = vmatpush1.bf16.msra.mxu0 %v1911
    %3458 = vmatprep.subr.bf16.mxu0 0
    %3459 = vmatpush1.bf16.msra.mxu0 %v1912
    %3460 = vmatprep.subr.bf16.mxu0 0
    %3461 = vmatpush1.bf16.msra.mxu0 %v1913
    %3462 = vmatprep.subr.bf16.mxu0 0
    %3463 = vmatpush1.bf16.msra.mxu0 %v1914
    %3464 = vmatprep.subr.bf16.mxu0 0
    %3465 = vmatpush1.bf16.msra.mxu0 %v1915
    %3466 = vmatprep.subr.bf16.mxu0 0
    %3467 = vmatpush1.bf16.msra.mxu0 %v1916
    %3468 = vmatprep.subr.bf16.mxu0 0
    %3469 = vmatpush1.bf16.msra.mxu0 %v1917
    %3470 = vmatprep.subr.bf16.mxu0 0
    %3471 = vmatpush1.bf16.msra.mxu0 %v1918
    %3472 = vmatprep.mubr.bf16.mxu0 %v3425
    %3473 = vmatmul.mubr.bf16.gmra.mrb[0].mxu0 %v3424
    %v3474 = vpop.f32.mrb[0].mxu0
    %v3475 = vadd.f32 0.0, %v3474
    %v3476 = vpop.f32.mrb[0].mxu0
    %v3477 = vpop.f32.mrb[0].mxu0
    %v3478 = vadd.f32 0.0, %v3477
    %v3479 = vpop.f32.mrb[0].mxu0
    %3480 = vdwg.mxu0
    %3481 = vmatprep.subr.bf16.mxu0 0
    %3482 = vmatpush1.bf16.msra.mxu0 %v1919
    %3483 = vmatprep.subr.bf16.mxu0 0
    %3484 = vmatpush1.bf16.msra.mxu0 %v1920
    %3485 = vmatprep.subr.bf16.mxu0 0
    %3486 = vmatpush1.bf16.msra.mxu0 %v1921
    %3487 = vmatprep.subr.bf16.mxu0 0
    %3488 = vmatpush1.bf16.msra.mxu0 %v1922
    %3489 = vmatprep.subr.bf16.mxu0 0
    %3490 = vmatpush1.bf16.msra.mxu0 %v1923
    %3491 = vmatprep.subr.bf16.mxu0 0
    %3492 = vmatpush1.bf16.msra.mxu0 %v1924
    %3493 = vmatprep.subr.bf16.mxu0 0
    %3494 = vmatpush1.bf16.msra.mxu0 %v1925
    %3495 = vmatprep.subr.bf16.mxu0 0
    %3496 = vmatpush1.bf16.msra.mxu0 %v1926
    %3497 = vmatprep.subr.bf16.mxu0 0
    %3498 = vmatpush1.bf16.msra.mxu0 %v1927
    %3499 = vmatprep.subr.bf16.mxu0 0
    %3500 = vmatpush1.bf16.msra.mxu0 %v1928
    %3501 = vmatprep.subr.bf16.mxu0 0
    %3502 = vmatpush1.bf16.msra.mxu0 %v1929
    %3503 = vmatprep.subr.bf16.mxu0 0
    %3504 = vmatpush1.bf16.msra.mxu0 %v1930
    %3505 = vmatprep.subr.bf16.mxu0 0
    %3506 = vmatpush1.bf16.msra.mxu0 %v1931
    %3507 = vmatprep.subr.bf16.mxu0 0
    %3508 = vmatpush1.bf16.msra.mxu0 %v1932
    %3509 = vmatprep.subr.bf16.mxu0 0
    %3510 = vmatpush1.bf16.msra.mxu0 %v1933
    %3511 = vmatprep.subr.bf16.mxu0 0
    %3512 = vmatpush1.bf16.msra.mxu0 %v1934
    %3513 = vmatprep.mubr.bf16.mxu0 %v3427
    %3514 = vmatmul.mubr.bf16.gmra.mrb[0].mxu0 %v3426
    %v3515 = vpop.f32.mrb[0].mxu0
    %v3516 = vadd.f32 %v3475, %v3515
    %v3517 = vpop.f32.mrb[0].mxu0
    %v3518 = vpop.f32.mrb[0].mxu0
    %v3519 = vadd.f32 %v3478, %v3518
    %v3520 = vpop.f32.mrb[0].mxu0
    %3521 = vdwg.mxu0
    %3522 = vmatprep.subr.bf16.mxu0 0
    %3523 = vmatpush1.bf16.msra.mxu0 %v1935
    %3524 = vmatprep.subr.bf16.mxu0 0
    %3525 = vmatpush1.bf16.msra.mxu0 %v1936
    %3526 = vmatprep.subr.bf16.mxu0 0
    %3527 = vmatpush1.bf16.msra.mxu0 %v1937
    %3528 = vmatprep.subr.bf16.mxu0 0
    %3529 = vmatpush1.bf16.msra.mxu0 %v1938
    %3530 = vmatprep.subr.bf16.mxu0 0
    %3531 = vmatpush1.bf16.msra.mxu0 %v1939
    %3532 = vmatprep.subr.bf16.mxu0 0
    %3533 = vmatpush1.bf16.msra.mxu0 %v1940
    %3534 = vmatprep.subr.bf16.mxu0 0
    %3535 = vmatpush1.bf16.msra.mxu0 %v1941
    %3536 = vmatprep.subr.bf16.mxu0 0
    %3537 = vmatpush1.bf16.msra.mxu0 %v1942
    %3538 = vmatprep.subr.bf16.mxu0 0
    %3539 = vmatpush1.bf16.msra.mxu0 %v1943
    %3540 = vmatprep.subr.bf16.mxu0 0
    %3541 = vmatpush1.bf16.msra.mxu0 %v1944
    %3542 = vmatprep.subr.bf16.mxu0 0
    %3543 = vmatpush1.bf16.msra.mxu0 %v1945
    %3544 = vmatprep.subr.bf16.mxu0 0
    %3545 = vmatpush1.bf16.msra.mxu0 %v1946
    %3546 = vmatprep.subr.bf16.mxu0 0
    %3547 = vmatpush1.bf16.msra.mxu0 %v1947
    %3548 = vmatprep.subr.bf16.mxu0 0
    %3549 = vmatpush1.bf16.msra.mxu0 %v1948
    %3550 = vmatprep.subr.bf16.mxu0 0
    %3551 = vmatpush1.bf16.msra.mxu0 %v1949
    %3552 = vmatprep.subr.bf16.mxu0 0
    %3553 = vmatpush1.bf16.msra.mxu0 %v1950
    %3554 = vmatprep.mubr.bf16.mxu0 %v3429
    %3555 = vmatmul.mubr.bf16.gmra.mrb[0].mxu0 %v3428
    %v3556 = vpop.f32.mrb[0].mxu0
    %v3557 = vadd.f32 %v3516, %v3556
    %v3558 = vpop.f32.mrb[0].mxu0
    %v3559 = vpop.f32.mrb[0].mxu0
    %v3560 = vadd.f32 %v3519, %v3559
    %v3561 = vpop.f32.mrb[0].mxu0
    %3562 = vdwg.mxu0
    %3563 = vmatprep.subr.bf16.mxu0 0
    %3564 = vmatpush1.bf16.msra.mxu0 %v1951
    %3565 = vmatprep.subr.bf16.mxu0 0
    %3566 = vmatpush1.bf16.msra.mxu0 %v1952
    %3567 = vmatprep.subr.bf16.mxu0 0
    %3568 = vmatpush1.bf16.msra.mxu0 %v1953
    %3569 = vmatprep.subr.bf16.mxu0 0
    %3570 = vmatpush1.bf16.msra.mxu0 %v1954
    %3571 = vmatprep.subr.bf16.mxu0 0
    %3572 = vmatpush1.bf16.msra.mxu0 %v1955
    %3573 = vmatprep.subr.bf16.mxu0 0
    %3574 = vmatpush1.bf16.msra.mxu0 %v1956
    %3575 = vmatprep.subr.bf16.mxu0 0
    %3576 = vmatpush1.bf16.msra.mxu0 %v1957
    %3577 = vmatprep.subr.bf16.mxu0 0
    %3578 = vmatpush1.bf16.msra.mxu0 %v1958
    %3579 = vmatprep.subr.bf16.mxu0 0
    %3580 = vmatpush1.bf16.msra.mxu0 %v1959
    %3581 = vmatprep.subr.bf16.mxu0 0
    %3582 = vmatpush1.bf16.msra.mxu0 %v1960
    %3583 = vmatprep.subr.bf16.mxu0 0
    %3584 = vmatpush1.bf16.msra.mxu0 %v1961
    %3585 = vmatprep.subr.bf16.mxu0 0
    %3586 = vmatpush1.bf16.msra.mxu0 %v1962
    %3587 = vmatprep.subr.bf16.mxu0 0
    %3588 = vmatpush1.bf16.msra.mxu0 %v1963
    %3589 = vmatprep.subr.bf16.mxu0 0
    %3590 = vmatpush1.bf16.msra.mxu0 %v1964
    %3591 = vmatprep.subr.bf16.mxu0 0
    %3592 = vmatpush1.bf16.msra.mxu0 %v1965
    %3593 = vmatprep.subr.bf16.mxu0 0
    %3594 = vmatpush1.bf16.msra.mxu0 %v1966
    %3595 = vmatprep.mubr.bf16.mxu0 %v3431
    %3596 = vmatmul.mubr.bf16.gmra.mrb[0].mxu0 %v3430
    %v3597 = vpop.f32.mrb[0].mxu0
    %v3598 = vadd.f32 %v3557, %v3597
    %v3599 = vpop.f32.mrb[0].mxu0
    %v3600 = vpop.f32.mrb[0].mxu0
    %v3601 = vadd.f32 %v3560, %v3600
    %v3602 = vpop.f32.mrb[0].mxu0
    %3603 = vdwg.mxu0
    %3604 = vmatprep.subr.bf16.mxu0 0
    %3605 = vmatpush1.bf16.msra.mxu0 %v1967
    %3606 = vmatprep.subr.bf16.mxu0 0
    %3607 = vmatpush1.bf16.msra.mxu0 %v1968
    %3608 = vmatprep.subr.bf16.mxu0 0
    %3609 = vmatpush1.bf16.msra.mxu0 %v1969
    %3610 = vmatprep.subr.bf16.mxu0 0
    %3611 = vmatpush1.bf16.msra.mxu0 %v1970
    %3612 = vmatprep.subr.bf16.mxu0 0
    %3613 = vmatpush1.bf16.msra.mxu0 %v1971
    %3614 = vmatprep.subr.bf16.mxu0 0
    %3615 = vmatpush1.bf16.msra.mxu0 %v1972
    %3616 = vmatprep.subr.bf16.mxu0 0
    %3617 = vmatpush1.bf16.msra.mxu0 %v1973
    %3618 = vmatprep.subr.bf16.mxu0 0
    %3619 = vmatpush1.bf16.msra.mxu0 %v1974
    %3620 = vmatprep.subr.bf16.mxu0 0
    %3621 = vmatpush1.bf16.msra.mxu0 %v1975
    %3622 = vmatprep.subr.bf16.mxu0 0
    %3623 = vmatpush1.bf16.msra.mxu0 %v1976
    %3624 = vmatprep.subr.bf16.mxu0 0
    %3625 = vmatpush1.bf16.msra.mxu0 %v1977
    %3626 = vmatprep.subr.bf16.mxu0 0
    %3627 = vmatpush1.bf16.msra.mxu0 %v1978
    %3628 = vmatprep.subr.bf16.mxu0 0
    %3629 = vmatpush1.bf16.msra.mxu0 %v1979
    %3630 = vmatprep.subr.bf16.mxu0 0
    %3631 = vmatpush1.bf16.msra.mxu0 %v1980
    %3632 = vmatprep.subr.bf16.mxu0 0
    %3633 = vmatpush1.bf16.msra.mxu0 %v1981
    %3634 = vmatprep.subr.bf16.mxu0 0
    %3635 = vmatpush1.bf16.msra.mxu0 %v1982
    %3636 = vmatprep.mubr.bf16.mxu0 %v3433
    %3637 = vmatmul.mubr.bf16.gmra.mrb[0].mxu0 %v3432
    %v3638 = vpop.f32.mrb[0].mxu0
    %v3639 = vadd.f32 %v3598, %v3638
    %v3640 = vpop.f32.mrb[0].mxu0
    %v3641 = vpop.f32.mrb[0].mxu0
    %v3642 = vadd.f32 %v3601, %v3641
    %v3643 = vpop.f32.mrb[0].mxu0
    %3644 = vdwg.mxu0
    %3645 = vmatprep.subr.bf16.mxu0 0
    %3646 = vmatpush1.bf16.msra.mxu0 %v1983
    %3647 = vmatprep.subr.bf16.mxu0 0
    %3648 = vmatpush1.bf16.msra.mxu0 %v1984
    %3649 = vmatprep.subr.bf16.mxu0 0
    %3650 = vmatpush1.bf16.msra.mxu0 %v1985
    %3651 = vmatprep.subr.bf16.mxu0 0
    %3652 = vmatpush1.bf16.msra.mxu0 %v1986
    %3653 = vmatprep.subr.bf16.mxu0 0
    %3654 = vmatpush1.bf16.msra.mxu0 %v1987
    %3655 = vmatprep.subr.bf16.mxu0 0
    %3656 = vmatpush1.bf16.msra.mxu0 %v1988
    %3657 = vmatprep.subr.bf16.mxu0 0
    %3658 = vmatpush1.bf16.msra.mxu0 %v1989
    %3659 = vmatprep.subr.bf16.mxu0 0
    %3660 = vmatpush1.bf16.msra.mxu0 %v1990
    %3661 = vmatprep.subr.bf16.mxu0 0
    %3662 = vmatpush1.bf16.msra.mxu0 %v1991
    %3663 = vmatprep.subr.bf16.mxu0 0
    %3664 = vmatpush1.bf16.msra.mxu0 %v1992
    %3665 = vmatprep.subr.bf16.mxu0 0
    %3666 = vmatpush1.bf16.msra.mxu0 %v1993
    %3667 = vmatprep.subr.bf16.mxu0 0
    %3668 = vmatpush1.bf16.msra.mxu0 %v1994
    %3669 = vmatprep.subr.bf16.mxu0 0
    %3670 = vmatpush1.bf16.msra.mxu0 %v1995
    %3671 = vmatprep.subr.bf16.mxu0 0
    %3672 = vmatpush1.bf16.msra.mxu0 %v1996
    %3673 = vmatprep.subr.bf16.mxu0 0
    %3674 = vmatpush1.bf16.msra.mxu0 %v1997
    %3675 = vmatprep.subr.bf16.mxu0 0
    %3676 = vmatpush1.bf16.msra.mxu0 %v1998
    %3677 = vmatprep.mubr.bf16.mxu0 %v3435
    %3678 = vmatmul.mubr.bf16.gmra.mrb[0].mxu0 %v3434
    %v3679 = vpop.f32.mrb[0].mxu0
    %v3680 = vadd.f32 %v3639, %v3679
    %v3681 = vpop.f32.mrb[0].mxu0
    %v3682 = vpop.f32.mrb[0].mxu0
    %v3683 = vadd.f32 %v3642, %v3682
    %v3684 = vpop.f32.mrb[0].mxu0
    %3685 = vdwg.mxu0
    %3686 = vmatprep.subr.bf16.mxu0 0
    %3687 = vmatpush1.bf16.msra.mxu0 %v1999
    %3688 = vmatprep.subr.bf16.mxu0 0
    %3689 = vmatpush1.bf16.msra.mxu0 %v2000
    %3690 = vmatprep.subr.bf16.mxu0 0
    %3691 = vmatpush1.bf16.msra.mxu0 %v2001
    %3692 = vmatprep.subr.bf16.mxu0 0
    %3693 = vmatpush1.bf16.msra.mxu0 %v2002
    %3694 = vmatprep.subr.bf16.mxu0 0
    %3695 = vmatpush1.bf16.msra.mxu0 0
    %3696 = vmatprep.subr.bf16.mxu0 0
    %3697 = vmatpush1.bf16.msra.mxu0 0
    %3698 = vmatprep.subr.bf16.mxu0 0
    %3699 = vmatpush1.bf16.msra.mxu0 0
    %3700 = vmatprep.subr.bf16.mxu0 0
    %3701 = vmatpush1.bf16.msra.mxu0 0
    %3702 = vmatprep.subr.bf16.mxu0 0
    %3703 = vmatpush1.bf16.msra.mxu0 0
    %3704 = vmatprep.subr.bf16.mxu0 0
    %3705 = vmatpush1.bf16.msra.mxu0 0
    %3706 = vmatprep.subr.bf16.mxu0 0
    %3707 = vmatpush1.bf16.msra.mxu0 0
    %3708 = vmatprep.subr.bf16.mxu0 0
    %3709 = vmatpush1.bf16.msra.mxu0 0
    %3710 = vmatprep.subr.bf16.mxu0 0
    %3711 = vmatpush1.bf16.msra.mxu0 0
    %3712 = vmatprep.subr.bf16.mxu0 0
    %3713 = vmatpush1.bf16.msra.mxu0 0
    %3714 = vmatprep.subr.bf16.mxu0 0
    %3715 = vmatpush1.bf16.msra.mxu0 0
    %3716 = vmatprep.subr.bf16.mxu0 0
    %3717 = vmatpush1.bf16.msra.mxu0 0
    %3718 = vmatprep.mubr.bf16.mxu0 0
    %3719 = vmatmul.mubr.bf16.gmra.mrb[0].mxu0 %v3438
    %v3720 = vpop.f32.mrb[0].mxu0
    %v3721 = vadd.f32 %v3680, %v3720
    %v3722 = vpop.f32.mrb[0].mxu0
    %v3723 = vpop.f32.mrb[0].mxu0
    %v3724 = vadd.f32 %v3683, %v3723
    %v3725 = vpop.f32.mrb[0].mxu0
    %3726 = vdwg.mxu0
    %v3727 = vmul.f32 %v3721, 0.1
    %v3728 = vmul.f32 %v3724, 0.1
    %v3729 = vadd.f32 %v3727, %v2551
    %v3730 = vadd.f32 %v3728, %v2554
    %v3732 = vsel %vm618, %v3729, 0
    %v3735 = vsel %vm618, %v3730, 0
    %3737 = vmatprep.subr.mxu0 0.0
    %3738 = vmatpush1.msra.mxu0 %v354
    %3739 = vmatprep.subr.mxu0 0.0
    %3740 = vmatpush1.msra.mxu0 %v355
    %3741 = vmatprep.subr.mxu0 0.0
    %3742 = vmatpush1.msra.mxu0 %v356
    %3743 = vmatprep.subr.mxu0 0.0
    %3744 = vmatpush1.msra.mxu0 %v357
    %3745 = vmatprep.subr.mxu0 0.0
    %3746 = vmatpush1.msra.mxu0 %v358
    %3747 = vmatprep.subr.mxu0 0.0
    %3748 = vmatpush1.msra.mxu0 0.0
    %3749 = vmatprep.subr.mxu0 0.0
    %3750 = vmatpush1.msra.mxu0 0.0
    %3751 = vmatprep.subr.mxu0 0.0
    %3752 = vmatpush1.msra.mxu0 0.0
    %3753 = vmatprep.subr.mxu0 0.0
    %3754 = vmatpush1.msra.mxu0 0.0
    %3755 = vmatprep.subr.mxu0 0.0
    %3756 = vmatpush1.msra.mxu0 0.0
    %3757 = vmatprep.subr.mxu0 0.0
    %3758 = vmatpush1.msra.mxu0 0.0
    %3759 = vmatprep.subr.mxu0 0.0
    %3760 = vmatpush1.msra.mxu0 0.0
    %3761 = vmatprep.subr.mxu0 0.0
    %3762 = vmatpush1.msra.mxu0 0.0
    %3763 = vmatprep.subr.mxu0 0.0
    %3764 = vmatpush1.msra.mxu0 0.0
    %3765 = vmatprep.subr.mxu0 0.0
    %3766 = vmatpush1.msra.mxu0 0.0
    %3767 = vmatprep.subr.mxu0 0.0
    %3768 = vmatpush1.msra.mxu0 0.0
    %3769 = vmatprep.subr.mxu0 0.0
    %3770 = vmatpush1.msra.mxu0 0.0
    %3771 = vmatprep.subr.mxu0 0.0
    %3772 = vmatpush1.msra.mxu0 0.0
    %3773 = vmatprep.subr.mxu0 0.0
    %3774 = vmatpush1.msra.mxu0 0.0
    %3775 = vmatprep.subr.mxu0 0.0
    %3776 = vmatpush1.msra.mxu0 0.0
    %3777 = vmatprep.subr.mxu0 0.0
    %3778 = vmatpush1.msra.mxu0 0.0
    %3779 = vmatprep.subr.mxu0 0.0
    %3780 = vmatpush1.msra.mxu0 0.0
    %3781 = vmatprep.subr.mxu0 0.0
    %3782 = vmatpush1.msra.mxu0 0.0
    %3783 = vmatprep.subr.mxu0 0.0
    %3784 = vmatpush1.msra.mxu0 0.0
    %3785 = vmatprep.subr.mxu0 0.0
    %3786 = vmatpush1.msra.mxu0 0.0
    %3787 = vmatprep.subr.mxu0 0.0
    %3788 = vmatpush1.msra.mxu0 0.0
    %3789 = vmatprep.subr.mxu0 0.0
    %3790 = vmatpush1.msra.mxu0 0.0
    %3791 = vmatprep.subr.mxu0 0.0
    %3792 = vmatpush1.msra.mxu0 0.0
    %3793 = vmatprep.subr.mxu0 0.0
    %3794 = vmatpush1.msra.mxu0 0.0
    %3795 = vmatprep.subr.mxu0 0.0
    %3796 = vmatpush1.msra.mxu0 0.0
    %3797 = vmatprep.subr.mxu0 0.0
    %3798 = vmatpush1.msra.mxu0 0.0
    %3799 = vmatprep.subr.mxu0 0.0
    %3800 = vmatpush1.msra.mxu0 0.0
    %3801 = vmatprep.mubr.f32.mxu0 0.0
    %3802 = vmatmul.mubr.f32.gmra.mrb[0].mxu0 %v3732
    %v3803 = vpop.f32.mrb[0].mxu0
    %v3804 = vadd.f32 0.0, %v3803
    %v3805 = vpop.f32.mrb[0].mxu0
    %3806 = vmatprep.mubr.f32.mxu0 0.0
    %3807 = vmatmul.mubr.f32.gmra.mrb[0].mxu0 %v3735
    %v3808 = vpop.f32.mrb[0].mxu0
    %v3809 = vadd.f32 0.0, %v3808
    %v3810 = vpop.f32.mrb[0].mxu0
    %3811 = vdwg.mxu0
    %v3812 = vxor.u32 %v3804, 2147483648
    %v3813 = vxor.u32 %v3809, 2147483648
    %v3814 = vmul.f32 %v3812, 1.442695
    %v3815 = vpow.pop %v3814
    %v3816 = vmul.f32 %v3813, 1.442695
    %v3817 = vpow.pop %v3816
    %v3818 = vadd.f32 %v3815, 1.0
    %v3819 = vadd.f32 %v3817, 1.0
    %v3820 = vrcp.pop %v3818
    %v3821 = vmul.f32 1.0, %v3820
    %v3822 = vrcp.pop %v3819
    %v3823 = vmul.f32 1.0, %v3822
    %v3824 = vmul.f32 %v3821, %v3729
    %v3825 = vmul.f32 %v3823, %v3730
    %v3826 = vpack.c.bf16 %v3825, %v3824
    %v3827 = vld [vmem:[%s9] sm:$0xf]
    %v3828 = vld [vmem:[%s9 + $0x4] sm:$0xf]
    %v3829 = vld [vmem:[%s9 + $0x8] sm:$0xf]
    %v3830 = vld [vmem:[%s9 + $0xc] sm:$0xf]
    %v3831 = vld [vmem:[%s3] sm:$0xff]
    %v3832 = vld [vmem:[%s3 + $0x8] sm:$0xff]
    %v3837 = vunpack.c.l.b16 %v3827
    %v3838 = vunpack.c.l.b16 %v3828
    %v3839 = vunpack.c.l.b16 %v3829
    %v3840 = vunpack.c.l.b16 %v3830
    %v3841 = vpack.c.b16 %v3838, %v3837
    %v3842 = vpack.c.b16 %v3840, %v3839
    %v3846 = vsel %vm2512, %v3826, 0
    %3848 = vmatprep.subr.bf16.mxu0 0
    %3849 = vmatpush1.bf16.msra.mxu0 %v3841
    %3850 = vmatprep.subr.bf16.mxu0 0
    %3851 = vmatpush1.bf16.msra.mxu0 %v3842
    %3852 = vmatprep.subr.bf16.mxu0 0
    %3853 = vmatpush1.bf16.msra.mxu0 0
    %3854 = vmatprep.subr.bf16.mxu0 0
    %3855 = vmatpush1.bf16.msra.mxu0 0
    %3856 = vmatprep.subr.bf16.mxu0 0
    %3857 = vmatpush1.bf16.msra.mxu0 0
    %3858 = vmatprep.subr.bf16.mxu0 0
    %3859 = vmatpush1.bf16.msra.mxu0 0
    %3860 = vmatprep.subr.bf16.mxu0 0
    %3861 = vmatpush1.bf16.msra.mxu0 0
    %3862 = vmatprep.subr.bf16.mxu0 0
    %3863 = vmatpush1.bf16.msra.mxu0 0
    %3864 = vmatprep.subr.bf16.mxu0 0
    %3865 = vmatpush1.bf16.msra.mxu0 0
    %3866 = vmatprep.subr.bf16.mxu0 0
    %3867 = vmatpush1.bf16.msra.mxu0 0
    %3868 = vmatprep.subr.bf16.mxu0 0
    %3869 = vmatpush1.bf16.msra.mxu0 0
    %3870 = vmatprep.subr.bf16.mxu0 0
    %3871 = vmatpush1.bf16.msra.mxu0 0
    %3872 = vmatprep.subr.bf16.mxu0 0
    %3873 = vmatpush1.bf16.msra.mxu0 0
    %3874 = vmatprep.subr.bf16.mxu0 0
    %3875 = vmatpush1.bf16.msra.mxu0 0
    %3876 = vmatprep.subr.bf16.mxu0 0
    %3877 = vmatpush1.bf16.msra.mxu0 0
    %3878 = vmatprep.subr.bf16.mxu0 0
    %3879 = vmatpush1.bf16.msra.mxu0 0
    %3880 = vmatprep.mubr.bf16.mxu0 0
    %3881 = vmatmul.mubr.bf16.gmra.mrb[0].mxu0 %v3846
    %v3882 = vpop.f32.mrb[0].mxu0
    %v3883 = vadd.f32 %v3831, %v3882
    %v3884 = vpop.f32.mrb[0].mxu0
    %v3885 = vpop.f32.mrb[0].mxu0
    %v3886 = vadd.f32 %v3832, %v3885
    %v3887 = vpop.f32.mrb[0].mxu0
    %3888 = vdwg.mxu0
    %v3889 = vpack.c.bf16 %v3886, %v3883
    %v3890 = vld [vmem:[#allocation6] sm:$0xff]
    %v3891 = vld [vmem:[#allocation6 + $0x8] sm:$0xff]
    %v3892 = vld [vmem:[#allocation6 + $0x10] sm:$0xff]
    %v3893 = vld [vmem:[#allocation6 + $0x18] sm:$0xff]
    %v3894 = vld [vmem:[#allocation6 + $0x20] sm:$0xff]
    %v3895 = vld [vmem:[#allocation6 + $0x28] sm:$0xff]
    %v3896 = vld [vmem:[#allocation6 + $0x30] sm:$0xf]
    %v3897 = vld [vmem:[#allocation6 + $0x34] sm:$0xff]
    %v3898 = vld [vmem:[#allocation6 + $0x3c] sm:$0xff]
    %v3899 = vld [vmem:[#allocation6 + $0x44] sm:$0xff]
    %v3900 = vld [vmem:[#allocation6 + $0x4c] sm:$0xff]
    %v3901 = vld [vmem:[#allocation6 + $0x54] sm:$0xff]
    %v3902 = vld [vmem:[#allocation6 + $0x5c] sm:$0xff]
    %v3903 = vld [vmem:[#allocation6 + $0x64] sm:$0xf]
    %v3904 = vld [vmem:[#allocation6 + $0x68] sm:$0xff]
    %v3905 = vld [vmem:[#allocation6 + $0x70] sm:$0xff]
    %v3906 = vld [vmem:[#allocation6 + $0x78] sm:$0xff]
    %v3907 = vld [vmem:[#allocation6 + $0x80] sm:$0xff]
    %v3908 = vld [vmem:[#allocation6 + $0x88] sm:$0xff]
    %v3909 = vld [vmem:[#allocation6 + $0x90] sm:$0xff]
    %v3910 = vld [vmem:[#allocation6 + $0x98] sm:$0xf]
    %v3911 = vld [vmem:[#allocation6 + $0x9c] sm:$0xff]
    %v3912 = vld [vmem:[#allocation6 + $0xa4] sm:$0xff]
    %v3913 = vld [vmem:[#allocation6 + $0xac] sm:$0xff]
    %v3914 = vld [vmem:[#allocation6 + $0xb4] sm:$0xff]
    %v3915 = vld [vmem:[#allocation6 + $0xbc] sm:$0xff]
    %v3916 = vld [vmem:[#allocation6 + $0xc4] sm:$0xff]
    %v3917 = vld [vmem:[#allocation6 + $0xcc] sm:$0xf]
    %v3918 = vld [vmem:[#allocation6 + $0xd0] sm:$0xff]
    %v3919 = vld [vmem:[#allocation6 + $0xd8] sm:$0xff]
    %v3920 = vld [vmem:[#allocation6 + $0xe0] sm:$0xff]
    %v3921 = vld [vmem:[#allocation6 + $0xe8] sm:$0xff]
    %v3922 = vld [vmem:[#allocation6 + $0xf0] sm:$0xff]
    %v3923 = vld [vmem:[#allocation6 + $0xf8] sm:$0xff]
    %v3924 = vld [vmem:[#allocation6 + $0x100] sm:$0xf]
    %v3960 = vunpack.c.l.b16 %v3890
    %v3961 = vunpack.c.h.b16 %v3890
    %v3962 = vunpack.c.l.b16 %v3891
    %v3963 = vunpack.c.h.b16 %v3891
    %v3964 = vunpack.c.l.b16 %v3892
    %v3965 = vunpack.c.h.b16 %v3892
    %v3966 = vunpack.c.l.b16 %v3893
    %v3967 = vunpack.c.h.b16 %v3893
    %v3968 = vunpack.c.l.b16 %v3894
    %v3969 = vunpack.c.h.b16 %v3894
    %v3970 = vunpack.c.l.b16 %v3895
    %v3971 = vunpack.c.h.b16 %v3895
    %v3972 = vunpack.c.l.b16 %v3896
    %v3973 = vunpack.c.l.b16 %v3897
    %v3974 = vunpack.c.h.b16 %v3897
    %v3975 = vunpack.c.l.b16 %v3898
    %v3976 = vunpack.c.h.b16 %v3898
    %v3977 = vunpack.c.l.b16 %v3899
    %v3978 = vunpack.c.h.b16 %v3899
    %v3979 = vunpack.c.l.b16 %v3900
    %v3980 = vunpack.c.h.b16 %v3900
    %v3981 = vunpack.c.l.b16 %v3901
    %v3982 = vunpack.c.h.b16 %v3901
    %v3983 = vunpack.c.l.b16 %v3902
    %v3984 = vunpack.c.h.b16 %v3902
    %v3985 = vunpack.c.l.b16 %v3903
    %v3986 = vunpack.c.l.b16 %v3904
    %v3987 = vunpack.c.h.b16 %v3904
    %v3988 = vunpack.c.l.b16 %v3905
    %v3989 = vunpack.c.h.b16 %v3905
    %v3990 = vunpack.c.l.b16 %v3906
    %v3991 = vunpack.c.h.b16 %v3906
    %v3992 = vunpack.c.l.b16 %v3907
    %v3993 = vunpack.c.h.b16 %v3907
    %v3994 = vunpack.c.l.b16 %v3908
    %v3995 = vunpack.c.h.b16 %v3908
    %v3996 = vunpack.c.l.b16 %v3909
    %v3997 = vunpack.c.h.b16 %v3909
    %v3998 = vunpack.c.l.b16 %v3910
    %v3999 = vunpack.c.l.b16 %v3911
    %v4000 = vunpack.c.h.b16 %v3911
    %v4001 = vunpack.c.l.b16 %v3912
    %v4002 = vunpack.c.h.b16 %v3912
    %v4003 = vunpack.c.l.b16 %v3913
    %v4004 = vunpack.c.h.b16 %v3913
    %v4005 = vunpack.c.l.b16 %v3914
    %v4006 = vunpack.c.h.b16 %v3914
    %v4007 = vunpack.c.l.b16 %v3915
    %v4008 = vunpack.c.h.b16 %v3915
    %v4009 = vunpack.c.l.b16 %v3916
    %v4010 = vunpack.c.h.b16 %v3916
    %v4011 = vunpack.c.l.b16 %v3917
    %v4012 = vunpack.c.l.b16 %v3918
    %v4013 = vunpack.c.h.b16 %v3918
    %v4014 = vunpack.c.l.b16 %v3919
    %v4015 = vunpack.c.h.b16 %v3919
    %v4016 = vunpack.c.l.b16 %v3920
    %v4017 = vunpack.c.h.b16 %v3920
    %v4018 = vunpack.c.l.b16 %v3921
    %v4019 = vunpack.c.h.b16 %v3921
    %v4020 = vunpack.c.l.b16 %v3922
    %v4021 = vunpack.c.h.b16 %v3922
    %v4022 = vunpack.c.l.b16 %v3923
    %v4023 = vunpack.c.h.b16 %v3923
    %v4024 = vunpack.c.l.b16 %v3924
    %v4025 = vpack.c.b16 %v3973, %v3960
    %v4026 = vpack.c.b16 %v3974, %v3961
    %v4027 = vpack.c.b16 %v3975, %v3962
    %v4028 = vpack.c.b16 %v3976, %v3963
    %v4029 = vpack.c.b16 %v3977, %v3964
    %v4030 = vpack.c.b16 %v3978, %v3965
    %v4031 = vpack.c.b16 %v3979, %v3966
    %v4032 = vpack.c.b16 %v3980, %v3967
    %v4033 = vpack.c.b16 %v3981, %v3968
    %v4034 = vpack.c.b16 %v3982, %v3969
    %v4035 = vpack.c.b16 %v3983, %v3970
    %v4036 = vpack.c.b16 %v3984, %v3971
    %v4037 = vpack.c.b16 %v3985, %v3972
    %v4038 = vpack.c.b16 %v3999, %v3986
    %v4039 = vpack.c.b16 %v4000, %v3987
    %v4040 = vpack.c.b16 %v4001, %v3988
    %v4041 = vpack.c.b16 %v4002, %v3989
    %v4042 = vpack.c.b16 %v4003, %v3990
    %v4043 = vpack.c.b16 %v4004, %v3991
    %v4044 = vpack.c.b16 %v4005, %v3992
    %v4045 = vpack.c.b16 %v4006, %v3993
    %v4046 = vpack.c.b16 %v4007, %v3994
    %v4047 = vpack.c.b16 %v4008, %v3995
    %v4048 = vpack.c.b16 %v4009, %v3996
    %v4049 = vpack.c.b16 %v4010, %v3997
    %v4050 = vpack.c.b16 %v4011, %v3998
    %v4051 = vpack.c.b16 %v4012, %v4012
    %v4052 = vpack.c.b16 %v4013, %v4013
    %v4053 = vpack.c.b16 %v4014, %v4014
    %v4054 = vpack.c.b16 %v4015, %v4015
    %v4055 = vpack.c.b16 %v4016, %v4016
    %v4056 = vpack.c.b16 %v4017, %v4017
    %v4057 = vpack.c.b16 %v4018, %v4018
    %v4058 = vpack.c.b16 %v4019, %v4019
    %v4059 = vpack.c.b16 %v4020, %v4020
    %v4060 = vpack.c.b16 %v4021, %v4021
    %v4061 = vpack.c.b16 %v4022, %v4022
    %v4062 = vpack.c.b16 %v4023, %v4023
    %v4063 = vpack.c.b16 %v4024, %v4024
    %v4091 = vsel %vm618, %v3889, 0
    %v4094 = vsel %vm622, %v4051, 0
    %v4097 = vsel %vm622, %v4052, 0
    %v4100 = vsel %vm622, %v4053, 0
    %v4103 = vsel %vm622, %v4054, 0
    %v4106 = vsel %vm622, %v4055, 0
    %v4109 = vsel %vm622, %v4056, 0
    %v4112 = vsel %vm622, %v4057, 0
    %v4115 = vsel %vm622, %v4058, 0
    %v4118 = vsel %vm622, %v4059, 0
    %v4121 = vsel %vm622, %v4060, 0
    %v4124 = vsel %vm622, %v4061, 0
    %v4127 = vsel %vm622, %v4062, 0
    %v4130 = vsel %vm622, %v4063, 0
    %4132 = vmatprep.subr.bf16.mxu0 %v4026
    %4133 = vmatpush1.bf16.msra.mxu0 %v4025
    %4134 = vmatprep.subr.bf16.mxu0 %v4039
    %4135 = vmatpush1.bf16.msra.mxu0 %v4038
    %4136 = vmatprep.subr.bf16.mxu0 %v4097
    %4137 = vmatpush1.bf16.msra.mxu0 %v4094
    %4138 = vmatprep.subr.bf16.mxu0 0
    %4139 = vmatpush1.bf16.msra.mxu0 0
    %4140 = vmatprep.subr.bf16.mxu0 0
    %4141 = vmatpush1.bf16.msra.mxu0 0
    %4142 = vmatprep.subr.bf16.mxu0 0
    %4143 = vmatpush1.bf16.msra.mxu0 0
    %4144 = vmatprep.subr.bf16.mxu0 0
    %4145 = vmatpush1.bf16.msra.mxu0 0
    %4146 = vmatprep.subr.bf16.mxu0 0
    %4147 = vmatpush1.bf16.msra.mxu0 0
    %4148 = vmatprep.subr.bf16.mxu0 0
    %4149 = vmatpush1.bf16.msra.mxu0 0
    %4150 = vmatprep.subr.bf16.mxu0 0
    %4151 = vmatpush1.bf16.msra.mxu0 0
    %4152 = vmatprep.subr.bf16.mxu0 0
    %4153 = vmatpush1.bf16.msra.mxu0 0
    %4154 = vmatprep.subr.bf16.mxu0 0
    %4155 = vmatpush1.bf16.msra.mxu0 0
    %4156 = vmatprep.subr.bf16.mxu0 0
    %4157 = vmatpush1.bf16.msra.mxu0 0
    %4158 = vmatprep.subr.bf16.mxu0 0
    %4159 = vmatpush1.bf16.msra.mxu0 0
    %4160 = vmatprep.subr.bf16.mxu0 0
    %4161 = vmatpush1.bf16.msra.mxu0 0
    %4162 = vmatprep.subr.bf16.mxu0 0
    %4163 = vmatpush1.bf16.msra.mxu0 0
    %4164 = vmatprep.mubr.bf16.mxu0 0
    %4165 = vmatmul.mubr.bf16.gmra.mrb[0].mxu0 %v4091
    %v4166 = vpop.f32.mrb[0].mxu0
    %v4167 = vadd.f32 0.0, %v4166
    %v4168 = vpop.f32.mrb[0].mxu0
    %v4169 = vadd.f32 0.0, %v4168
    %v4170 = vpop.f32.mrb[0].mxu0
    %v4171 = vadd.f32 0.0, %v4170
    %v4172 = vpop.f32.mrb[0].mxu0
    %v4173 = vadd.f32 0.0, %v4172
    %4174 = vdwg.mxu0
    %4175 = vmatprep.subr.bf16.mxu0 %v4028
    %4176 = vmatpush1.bf16.msra.mxu0 %v4027
    %4177 = vmatprep.subr.bf16.mxu0 %v4041
    %4178 = vmatpush1.bf16.msra.mxu0 %v4040
    %4179 = vmatprep.subr.bf16.mxu0 %v4103
    %4180 = vmatpush1.bf16.msra.mxu0 %v4100
    %4181 = vmatprep.subr.bf16.mxu0 0
    %4182 = vmatpush1.bf16.msra.mxu0 0
    %4183 = vmatprep.subr.bf16.mxu0 0
    %4184 = vmatpush1.bf16.msra.mxu0 0
    %4185 = vmatprep.subr.bf16.mxu0 0
    %4186 = vmatpush1.bf16.msra.mxu0 0
    %4187 = vmatprep.subr.bf16.mxu0 0
    %4188 = vmatpush1.bf16.msra.mxu0 0
    %4189 = vmatprep.subr.bf16.mxu0 0
    %4190 = vmatpush1.bf16.msra.mxu0 0
    %4191 = vmatprep.subr.bf16.mxu0 0
    %4192 = vmatpush1.bf16.msra.mxu0 0
    %4193 = vmatprep.subr.bf16.mxu0 0
    %4194 = vmatpush1.bf16.msra.mxu0 0
    %4195 = vmatprep.subr.bf16.mxu0 0
    %4196 = vmatpush1.bf16.msra.mxu0 0
    %4197 = vmatprep.subr.bf16.mxu0 0
    %4198 = vmatpush1.bf16.msra.mxu0 0
    %4199 = vmatprep.subr.bf16.mxu0 0
    %4200 = vmatpush1.bf16.msra.mxu0 0
    %4201 = vmatprep.subr.bf16.mxu0 0
    %4202 = vmatpush1.bf16.msra.mxu0 0
    %4203 = vmatprep.subr.bf16.mxu0 0
    %4204 = vmatpush1.bf16.msra.mxu0 0
    %4205 = vmatprep.subr.bf16.mxu0 0
    %4206 = vmatpush1.bf16.msra.mxu0 0
    %4207 = vmatprep.mubr.bf16.mxu0 0
    %4208 = vmatmul.mubr.bf16.gmra.mrb[0].mxu0 %v4091
    %v4209 = vpop.f32.mrb[0].mxu0
    %v4210 = vadd.f32 0.0, %v4209
    %v4211 = vpop.f32.mrb[0].mxu0
    %v4212 = vadd.f32 0.0, %v4211
    %v4213 = vpop.f32.mrb[0].mxu0
    %v4214 = vadd.f32 0.0, %v4213
    %v4215 = vpop.f32.mrb[0].mxu0
    %v4216 = vadd.f32 0.0, %v4215
    %4217 = vdwg.mxu0
    %4218 = vmatprep.subr.bf16.mxu0 %v4030
    %4219 = vmatpush1.bf16.msra.mxu0 %v4029
    %4220 = vmatprep.subr.bf16.mxu0 %v4043
    %4221 = vmatpush1.bf16.msra.mxu0 %v4042
    %4222 = vmatprep.subr.bf16.mxu0 %v4109
    %4223 = vmatpush1.bf16.msra.mxu0 %v4106
    %4224 = vmatprep.subr.bf16.mxu0 0
    %4225 = vmatpush1.bf16.msra.mxu0 0
    %4226 = vmatprep.subr.bf16.mxu0 0
    %4227 = vmatpush1.bf16.msra.mxu0 0
    %4228 = vmatprep.subr.bf16.mxu0 0
    %4229 = vmatpush1.bf16.msra.mxu0 0
    %4230 = vmatprep.subr.bf16.mxu0 0
    %4231 = vmatpush1.bf16.msra.mxu0 0
    %4232 = vmatprep.subr.bf16.mxu0 0
    %4233 = vmatpush1.bf16.msra.mxu0 0
    %4234 = vmatprep.subr.bf16.mxu0 0
    %4235 = vmatpush1.bf16.msra.mxu0 0
    %4236 = vmatprep.subr.bf16.mxu0 0
    %4237 = vmatpush1.bf16.msra.mxu0 0
    %4238 = vmatprep.subr.bf16.mxu0 0
    %4239 = vmatpush1.bf16.msra.mxu0 0
    %4240 = vmatprep.subr.bf16.mxu0 0
    %4241 = vmatpush1.bf16.msra.mxu0 0
    %4242 = vmatprep.subr.bf16.mxu0 0
    %4243 = vmatpush1.bf16.msra.mxu0 0
    %4244 = vmatprep.subr.bf16.mxu0 0
    %4245 = vmatpush1.bf16.msra.mxu0 0
    %4246 = vmatprep.subr.bf16.mxu0 0
    %4247 = vmatpush1.bf16.msra.mxu0 0
    %4248 = vmatprep.subr.bf16.mxu0 0
    %4249 = vmatpush1.bf16.msra.mxu0 0
    %4250 = vmatprep.mubr.bf16.mxu0 0
    %4251 = vmatmul.mubr.bf16.gmra.mrb[0].mxu0 %v4091
    %v4252 = vpop.f32.mrb[0].mxu0
    %v4253 = vadd.f32 0.0, %v4252
    %v4254 = vpop.f32.mrb[0].mxu0
    %v4255 = vadd.f32 0.0, %v4254
    %v4256 = vpop.f32.mrb[0].mxu0
    %v4257 = vadd.f32 0.0, %v4256
    %v4258 = vpop.f32.mrb[0].mxu0
    %v4259 = vadd.f32 0.0, %v4258
    %4260 = vdwg.mxu0
    %4261 = vmatprep.subr.bf16.mxu0 %v4032
    %4262 = vmatpush1.bf16.msra.mxu0 %v4031
    %4263 = vmatprep.subr.bf16.mxu0 %v4045
    %4264 = vmatpush1.bf16.msra.mxu0 %v4044
    %4265 = vmatprep.subr.bf16.mxu0 %v4115
    %4266 = vmatpush1.bf16.msra.mxu0 %v4112
    %4267 = vmatprep.subr.bf16.mxu0 0
    %4268 = vmatpush1.bf16.msra.mxu0 0
    %4269 = vmatprep.subr.bf16.mxu0 0
    %4270 = vmatpush1.bf16.msra.mxu0 0
    %4271 = vmatprep.subr.bf16.mxu0 0
    %4272 = vmatpush1.bf16.msra.mxu0 0
    %4273 = vmatprep.subr.bf16.mxu0 0
    %4274 = vmatpush1.bf16.msra.mxu0 0
    %4275 = vmatprep.subr.bf16.mxu0 0
    %4276 = vmatpush1.bf16.msra.mxu0 0
    %4277 = vmatprep.subr.bf16.mxu0 0
    %4278 = vmatpush1.bf16.msra.mxu0 0
    %4279 = vmatprep.subr.bf16.mxu0 0
    %4280 = vmatpush1.bf16.msra.mxu0 0
    %4281 = vmatprep.subr.bf16.mxu0 0
    %4282 = vmatpush1.bf16.msra.mxu0 0
    %4283 = vmatprep.subr.bf16.mxu0 0
    %4284 = vmatpush1.bf16.msra.mxu0 0
    %4285 = vmatprep.subr.bf16.mxu0 0
    %4286 = vmatpush1.bf16.msra.mxu0 0
    %4287 = vmatprep.subr.bf16.mxu0 0
    %4288 = vmatpush1.bf16.msra.mxu0 0
    %4289 = vmatprep.subr.bf16.mxu0 0
    %4290 = vmatpush1.bf16.msra.mxu0 0
    %4291 = vmatprep.subr.bf16.mxu0 0
    %4292 = vmatpush1.bf16.msra.mxu0 0
    %4293 = vmatprep.mubr.bf16.mxu0 0
    %4294 = vmatmul.mubr.bf16.gmra.mrb[0].mxu0 %v4091
    %v4295 = vpop.f32.mrb[0].mxu0
    %v4296 = vadd.f32 0.0, %v4295
    %v4297 = vpop.f32.mrb[0].mxu0
    %v4298 = vadd.f32 0.0, %v4297
    %v4299 = vpop.f32.mrb[0].mxu0
    %v4300 = vadd.f32 0.0, %v4299
    %v4301 = vpop.f32.mrb[0].mxu0
    %v4302 = vadd.f32 0.0, %v4301
    %4303 = vdwg.mxu0
    %4304 = vmatprep.subr.bf16.mxu0 %v4034
    %4305 = vmatpush1.bf16.msra.mxu0 %v4033
    %4306 = vmatprep.subr.bf16.mxu0 %v4047
    %4307 = vmatpush1.bf16.msra.mxu0 %v4046
    %4308 = vmatprep.subr.bf16.mxu0 %v4121
    %4309 = vmatpush1.bf16.msra.mxu0 %v4118
    %4310 = vmatprep.subr.bf16.mxu0 0
    %4311 = vmatpush1.bf16.msra.mxu0 0
    %4312 = vmatprep.subr.bf16.mxu0 0
    %4313 = vmatpush1.bf16.msra.mxu0 0
    %4314 = vmatprep.subr.bf16.mxu0 0
    %4315 = vmatpush1.bf16.msra.mxu0 0
    %4316 = vmatprep.subr.bf16.mxu0 0
    %4317 = vmatpush1.bf16.msra.mxu0 0
    %4318 = vmatprep.subr.bf16.mxu0 0
    %4319 = vmatpush1.bf16.msra.mxu0 0
    %4320 = vmatprep.subr.bf16.mxu0 0
    %4321 = vmatpush1.bf16.msra.mxu0 0
    %4322 = vmatprep.subr.bf16.mxu0 0
    %4323 = vmatpush1.bf16.msra.mxu0 0
    %4324 = vmatprep.subr.bf16.mxu0 0
    %4325 = vmatpush1.bf16.msra.mxu0 0
    %4326 = vmatprep.subr.bf16.mxu0 0
    %4327 = vmatpush1.bf16.msra.mxu0 0
    %4328 = vmatprep.subr.bf16.mxu0 0
    %4329 = vmatpush1.bf16.msra.mxu0 0
    %4330 = vmatprep.subr.bf16.mxu0 0
    %4331 = vmatpush1.bf16.msra.mxu0 0
    %4332 = vmatprep.subr.bf16.mxu0 0
    %4333 = vmatpush1.bf16.msra.mxu0 0
    %4334 = vmatprep.subr.bf16.mxu0 0
    %4335 = vmatpush1.bf16.msra.mxu0 0
    %4336 = vmatprep.mubr.bf16.mxu0 0
    %4337 = vmatmul.mubr.bf16.gmra.mrb[0].mxu0 %v4091
    %v4338 = vpop.f32.mrb[0].mxu0
    %v4339 = vadd.f32 0.0, %v4338
    %v4340 = vpop.f32.mrb[0].mxu0
    %v4341 = vadd.f32 0.0, %v4340
    %v4342 = vpop.f32.mrb[0].mxu0
    %v4343 = vadd.f32 0.0, %v4342
    %v4344 = vpop.f32.mrb[0].mxu0
    %v4345 = vadd.f32 0.0, %v4344
    %4346 = vdwg.mxu0
    %4347 = vmatprep.subr.bf16.mxu0 %v4036
    %4348 = vmatpush1.bf16.msra.mxu0 %v4035
    %4349 = vmatprep.subr.bf16.mxu0 %v4049
    %4350 = vmatpush1.bf16.msra.mxu0 %v4048
    %4351 = vmatprep.subr.bf16.mxu0 %v4127
    %4352 = vmatpush1.bf16.msra.mxu0 %v4124
    %4353 = vmatprep.subr.bf16.mxu0 0
    %4354 = vmatpush1.bf16.msra.mxu0 0
    %4355 = vmatprep.subr.bf16.mxu0 0
    %4356 = vmatpush1.bf16.msra.mxu0 0
    %4357 = vmatprep.subr.bf16.mxu0 0
    %4358 = vmatpush1.bf16.msra.mxu0 0
    %4359 = vmatprep.subr.bf16.mxu0 0
    %4360 = vmatpush1.bf16.msra.mxu0 0
    %4361 = vmatprep.subr.bf16.mxu0 0
    %4362 = vmatpush1.bf16.msra.mxu0 0
    %4363 = vmatprep.subr.bf16.mxu0 0
    %4364 = vmatpush1.bf16.msra.mxu0 0
    %4365 = vmatprep.subr.bf16.mxu0 0
    %4366 = vmatpush1.bf16.msra.mxu0 0
    %4367 = vmatprep.subr.bf16.mxu0 0
    %4368 = vmatpush1.bf16.msra.mxu0 0
    %4369 = vmatprep.subr.bf16.mxu0 0
    %4370 = vmatpush1.bf16.msra.mxu0 0
    %4371 = vmatprep.subr.bf16.mxu0 0
    %4372 = vmatpush1.bf16.msra.mxu0 0
    %4373 = vmatprep.subr.bf16.mxu0 0
    %4374 = vmatpush1.bf16.msra.mxu0 0
    %4375 = vmatprep.subr.bf16.mxu0 0
    %4376 = vmatpush1.bf16.msra.mxu0 0
    %4377 = vmatprep.subr.bf16.mxu0 0
    %4378 = vmatpush1.bf16.msra.mxu0 0
    %4379 = vmatprep.mubr.bf16.mxu0 0
    %4380 = vmatmul.mubr.bf16.gmra.mrb[0].mxu0 %v4091
    %v4381 = vpop.f32.mrb[0].mxu0
    %v4382 = vadd.f32 0.0, %v4381
    %v4383 = vpop.f32.mrb[0].mxu0
    %v4384 = vadd.f32 0.0, %v4383
    %v4385 = vpop.f32.mrb[0].mxu0
    %v4386 = vadd.f32 0.0, %v4385
    %v4387 = vpop.f32.mrb[0].mxu0
    %v4388 = vadd.f32 0.0, %v4387
    %4389 = vdwg.mxu0
    %4390 = vmatprep.subr.bf16.mxu0 0
    %4391 = vmatpush1.bf16.msra.mxu0 %v4037
    %4392 = vmatprep.subr.bf16.mxu0 0
    %4393 = vmatpush1.bf16.msra.mxu0 %v4050
    %4394 = vmatprep.subr.bf16.mxu0 0
    %4395 = vmatpush1.bf16.msra.mxu0 %v4130
    %4396 = vmatprep.subr.bf16.mxu0 0
    %4397 = vmatpush1.bf16.msra.mxu0 0
    %4398 = vmatprep.subr.bf16.mxu0 0
    %4399 = vmatpush1.bf16.msra.mxu0 0
    %4400 = vmatprep.subr.bf16.mxu0 0
    %4401 = vmatpush1.bf16.msra.mxu0 0
    %4402 = vmatprep.subr.bf16.mxu0 0
    %4403 = vmatpush1.bf16.msra.mxu0 0
    %4404 = vmatprep.subr.bf16.mxu0 0
    %4405 = vmatpush1.bf16.msra.mxu0 0
    %4406 = vmatprep.subr.bf16.mxu0 0
    %4407 = vmatpush1.bf16.msra.mxu0 0
    %4408 = vmatprep.subr.bf16.mxu0 0
    %4409 = vmatpush1.bf16.msra.mxu0 0
    %4410 = vmatprep.subr.bf16.mxu0 0
    %4411 = vmatpush1.bf16.msra.mxu0 0
    %4412 = vmatprep.subr.bf16.mxu0 0
    %4413 = vmatpush1.bf16.msra.mxu0 0
    %4414 = vmatprep.subr.bf16.mxu0 0
    %4415 = vmatpush1.bf16.msra.mxu0 0
    %4416 = vmatprep.subr.bf16.mxu0 0
    %4417 = vmatpush1.bf16.msra.mxu0 0
    %4418 = vmatprep.subr.bf16.mxu0 0
    %4419 = vmatpush1.bf16.msra.mxu0 0
    %4420 = vmatprep.subr.bf16.mxu0 0
    %4421 = vmatpush1.bf16.msra.mxu0 0
    %4422 = vmatprep.mubr.bf16.mxu0 0
    %4423 = vmatmul.mubr.bf16.gmra.mrb[0].mxu0 %v4091
    %v4424 = vpop.f32.mrb[0].mxu0
    %v4425 = vadd.f32 0.0, %v4424
    %v4426 = vpop.f32.mrb[0].mxu0
    %v4427 = vpop.f32.mrb[0].mxu0
    %v4428 = vadd.f32 0.0, %v4427
    %v4429 = vpop.f32.mrb[0].mxu0
    %4430 = vdwg.mxu0
    %4431 = vmatprep.subr.bf16.mxu0 %v1062
    %4432 = vmatpush1.bf16.msra.mxu0 %v1061
    %4433 = vmatprep.subr.bf16.mxu0 %v1075
    %4434 = vmatpush1.bf16.msra.mxu0 %v1074
    %4435 = vmatprep.subr.bf16.mxu0 %v1130
    %4436 = vmatpush1.bf16.msra.mxu0 %v1127
    %4437 = vmatprep.subr.bf16.mxu0 0
    %4438 = vmatpush1.bf16.msra.mxu0 0
    %4439 = vmatprep.subr.bf16.mxu0 0
    %4440 = vmatpush1.bf16.msra.mxu0 0
    %4441 = vmatprep.subr.bf16.mxu0 0
    %4442 = vmatpush1.bf16.msra.mxu0 0
    %4443 = vmatprep.subr.bf16.mxu0 0
    %4444 = vmatpush1.bf16.msra.mxu0 0
    %4445 = vmatprep.subr.bf16.mxu0 0
    %4446 = vmatpush1.bf16.msra.mxu0 0
    %4447 = vmatprep.subr.bf16.mxu0 0
    %4448 = vmatpush1.bf16.msra.mxu0 0
    %4449 = vmatprep.subr.bf16.mxu0 0
    %4450 = vmatpush1.bf16.msra.mxu0 0
    %4451 = vmatprep.subr.bf16.mxu0 0
    %4452 = vmatpush1.bf16.msra.mxu0 0
    %4453 = vmatprep.subr.bf16.mxu0 0
    %4454 = vmatpush1.bf16.msra.mxu0 0
    %4455 = vmatprep.subr.bf16.mxu0 0
    %4456 = vmatpush1.bf16.msra.mxu0 0
    %4457 = vmatprep.subr.bf16.mxu0 0
    %4458 = vmatpush1.bf16.msra.mxu0 0
    %4459 = vmatprep.subr.bf16.mxu0 0
    %4460 = vmatpush1.bf16.msra.mxu0 0
    %4461 = vmatprep.subr.bf16.mxu0 0
    %4462 = vmatpush1.bf16.msra.mxu0 0
    %4463 = vmatprep.mubr.bf16.mxu0 0
    %4464 = vmatmul.mubr.bf16.gmra.mrb[0].mxu0 %v4091
    %v4465 = vpop.f32.mrb[0].mxu0
    %v4466 = vadd.f32 0.0, %v4465
    %v4467 = vpop.f32.mrb[0].mxu0
    %v4468 = vadd.f32 0.0, %v4467
    %v4469 = vpop.f32.mrb[0].mxu0
    %v4470 = vadd.f32 0.0, %v4469
    %v4471 = vpop.f32.mrb[0].mxu0
    %v4472 = vadd.f32 0.0, %v4471
    %4473 = vdwg.mxu0
    %4474 = vmatprep.subr.bf16.mxu0 %v1064
    %4475 = vmatpush1.bf16.msra.mxu0 %v1063
    %4476 = vmatprep.subr.bf16.mxu0 %v1077
    %4477 = vmatpush1.bf16.msra.mxu0 %v1076
    %4478 = vmatprep.subr.bf16.mxu0 %v1136
    %4479 = vmatpush1.bf16.msra.mxu0 %v1133
    %4480 = vmatprep.subr.bf16.mxu0 0
    %4481 = vmatpush1.bf16.msra.mxu0 0
    %4482 = vmatprep.subr.bf16.mxu0 0
    %4483 = vmatpush1.bf16.msra.mxu0 0
    %4484 = vmatprep.subr.bf16.mxu0 0
    %4485 = vmatpush1.bf16.msra.mxu0 0
    %4486 = vmatprep.subr.bf16.mxu0 0
    %4487 = vmatpush1.bf16.msra.mxu0 0
    %4488 = vmatprep.subr.bf16.mxu0 0
    %4489 = vmatpush1.bf16.msra.mxu0 0
    %4490 = vmatprep.subr.bf16.mxu0 0
    %4491 = vmatpush1.bf16.msra.mxu0 0
    %4492 = vmatprep.subr.bf16.mxu0 0
    %4493 = vmatpush1.bf16.msra.mxu0 0
    %4494 = vmatprep.subr.bf16.mxu0 0
    %4495 = vmatpush1.bf16.msra.mxu0 0
    %4496 = vmatprep.subr.bf16.mxu0 0
    %4497 = vmatpush1.bf16.msra.mxu0 0
    %4498 = vmatprep.subr.bf16.mxu0 0
    %4499 = vmatpush1.bf16.msra.mxu0 0
    %4500 = vmatprep.subr.bf16.mxu0 0
    %4501 = vmatpush1.bf16.msra.mxu0 0
    %4502 = vmatprep.subr.bf16.mxu0 0
    %4503 = vmatpush1.bf16.msra.mxu0 0
    %4504 = vmatprep.subr.bf16.mxu0 0
    %4505 = vmatpush1.bf16.msra.mxu0 0
    %4506 = vmatprep.mubr.bf16.mxu0 0
    %4507 = vmatmul.mubr.bf16.gmra.mrb[0].mxu0 %v4091
    %v4508 = vpop.f32.mrb[0].mxu0
    %v4509 = vadd.f32 0.0, %v4508
    %v4510 = vpop.f32.mrb[0].mxu0
    %v4511 = vadd.f32 0.0, %v4510
    %v4512 = vpop.f32.mrb[0].mxu0
    %v4513 = vadd.f32 0.0, %v4512
    %v4514 = vpop.f32.mrb[0].mxu0
    %v4515 = vadd.f32 0.0, %v4514
    %4516 = vdwg.mxu0
    %4517 = vmatprep.subr.bf16.mxu0 %v1066
    %4518 = vmatpush1.bf16.msra.mxu0 %v1065
    %4519 = vmatprep.subr.bf16.mxu0 %v1079
    %4520 = vmatpush1.bf16.msra.mxu0 %v1078
    %4521 = vmatprep.subr.bf16.mxu0 %v1142
    %4522 = vmatpush1.bf16.msra.mxu0 %v1139
    %4523 = vmatprep.subr.bf16.mxu0 0
    %4524 = vmatpush1.bf16.msra.mxu0 0
    %4525 = vmatprep.subr.bf16.mxu0 0
    %4526 = vmatpush1.bf16.msra.mxu0 0
    %4527 = vmatprep.subr.bf16.mxu0 0
    %4528 = vmatpush1.bf16.msra.mxu0 0
    %4529 = vmatprep.subr.bf16.mxu0 0
    %4530 = vmatpush1.bf16.msra.mxu0 0
    %4531 = vmatprep.subr.bf16.mxu0 0
    %4532 = vmatpush1.bf16.msra.mxu0 0
    %4533 = vmatprep.subr.bf16.mxu0 0
    %4534 = vmatpush1.bf16.msra.mxu0 0
    %4535 = vmatprep.subr.bf16.mxu0 0
    %4536 = vmatpush1.bf16.msra.mxu0 0
    %4537 = vmatprep.subr.bf16.mxu0 0
    %4538 = vmatpush1.bf16.msra.mxu0 0
    %4539 = vmatprep.subr.bf16.mxu0 0
    %4540 = vmatpush1.bf16.msra.mxu0 0
    %4541 = vmatprep.subr.bf16.mxu0 0
    %4542 = vmatpush1.bf16.msra.mxu0 0
    %4543 = vmatprep.subr.bf16.mxu0 0
    %4544 = vmatpush1.bf16.msra.mxu0 0
    %4545 = vmatprep.subr.bf16.mxu0 0
    %4546 = vmatpush1.bf16.msra.mxu0 0
    %4547 = vmatprep.subr.bf16.mxu0 0
    %4548 = vmatpush1.bf16.msra.mxu0 0
    %4549 = vmatprep.mubr.bf16.mxu0 0
    %4550 = vmatmul.mubr.bf16.gmra.mrb[0].mxu0 %v4091
    %v4551 = vpop.f32.mrb[0].mxu0
    %v4552 = vadd.f32 0.0, %v4551
    %v4553 = vpop.f32.mrb[0].mxu0
    %v4554 = vadd.f32 0.0, %v4553
    %v4555 = vpop.f32.mrb[0].mxu0
    %v4556 = vadd.f32 0.0, %v4555
    %v4557 = vpop.f32.mrb[0].mxu0
    %v4558 = vadd.f32 0.0, %v4557
    %4559 = vdwg.mxu0
    %4560 = vmatprep.subr.bf16.mxu0 %v1068
    %4561 = vmatpush1.bf16.msra.mxu0 %v1067
    %4562 = vmatprep.subr.bf16.mxu0 %v1081
    %4563 = vmatpush1.bf16.msra.mxu0 %v1080
    %4564 = vmatprep.subr.bf16.mxu0 %v1148
    %4565 = vmatpush1.bf16.msra.mxu0 %v1145
    %4566 = vmatprep.subr.bf16.mxu0 0
    %4567 = vmatpush1.bf16.msra.mxu0 0
    %4568 = vmatprep.subr.bf16.mxu0 0
    %4569 = vmatpush1.bf16.msra.mxu0 0
    %4570 = vmatprep.subr.bf16.mxu0 0
    %4571 = vmatpush1.bf16.msra.mxu0 0
    %4572 = vmatprep.subr.bf16.mxu0 0
    %4573 = vmatpush1.bf16.msra.mxu0 0
    %4574 = vmatprep.subr.bf16.mxu0 0
    %4575 = vmatpush1.bf16.msra.mxu0 0
    %4576 = vmatprep.subr.bf16.mxu0 0
    %4577 = vmatpush1.bf16.msra.mxu0 0
    %4578 = vmatprep.subr.bf16.mxu0 0
    %4579 = vmatpush1.bf16.msra.mxu0 0
    %4580 = vmatprep.subr.bf16.mxu0 0
    %4581 = vmatpush1.bf16.msra.mxu0 0
    %4582 = vmatprep.subr.bf16.mxu0 0
    %4583 = vmatpush1.bf16.msra.mxu0 0
    %4584 = vmatprep.subr.bf16.mxu0 0
    %4585 = vmatpush1.bf16.msra.mxu0 0
    %4586 = vmatprep.subr.bf16.mxu0 0
    %4587 = vmatpush1.bf16.msra.mxu0 0
    %4588 = vmatprep.subr.bf16.mxu0 0
    %4589 = vmatpush1.bf16.msra.mxu0 0
    %4590 = vmatprep.subr.bf16.mxu0 0
    %4591 = vmatpush1.bf16.msra.mxu0 0
    %4592 = vmatprep.mubr.bf16.mxu0 0
    %4593 = vmatmul.mubr.bf16.gmra.mrb[0].mxu0 %v4091
    %v4594 = vpop.f32.mrb[0].mxu0
    %v4595 = vadd.f32 0.0, %v4594
    %v4596 = vpop.f32.mrb[0].mxu0
    %v4597 = vadd.f32 0.0, %v4596
    %v4598 = vpop.f32.mrb[0].mxu0
    %v4599 = vadd.f32 0.0, %v4598
    %v4600 = vpop.f32.mrb[0].mxu0
    %v4601 = vadd.f32 0.0, %v4600
    %4602 = vdwg.mxu0
    %4603 = vmatprep.subr.bf16.mxu0 %v1070
    %4604 = vmatpush1.bf16.msra.mxu0 %v1069
    %4605 = vmatprep.subr.bf16.mxu0 %v1083
    %4606 = vmatpush1.bf16.msra.mxu0 %v1082
    %4607 = vmatprep.subr.bf16.mxu0 %v1154
    %4608 = vmatpush1.bf16.msra.mxu0 %v1151
    %4609 = vmatprep.subr.bf16.mxu0 0
    %4610 = vmatpush1.bf16.msra.mxu0 0
    %4611 = vmatprep.subr.bf16.mxu0 0
    %4612 = vmatpush1.bf16.msra.mxu0 0
    %4613 = vmatprep.subr.bf16.mxu0 0
    %4614 = vmatpush1.bf16.msra.mxu0 0
    %4615 = vmatprep.subr.bf16.mxu0 0
    %4616 = vmatpush1.bf16.msra.mxu0 0
    %4617 = vmatprep.subr.bf16.mxu0 0
    %4618 = vmatpush1.bf16.msra.mxu0 0
    %4619 = vmatprep.subr.bf16.mxu0 0
    %4620 = vmatpush1.bf16.msra.mxu0 0
    %4621 = vmatprep.subr.bf16.mxu0 0
    %4622 = vmatpush1.bf16.msra.mxu0 0
    %4623 = vmatprep.subr.bf16.mxu0 0
    %4624 = vmatpush1.bf16.msra.mxu0 0
    %4625 = vmatprep.subr.bf16.mxu0 0
    %4626 = vmatpush1.bf16.msra.mxu0 0
    %4627 = vmatprep.subr.bf16.mxu0 0
    %4628 = vmatpush1.bf16.msra.mxu0 0
    %4629 = vmatprep.subr.bf16.mxu0 0
    %4630 = vmatpush1.bf16.msra.mxu0 0
    %4631 = vmatprep.subr.bf16.mxu0 0
    %4632 = vmatpush1.bf16.msra.mxu0 0
    %4633 = vmatprep.subr.bf16.mxu0 0
    %4634 = vmatpush1.bf16.msra.mxu0 0
    %4635 = vmatprep.mubr.bf16.mxu0 0
    %4636 = vmatmul.mubr.bf16.gmra.mrb[0].mxu0 %v4091
    %v4637 = vpop.f32.mrb[0].mxu0
    %v4638 = vadd.f32 0.0, %v4637
    %v4639 = vpop.f32.mrb[0].mxu0
    %v4640 = vadd.f32 0.0, %v4639
    %v4641 = vpop.f32.mrb[0].mxu0
    %v4642 = vadd.f32 0.0, %v4641
    %v4643 = vpop.f32.mrb[0].mxu0
    %v4644 = vadd.f32 0.0, %v4643
    %4645 = vdwg.mxu0
    %4646 = vmatprep.subr.bf16.mxu0 %v1072
    %4647 = vmatpush1.bf16.msra.mxu0 %v1071
    %4648 = vmatprep.subr.bf16.mxu0 %v1085
    %4649 = vmatpush1.bf16.msra.mxu0 %v1084
    %4650 = vmatprep.subr.bf16.mxu0 %v1160
    %4651 = vmatpush1.bf16.msra.mxu0 %v1157
    %4652 = vmatprep.subr.bf16.mxu0 0
    %4653 = vmatpush1.bf16.msra.mxu0 0
    %4654 = vmatprep.subr.bf16.mxu0 0
    %4655 = vmatpush1.bf16.msra.mxu0 0
    %4656 = vmatprep.subr.bf16.mxu0 0
    %4657 = vmatpush1.bf16.msra.mxu0 0
    %4658 = vmatprep.subr.bf16.mxu0 0
    %4659 = vmatpush1.bf16.msra.mxu0 0
    %4660 = vmatprep.subr.bf16.mxu0 0
    %4661 = vmatpush1.bf16.msra.mxu0 0
    %4662 = vmatprep.subr.bf16.mxu0 0
    %4663 = vmatpush1.bf16.msra.mxu0 0
    %4664 = vmatprep.subr.bf16.mxu0 0
    %4665 = vmatpush1.bf16.msra.mxu0 0
    %4666 = vmatprep.subr.bf16.mxu0 0
    %4667 = vmatpush1.bf16.msra.mxu0 0
    %4668 = vmatprep.subr.bf16.mxu0 0
    %4669 = vmatpush1.bf16.msra.mxu0 0
    %4670 = vmatprep.subr.bf16.mxu0 0
    %4671 = vmatpush1.bf16.msra.mxu0 0
    %4672 = vmatprep.subr.bf16.mxu0 0
    %4673 = vmatpush1.bf16.msra.mxu0 0
    %4674 = vmatprep.subr.bf16.mxu0 0
    %4675 = vmatpush1.bf16.msra.mxu0 0
    %4676 = vmatprep.subr.bf16.mxu0 0
    %4677 = vmatpush1.bf16.msra.mxu0 0
    %4678 = vmatprep.mubr.bf16.mxu0 0
    %4679 = vmatmul.mubr.bf16.gmra.mrb[0].mxu0 %v4091
    %v4680 = vpop.f32.mrb[0].mxu0
    %v4681 = vadd.f32 0.0, %v4680
    %v4682 = vpop.f32.mrb[0].mxu0
    %v4683 = vadd.f32 0.0, %v4682
    %v4684 = vpop.f32.mrb[0].mxu0
    %v4685 = vadd.f32 0.0, %v4684
    %v4686 = vpop.f32.mrb[0].mxu0
    %v4687 = vadd.f32 0.0, %v4686
    %4688 = vdwg.mxu0
    %4689 = vmatprep.subr.bf16.mxu0 0
    %4690 = vmatpush1.bf16.msra.mxu0 %v1073
    %4691 = vmatprep.subr.bf16.mxu0 0
    %4692 = vmatpush1.bf16.msra.mxu0 %v1086
    %4693 = vmatprep.subr.bf16.mxu0 0
    %4694 = vmatpush1.bf16.msra.mxu0 %v1163
    %4695 = vmatprep.subr.bf16.mxu0 0
    %4696 = vmatpush1.bf16.msra.mxu0 0
    %4697 = vmatprep.subr.bf16.mxu0 0
    %4698 = vmatpush1.bf16.msra.mxu0 0
    %4699 = vmatprep.subr.bf16.mxu0 0
    %4700 = vmatpush1.bf16.msra.mxu0 0
    %4701 = vmatprep.subr.bf16.mxu0 0
    %4702 = vmatpush1.bf16.msra.mxu0 0
    %4703 = vmatprep.subr.bf16.mxu0 0
    %4704 = vmatpush1.bf16.msra.mxu0 0
    %4705 = vmatprep.subr.bf16.mxu0 0
    %4706 = vmatpush1.bf16.msra.mxu0 0
    %4707 = vmatprep.subr.bf16.mxu0 0
    %4708 = vmatpush1.bf16.msra.mxu0 0
    %4709 = vmatprep.subr.bf16.mxu0 0
    %4710 = vmatpush1.bf16.msra.mxu0 0
    %4711 = vmatprep.subr.bf16.mxu0 0
    %4712 = vmatpush1.bf16.msra.mxu0 0
    %4713 = vmatprep.subr.bf16.mxu0 0
    %4714 = vmatpush1.bf16.msra.mxu0 0
    %4715 = vmatprep.subr.bf16.mxu0 0
    %4716 = vmatpush1.bf16.msra.mxu0 0
    %4717 = vmatprep.subr.bf16.mxu0 0
    %4718 = vmatpush1.bf16.msra.mxu0 0
    %4719 = vmatprep.subr.bf16.mxu0 0
    %4720 = vmatpush1.bf16.msra.mxu0 0
    %4721 = vmatprep.mubr.bf16.mxu0 0
    %4722 = vmatmul.mubr.bf16.gmra.mrb[0].mxu0 %v4091
    %v4723 = vpop.f32.mrb[0].mxu0
    %v4724 = vadd.f32 0.0, %v4723
    %v4725 = vpop.f32.mrb[0].mxu0
    %v4726 = vpop.f32.mrb[0].mxu0
    %v4727 = vadd.f32 0.0, %v4726
    %v4728 = vpop.f32.mrb[0].mxu0
    %4729 = vdwg.mxu0
    %v4730 = vmul.f32 %v4167, %v4466
    %v4731 = vmul.f32 %v4169, %v4468
    %v4732 = vmul.f32 %v4210, %v4509
    %v4733 = vmul.f32 %v4212, %v4511
    %v4734 = vmul.f32 %v4253, %v4552
    %v4735 = vmul.f32 %v4255, %v4554
    %v4736 = vmul.f32 %v4296, %v4595
    %v4737 = vmul.f32 %v4298, %v4597
    %v4738 = vmul.f32 %v4339, %v4638
    %v4739 = vmul.f32 %v4341, %v4640
    %v4740 = vmul.f32 %v4382, %v4681
    %v4741 = vmul.f32 %v4384, %v4683
    %v4742 = vmul.f32 %v4425, %v4724
    %v4743 = vmul.f32 %v4171, %v4470
    %v4744 = vmul.f32 %v4173, %v4472
    %v4745 = vmul.f32 %v4214, %v4513
    %v4746 = vmul.f32 %v4216, %v4515
    %v4747 = vmul.f32 %v4257, %v4556
    %v4748 = vmul.f32 %v4259, %v4558
    %v4749 = vmul.f32 %v4300, %v4599
    %v4750 = vmul.f32 %v4302, %v4601
    %v4751 = vmul.f32 %v4343, %v4642
    %v4752 = vmul.f32 %v4345, %v4644
    %v4753 = vmul.f32 %v4386, %v4685
    %v4754 = vmul.f32 %v4388, %v4687
    %v4755 = vmul.f32 %v4428, %v4727
    %v4756 = vpack.c.bf16 %v4743, %v4730
    %v4757 = vpack.c.bf16 %v4744, %v4731
    %v4758 = vpack.c.bf16 %v4745, %v4732
    %v4759 = vpack.c.bf16 %v4746, %v4733
    %v4760 = vpack.c.bf16 %v4747, %v4734
    %v4761 = vpack.c.bf16 %v4748, %v4735
    %v4762 = vpack.c.bf16 %v4749, %v4736
    %v4763 = vpack.c.bf16 %v4750, %v4737
    %v4764 = vpack.c.bf16 %v4751, %v4738
    %v4765 = vpack.c.bf16 %v4752, %v4739
    %v4766 = vpack.c.bf16 %v4753, %v4740
    %v4767 = vpack.c.bf16 %v4754, %v4741
    %v4768 = vpack.c.bf16 %v4755, %v4742
    %v4770 = vsel %vm2103, %v4768, 0
    %4772 = vmatprep.subr.bf16.mxu0 0
    %4773 = vmatpush1.bf16.msra.mxu0 %v1903
    %4774 = vmatprep.subr.bf16.mxu0 0
    %4775 = vmatpush1.bf16.msra.mxu0 %v1904
    %4776 = vmatprep.subr.bf16.mxu0 0
    %4777 = vmatpush1.bf16.msra.mxu0 %v1905
    %4778 = vmatprep.subr.bf16.mxu0 0
    %4779 = vmatpush1.bf16.msra.mxu0 %v1906
    %4780 = vmatprep.subr.bf16.mxu0 0
    %4781 = vmatpush1.bf16.msra.mxu0 %v1907
    %4782 = vmatprep.subr.bf16.mxu0 0
    %4783 = vmatpush1.bf16.msra.mxu0 %v1908
    %4784 = vmatprep.subr.bf16.mxu0 0
    %4785 = vmatpush1.bf16.msra.mxu0 %v1909
    %4786 = vmatprep.subr.bf16.mxu0 0
    %4787 = vmatpush1.bf16.msra.mxu0 %v1910
    %4788 = vmatprep.subr.bf16.mxu0 0
    %4789 = vmatpush1.bf16.msra.mxu0 %v1911
    %4790 = vmatprep.subr.bf16.mxu0 0
    %4791 = vmatpush1.bf16.msra.mxu0 %v1912
    %4792 = vmatprep.subr.bf16.mxu0 0
    %4793 = vmatpush1.bf16.msra.mxu0 %v1913
    %4794 = vmatprep.subr.bf16.mxu0 0
    %4795 = vmatpush1.bf16.msra.mxu0 %v1914
    %4796 = vmatprep.subr.bf16.mxu0 0
    %4797 = vmatpush1.bf16.msra.mxu0 %v1915
    %4798 = vmatprep.subr.bf16.mxu0 0
    %4799 = vmatpush1.bf16.msra.mxu0 %v1916
    %4800 = vmatprep.subr.bf16.mxu0 0
    %4801 = vmatpush1.bf16.msra.mxu0 %v1917
    %4802 = vmatprep.subr.bf16.mxu0 0
    %4803 = vmatpush1.bf16.msra.mxu0 %v1918
    %4804 = vmatprep.mubr.bf16.mxu0 %v4757
    %4805 = vmatmul.mubr.bf16.gmra.mrb[0].mxu0 %v4756
    %v4806 = vpop.f32.mrb[0].mxu0
    %v4807 = vadd.f32 0.0, %v4806
    %v4808 = vpop.f32.mrb[0].mxu0
    %v4809 = vpop.f32.mrb[0].mxu0
    %v4810 = vadd.f32 0.0, %v4809
    %v4811 = vpop.f32.mrb[0].mxu0
    %4812 = vdwg.mxu0
    %4813 = vmatprep.subr.bf16.mxu0 0
    %4814 = vmatpush1.bf16.msra.mxu0 %v1919
    %4815 = vmatprep.subr.bf16.mxu0 0
    %4816 = vmatpush1.bf16.msra.mxu0 %v1920
    %4817 = vmatprep.subr.bf16.mxu0 0
    %4818 = vmatpush1.bf16.msra.mxu0 %v1921
    %4819 = vmatprep.subr.bf16.mxu0 0
    %4820 = vmatpush1.bf16.msra.mxu0 %v1922
    %4821 = vmatprep.subr.bf16.mxu0 0
    %4822 = vmatpush1.bf16.msra.mxu0 %v1923
    %4823 = vmatprep.subr.bf16.mxu0 0
    %4824 = vmatpush1.bf16.msra.mxu0 %v1924
    %4825 = vmatprep.subr.bf16.mxu0 0
    %4826 = vmatpush1.bf16.msra.mxu0 %v1925
    %4827 = vmatprep.subr.bf16.mxu0 0
    %4828 = vmatpush1.bf16.msra.mxu0 %v1926
    %4829 = vmatprep.subr.bf16.mxu0 0
    %4830 = vmatpush1.bf16.msra.mxu0 %v1927
    %4831 = vmatprep.subr.bf16.mxu0 0
    %4832 = vmatpush1.bf16.msra.mxu0 %v1928
    %4833 = vmatprep.subr.bf16.mxu0 0
    %4834 = vmatpush1.bf16.msra.mxu0 %v1929
    %4835 = vmatprep.subr.bf16.mxu0 0
    %4836 = vmatpush1.bf16.msra.mxu0 %v1930
    %4837 = vmatprep.subr.bf16.mxu0 0
    %4838 = vmatpush1.bf16.msra.mxu0 %v1931
    %4839 = vmatprep.subr.bf16.mxu0 0
    %4840 = vmatpush1.bf16.msra.mxu0 %v1932
    %4841 = vmatprep.subr.bf16.mxu0 0
    %4842 = vmatpush1.bf16.msra.mxu0 %v1933
    %4843 = vmatprep.subr.bf16.mxu0 0
    %4844 = vmatpush1.bf16.msra.mxu0 %v1934
    %4845 = vmatprep.mubr.bf16.mxu0 %v4759
    %4846 = vmatmul.mubr.bf16.gmra.mrb[0].mxu0 %v4758
    %v4847 = vpop.f32.mrb[0].mxu0
    %v4848 = vadd.f32 %v4807, %v4847
    %v4849 = vpop.f32.mrb[0].mxu0
    %v4850 = vpop.f32.mrb[0].mxu0
    %v4851 = vadd.f32 %v4810, %v4850
    %v4852 = vpop.f32.mrb[0].mxu0
    %4853 = vdwg.mxu0
    %4854 = vmatprep.subr.bf16.mxu0 0
    %4855 = vmatpush1.bf16.msra.mxu0 %v1935
    %4856 = vmatprep.subr.bf16.mxu0 0
    %4857 = vmatpush1.bf16.msra.mxu0 %v1936
    %4858 = vmatprep.subr.bf16.mxu0 0
    %4859 = vmatpush1.bf16.msra.mxu0 %v1937
    %4860 = vmatprep.subr.bf16.mxu0 0
    %4861 = vmatpush1.bf16.msra.mxu0 %v1938
    %4862 = vmatprep.subr.bf16.mxu0 0
    %4863 = vmatpush1.bf16.msra.mxu0 %v1939
    %4864 = vmatprep.subr.bf16.mxu0 0
    %4865 = vmatpush1.bf16.msra.mxu0 %v1940
    %4866 = vmatprep.subr.bf16.mxu0 0
    %4867 = vmatpush1.bf16.msra.mxu0 %v1941
    %4868 = vmatprep.subr.bf16.mxu0 0
    %4869 = vmatpush1.bf16.msra.mxu0 %v1942
    %4870 = vmatprep.subr.bf16.mxu0 0
    %4871 = vmatpush1.bf16.msra.mxu0 %v1943
    %4872 = vmatprep.subr.bf16.mxu0 0
    %4873 = vmatpush1.bf16.msra.mxu0 %v1944
    %4874 = vmatprep.subr.bf16.mxu0 0
    %4875 = vmatpush1.bf16.msra.mxu0 %v1945
    %4876 = vmatprep.subr.bf16.mxu0 0
    %4877 = vmatpush1.bf16.msra.mxu0 %v1946
    %4878 = vmatprep.subr.bf16.mxu0 0
    %4879 = vmatpush1.bf16.msra.mxu0 %v1947
    %4880 = vmatprep.subr.bf16.mxu0 0
    %4881 = vmatpush1.bf16.msra.mxu0 %v1948
    %4882 = vmatprep.subr.bf16.mxu0 0
    %4883 = vmatpush1.bf16.msra.mxu0 %v1949
    %4884 = vmatprep.subr.bf16.mxu0 0
    %4885 = vmatpush1.bf16.msra.mxu0 %v1950
    %4886 = vmatprep.mubr.bf16.mxu0 %v4761
    %4887 = vmatmul.mubr.bf16.gmra.mrb[0].mxu0 %v4760
    %v4888 = vpop.f32.mrb[0].mxu0
    %v4889 = vadd.f32 %v4848, %v4888
    %v4890 = vpop.f32.mrb[0].mxu0
    %v4891 = vpop.f32.mrb[0].mxu0
    %v4892 = vadd.f32 %v4851, %v4891
    %v4893 = vpop.f32.mrb[0].mxu0
    %4894 = vdwg.mxu0
    %4895 = vmatprep.subr.bf16.mxu0 0
    %4896 = vmatpush1.bf16.msra.mxu0 %v1951
    %4897 = vmatprep.subr.bf16.mxu0 0
    %4898 = vmatpush1.bf16.msra.mxu0 %v1952
    %4899 = vmatprep.subr.bf16.mxu0 0
    %4900 = vmatpush1.bf16.msra.mxu0 %v1953
    %4901 = vmatprep.subr.bf16.mxu0 0
    %4902 = vmatpush1.bf16.msra.mxu0 %v1954
    %4903 = vmatprep.subr.bf16.mxu0 0
    %4904 = vmatpush1.bf16.msra.mxu0 %v1955
    %4905 = vmatprep.subr.bf16.mxu0 0
    %4906 = vmatpush1.bf16.msra.mxu0 %v1956
    %4907 = vmatprep.subr.bf16.mxu0 0
    %4908 = vmatpush1.bf16.msra.mxu0 %v1957
    %4909 = vmatprep.subr.bf16.mxu0 0
    %4910 = vmatpush1.bf16.msra.mxu0 %v1958
    %4911 = vmatprep.subr.bf16.mxu0 0
    %4912 = vmatpush1.bf16.msra.mxu0 %v1959
    %4913 = vmatprep.subr.bf16.mxu0 0
    %4914 = vmatpush1.bf16.msra.mxu0 %v1960
    %4915 = vmatprep.subr.bf16.mxu0 0
    %4916 = vmatpush1.bf16.msra.mxu0 %v1961
    %4917 = vmatprep.subr.bf16.mxu0 0
    %4918 = vmatpush1.bf16.msra.mxu0 %v1962
    %4919 = vmatprep.subr.bf16.mxu0 0
    %4920 = vmatpush1.bf16.msra.mxu0 %v1963
    %4921 = vmatprep.subr.bf16.mxu0 0
    %4922 = vmatpush1.bf16.msra.mxu0 %v1964
    %4923 = vmatprep.subr.bf16.mxu0 0
    %4924 = vmatpush1.bf16.msra.mxu0 %v1965
    %4925 = vmatprep.subr.bf16.mxu0 0
    %4926 = vmatpush1.bf16.msra.mxu0 %v1966
    %4927 = vmatprep.mubr.bf16.mxu0 %v4763
    %4928 = vmatmul.mubr.bf16.gmra.mrb[0].mxu0 %v4762
    %v4929 = vpop.f32.mrb[0].mxu0
    %v4930 = vadd.f32 %v4889, %v4929
    %v4931 = vpop.f32.mrb[0].mxu0
    %v4932 = vpop.f32.mrb[0].mxu0
    %v4933 = vadd.f32 %v4892, %v4932
    %v4934 = vpop.f32.mrb[0].mxu0
    %4935 = vdwg.mxu0
    %4936 = vmatprep.subr.bf16.mxu0 0
    %4937 = vmatpush1.bf16.msra.mxu0 %v1967
    %4938 = vmatprep.subr.bf16.mxu0 0
    %4939 = vmatpush1.bf16.msra.mxu0 %v1968
    %4940 = vmatprep.subr.bf16.mxu0 0
    %4941 = vmatpush1.bf16.msra.mxu0 %v1969
    %4942 = vmatprep.subr.bf16.mxu0 0
    %4943 = vmatpush1.bf16.msra.mxu0 %v1970
    %4944 = vmatprep.subr.bf16.mxu0 0
    %4945 = vmatpush1.bf16.msra.mxu0 %v1971
    %4946 = vmatprep.subr.bf16.mxu0 0
    %4947 = vmatpush1.bf16.msra.mxu0 %v1972
    %4948 = vmatprep.subr.bf16.mxu0 0
    %4949 = vmatpush1.bf16.msra.mxu0 %v1973
    %4950 = vmatprep.subr.bf16.mxu0 0
    %4951 = vmatpush1.bf16.msra.mxu0 %v1974
    %4952 = vmatprep.subr.bf16.mxu0 0
    %4953 = vmatpush1.bf16.msra.mxu0 %v1975
    %4954 = vmatprep.subr.bf16.mxu0 0
    %4955 = vmatpush1.bf16.msra.mxu0 %v1976
    %4956 = vmatprep.subr.bf16.mxu0 0
    %4957 = vmatpush1.bf16.msra.mxu0 %v1977
    %4958 = vmatprep.subr.bf16.mxu0 0
    %4959 = vmatpush1.bf16.msra.mxu0 %v1978
    %4960 = vmatprep.subr.bf16.mxu0 0
    %4961 = vmatpush1.bf16.msra.mxu0 %v1979
    %4962 = vmatprep.subr.bf16.mxu0 0
    %4963 = vmatpush1.bf16.msra.mxu0 %v1980
    %4964 = vmatprep.subr.bf16.mxu0 0
    %4965 = vmatpush1.bf16.msra.mxu0 %v1981
    %4966 = vmatprep.subr.bf16.mxu0 0
    %4967 = vmatpush1.bf16.msra.mxu0 %v1982
    %4968 = vmatprep.mubr.bf16.mxu0 %v4765
    %4969 = vmatmul.mubr.bf16.gmra.mrb[0].mxu0 %v4764
    %v4970 = vpop.f32.mrb[0].mxu0
    %v4971 = vadd.f32 %v4930, %v4970
    %v4972 = vpop.f32.mrb[0].mxu0
    %v4973 = vpop.f32.mrb[0].mxu0
    %v4974 = vadd.f32 %v4933, %v4973
    %v4975 = vpop.f32.mrb[0].mxu0
    %4976 = vdwg.mxu0
    %4977 = vmatprep.subr.bf16.mxu0 0
    %4978 = vmatpush1.bf16.msra.mxu0 %v1983
    %4979 = vmatprep.subr.bf16.mxu0 0
    %4980 = vmatpush1.bf16.msra.mxu0 %v1984
    %4981 = vmatprep.subr.bf16.mxu0 0
    %4982 = vmatpush1.bf16.msra.mxu0 %v1985
    %4983 = vmatprep.subr.bf16.mxu0 0
    %4984 = vmatpush1.bf16.msra.mxu0 %v1986
    %4985 = vmatprep.subr.bf16.mxu0 0
    %4986 = vmatpush1.bf16.msra.mxu0 %v1987
    %4987 = vmatprep.subr.bf16.mxu0 0
    %4988 = vmatpush1.bf16.msra.mxu0 %v1988
    %4989 = vmatprep.subr.bf16.mxu0 0
    %4990 = vmatpush1.bf16.msra.mxu0 %v1989
    %4991 = vmatprep.subr.bf16.mxu0 0
    %4992 = vmatpush1.bf16.msra.mxu0 %v1990
    %4993 = vmatprep.subr.bf16.mxu0 0
    %4994 = vmatpush1.bf16.msra.mxu0 %v1991
    %4995 = vmatprep.subr.bf16.mxu0 0
    %4996 = vmatpush1.bf16.msra.mxu0 %v1992
    %4997 = vmatprep.subr.bf16.mxu0 0
    %4998 = vmatpush1.bf16.msra.mxu0 %v1993
    %4999 = vmatprep.subr.bf16.mxu0 0
    %5000 = vmatpush1.bf16.msra.mxu0 %v1994
    %5001 = vmatprep.subr.bf16.mxu0 0
    %5002 = vmatpush1.bf16.msra.mxu0 %v1995
    %5003 = vmatprep.subr.bf16.mxu0 0
    %5004 = vmatpush1.bf16.msra.mxu0 %v1996
    %5005 = vmatprep.subr.bf16.mxu0 0
    %5006 = vmatpush1.bf16.msra.mxu0 %v1997
    %5007 = vmatprep.subr.bf16.mxu0 0
    %5008 = vmatpush1.bf16.msra.mxu0 %v1998
    %5009 = vmatprep.mubr.bf16.mxu0 %v4767
    %5010 = vmatmul.mubr.bf16.gmra.mrb[0].mxu0 %v4766
    %v5011 = vpop.f32.mrb[0].mxu0
    %v5012 = vadd.f32 %v4971, %v5011
    %v5013 = vpop.f32.mrb[0].mxu0
    %v5014 = vpop.f32.mrb[0].mxu0
    %v5015 = vadd.f32 %v4974, %v5014
    %v5016 = vpop.f32.mrb[0].mxu0
    %5017 = vdwg.mxu0
    %5018 = vmatprep.subr.bf16.mxu0 0
    %5019 = vmatpush1.bf16.msra.mxu0 %v1999
    %5020 = vmatprep.subr.bf16.mxu0 0
    %5021 = vmatpush1.bf16.msra.mxu0 %v2000
    %5022 = vmatprep.subr.bf16.mxu0 0
    %5023 = vmatpush1.bf16.msra.mxu0 %v2001
    %5024 = vmatprep.subr.bf16.mxu0 0
    %5025 = vmatpush1.bf16.msra.mxu0 %v2002
    %5026 = vmatprep.subr.bf16.mxu0 0
    %5027 = vmatpush1.bf16.msra.mxu0 0
    %5028 = vmatprep.subr.bf16.mxu0 0
    %5029 = vmatpush1.bf16.msra.mxu0 0
    %5030 = vmatprep.subr.bf16.mxu0 0
    %5031 = vmatpush1.bf16.msra.mxu0 0
    %5032 = vmatprep.subr.bf16.mxu0 0
    %5033 = vmatpush1.bf16.msra.mxu0 0
    %5034 = vmatprep.subr.bf16.mxu0 0
    %5035 = vmatpush1.bf16.msra.mxu0 0
    %5036 = vmatprep.subr.bf16.mxu0 0
    %5037 = vmatpush1.bf16.msra.mxu0 0
    %5038 = vmatprep.subr.bf16.mxu0 0
    %5039 = vmatpush1.bf16.msra.mxu0 0
    %5040 = vmatprep.subr.bf16.mxu0 0
    %5041 = vmatpush1.bf16.msra.mxu0 0
    %5042 = vmatprep.subr.bf16.mxu0 0
    %5043 = vmatpush1.bf16.msra.mxu0 0
    %5044 = vmatprep.subr.bf16.mxu0 0
    %5045 = vmatpush1.bf16.msra.mxu0 0
    %5046 = vmatprep.subr.bf16.mxu0 0
    %5047 = vmatpush1.bf16.msra.mxu0 0
    %5048 = vmatprep.subr.bf16.mxu0 0
    %5049 = vmatpush1.bf16.msra.mxu0 0
    %5050 = vmatprep.mubr.bf16.mxu0 0
    %5051 = vmatmul.mubr.bf16.gmra.mrb[0].mxu0 %v4770
    %v5052 = vpop.f32.mrb[0].mxu0
    %v5053 = vadd.f32 %v5012, %v5052
    %v5054 = vpop.f32.mrb[0].mxu0
    %v5055 = vpop.f32.mrb[0].mxu0
    %v5056 = vadd.f32 %v5015, %v5055
    %v5057 = vpop.f32.mrb[0].mxu0
    %5058 = vdwg.mxu0
    %v5059 = vmul.f32 %v5053, 0.1
    %v5060 = vmul.f32 %v5056, 0.1
    %v5061 = vadd.f32 %v5059, %v3883
    %v5062 = vadd.f32 %v5060, %v3886
    %v5064 = vsel %vm618, %v5061, 0
    %v5067 = vsel %vm618, %v5062, 0
    %5069 = vmatprep.subr.mxu0 0.0
    %5070 = vmatpush1.msra.mxu0 %v354
    %5071 = vmatprep.subr.mxu0 0.0
    %5072 = vmatpush1.msra.mxu0 %v355
    %5073 = vmatprep.subr.mxu0 0.0
    %5074 = vmatpush1.msra.mxu0 %v356
    %5075 = vmatprep.subr.mxu0 0.0
    %5076 = vmatpush1.msra.mxu0 %v357
    %5077 = vmatprep.subr.mxu0 0.0
    %5078 = vmatpush1.msra.mxu0 %v358
    %5079 = vmatprep.subr.mxu0 0.0
    %5080 = vmatpush1.msra.mxu0 0.0
    %5081 = vmatprep.subr.mxu0 0.0
    %5082 = vmatpush1.msra.mxu0 0.0
    %5083 = vmatprep.subr.mxu0 0.0
    %5084 = vmatpush1.msra.mxu0 0.0
    %5085 = vmatprep.subr.mxu0 0.0
    %5086 = vmatpush1.msra.mxu0 0.0
    %5087 = vmatprep.subr.mxu0 0.0
    %5088 = vmatpush1.msra.mxu0 0.0
    %5089 = vmatprep.subr.mxu0 0.0
    %5090 = vmatpush1.msra.mxu0 0.0
    %5091 = vmatprep.subr.mxu0 0.0
    %5092 = vmatpush1.msra.mxu0 0.0
    %5093 = vmatprep.subr.mxu0 0.0
    %5094 = vmatpush1.msra.mxu0 0.0
    %5095 = vmatprep.subr.mxu0 0.0
    %5096 = vmatpush1.msra.mxu0 0.0
    %5097 = vmatprep.subr.mxu0 0.0
    %5098 = vmatpush1.msra.mxu0 0.0
    %5099 = vmatprep.subr.mxu0 0.0
    %5100 = vmatpush1.msra.mxu0 0.0
    %5101 = vmatprep.subr.mxu0 0.0
    %5102 = vmatpush1.msra.mxu0 0.0
    %5103 = vmatprep.subr.mxu0 0.0
    %5104 = vmatpush1.msra.mxu0 0.0
    %5105 = vmatprep.subr.mxu0 0.0
    %5106 = vmatpush1.msra.mxu0 0.0
    %5107 = vmatprep.subr.mxu0 0.0
    %5108 = vmatpush1.msra.mxu0 0.0
    %5109 = vmatprep.subr.mxu0 0.0
    %5110 = vmatpush1.msra.mxu0 0.0
    %5111 = vmatprep.subr.mxu0 0.0
    %5112 = vmatpush1.msra.mxu0 0.0
    %5113 = vmatprep.subr.mxu0 0.0
    %5114 = vmatpush1.msra.mxu0 0.0
    %5115 = vmatprep.subr.mxu0 0.0
    %5116 = vmatpush1.msra.mxu0 0.0
    %5117 = vmatprep.subr.mxu0 0.0
    %5118 = vmatpush1.msra.mxu0 0.0
    %5119 = vmatprep.subr.mxu0 0.0
    %5120 = vmatpush1.msra.mxu0 0.0
    %5121 = vmatprep.subr.mxu0 0.0
    %5122 = vmatpush1.msra.mxu0 0.0
    %5123 = vmatprep.subr.mxu0 0.0
    %5124 = vmatpush1.msra.mxu0 0.0
    %5125 = vmatprep.subr.mxu0 0.0
    %5126 = vmatpush1.msra.mxu0 0.0
    %5127 = vmatprep.subr.mxu0 0.0
    %5128 = vmatpush1.msra.mxu0 0.0
    %5129 = vmatprep.subr.mxu0 0.0
    %5130 = vmatpush1.msra.mxu0 0.0
    %5131 = vmatprep.subr.mxu0 0.0
    %5132 = vmatpush1.msra.mxu0 0.0
    %5133 = vmatprep.mubr.f32.mxu0 0.0
    %5134 = vmatmul.mubr.f32.gmra.mrb[0].mxu0 %v5064
    %v5135 = vpop.f32.mrb[0].mxu0
    %v5136 = vadd.f32 0.0, %v5135
    %v5137 = vpop.f32.mrb[0].mxu0
    %5138 = vmatprep.mubr.f32.mxu0 0.0
    %5139 = vmatmul.mubr.f32.gmra.mrb[0].mxu0 %v5067
    %v5140 = vpop.f32.mrb[0].mxu0
    %v5141 = vadd.f32 0.0, %v5140
    %v5142 = vpop.f32.mrb[0].mxu0
    %5143 = vdwg.mxu0
    %v5144 = vxor.u32 %v5136, 2147483648
    %v5145 = vxor.u32 %v5141, 2147483648
    %v5146 = vmul.f32 %v5144, 1.442695
    %v5147 = vpow.pop %v5146
    %v5148 = vmul.f32 %v5145, 1.442695
    %v5149 = vpow.pop %v5148
    %v5150 = vadd.f32 %v5147, 1.0
    %v5151 = vadd.f32 %v5149, 1.0
    %v5152 = vrcp.pop %v5150
    %v5153 = vmul.f32 1.0, %v5152
    %v5154 = vrcp.pop %v5151
    %v5155 = vmul.f32 1.0, %v5154
    %v5156 = vmul.f32 %v5153, %v5061
    %v5157 = vmul.f32 %v5155, %v5062
    %v5158 = vpack.c.bf16 %v5157, %v5156
    %v5159 = vld [vmem:[%s14] sm:$0xf]
    %v5160 = vld [vmem:[%s14 + $0x4] sm:$0xf]
    %v5161 = vld [vmem:[%s14 + $0x8] sm:$0xf]
    %v5162 = vld [vmem:[%s14 + $0xc] sm:$0xf]
    %v5163 = vld [vmem:[%s4] sm:$0xff]
    %v5164 = vld [vmem:[%s4 + $0x8] sm:$0xff]
    %v5169 = vunpack.c.l.b16 %v5159
    %v5170 = vunpack.c.l.b16 %v5160
    %v5171 = vunpack.c.l.b16 %v5161
    %v5172 = vunpack.c.l.b16 %v5162
    %v5173 = vpack.c.b16 %v5170, %v5169
    %v5174 = vpack.c.b16 %v5172, %v5171
    %v5178 = vsel %vm2512, %v5158, 0
    %5180 = vmatprep.subr.bf16.mxu0 0
    %5181 = vmatpush1.bf16.msra.mxu0 %v5173
    %5182 = vmatprep.subr.bf16.mxu0 0
    %5183 = vmatpush1.bf16.msra.mxu0 %v5174
    %5184 = vmatprep.subr.bf16.mxu0 0
    %5185 = vmatpush1.bf16.msra.mxu0 0
    %5186 = vmatprep.subr.bf16.mxu0 0
    %5187 = vmatpush1.bf16.msra.mxu0 0
    %5188 = vmatprep.subr.bf16.mxu0 0
    %5189 = vmatpush1.bf16.msra.mxu0 0
    %5190 = vmatprep.subr.bf16.mxu0 0
    %5191 = vmatpush1.bf16.msra.mxu0 0
    %5192 = vmatprep.subr.bf16.mxu0 0
    %5193 = vmatpush1.bf16.msra.mxu0 0
    %5194 = vmatprep.subr.bf16.mxu0 0
    %5195 = vmatpush1.bf16.msra.mxu0 0
    %5196 = vmatprep.subr.bf16.mxu0 0
    %5197 = vmatpush1.bf16.msra.mxu0 0
    %5198 = vmatprep.subr.bf16.mxu0 0
    %5199 = vmatpush1.bf16.msra.mxu0 0
    %5200 = vmatprep.subr.bf16.mxu0 0
    %5201 = vmatpush1.bf16.msra.mxu0 0
    %5202 = vmatprep.subr.bf16.mxu0 0
    %5203 = vmatpush1.bf16.msra.mxu0 0
    %5204 = vmatprep.subr.bf16.mxu0 0
    %5205 = vmatpush1.bf16.msra.mxu0 0
    %5206 = vmatprep.subr.bf16.mxu0 0
    %5207 = vmatpush1.bf16.msra.mxu0 0
    %5208 = vmatprep.subr.bf16.mxu0 0
    %5209 = vmatpush1.bf16.msra.mxu0 0
    %5210 = vmatprep.subr.bf16.mxu0 0
    %5211 = vmatpush1.bf16.msra.mxu0 0
    %5212 = vmatprep.mubr.bf16.mxu0 0
    %5213 = vmatmul.mubr.bf16.gmra.mrb[0].mxu0 %v5178
    %v5214 = vpop.f32.mrb[0].mxu0
    %v5215 = vadd.f32 %v5163, %v5214
    %v5216 = vpop.f32.mrb[0].mxu0
    %v5217 = vpop.f32.mrb[0].mxu0
    %v5218 = vadd.f32 %v5164, %v5217
    %v5219 = vpop.f32.mrb[0].mxu0
    %5220 = vdwg.mxu0
    %5221 = vst [vmem:[%s15] sm:$0xff] %v5215
    %5222 = vst [vmem:[%s15 + $0x8] sm:$0xff] %v5218
    // Predicated region
    $region82: #{_lambda_.1} parent=1 // pred_check
      _
    $region83: #{_lambda_.1} parent=1 // pred_check_branch
      %5224 = sbr.rel (0) target = $region85
    $region84: #{_lambda_.1} parent=1 // pred_region
      _
    $region85: #{_lambda_.1} parent=1 // pred_fallthru
      _
    // Predicated region
    $region86: #{_lambda_.1} parent=1 // pred_check
      _
    $region87: #{_lambda_.1} parent=1 // pred_check_branch
      %5226 = sbr.rel (0) target = $region89
    $region88: #{_lambda_.1} parent=1 // pred_region
      _
    $region89: #{_lambda_.1} parent=1 // pred_fallthru
      _
    %5227 = vsyncpa [#allocation3], 1
    %5228 = vsyncpa [#allocation5], 1
    %5229 = vsyncpa [#allocation8], 1

</llo_original>
